<compile_context>
chip_gen: v7x
topology: tpu7x:2x2x1
jax: 0.10.0
libtpu: 0.0.40
codegen_flags: <defaults>
</compile_context>

<pallas_src>
import functools
import math

import numpy as np
import jax
import jax.numpy as jnp
from jax.experimental import pallas as pl
from jax.experimental.pallas import tpu as pltpu

EPS = 1e-3  # BatchNorm eps folded into scale/bias


def _vmem_capacity_bytes():
    try:
        return int(pltpu.get_tpu_info().vmem_capacity_bytes)
    except Exception:
        return 64 * 1024 * 1024  # conservative (v7x-sized) fallback


_VMEM_CAP = _vmem_capacity_bytes()
_VMEM_LIMIT = int(0.70 * _VMEM_CAP)   # scoped-VMEM cap handed to Mosaic
_TILE_BUDGET = int(0.40 * _VMEM_CAP)  # what a single grid step may occupy


def _cparams(*sem):
    return pltpu.CompilerParams(dimension_semantics=sem,
                                vmem_limit_bytes=_VMEM_LIMIT)


def _hardswish(x):
    # torch.nn.Hardswish: x * relu6(x + 3) / 6
    return x * jnp.clip(x + 3.0, 0.0, 6.0) * (1.0 / 6.0)


def _pick_h_tile(h, align, bytes_per_row):
    """Largest divisor of h that is a multiple of `align` (halo-block alignment)
    and whose per-step VMEM footprint fits the budget."""
    cap = max(align, min(h, _TILE_BUDGET // max(1, bytes_per_row)))
    best = align
    for d in range(1, h + 1):
        if h % d == 0 and d % align == 0 and d <= cap:
            best = d
    return best


# ---------------------------- Pallas kernels ----------------------------

def _pw_kernel(x_ref, w_ref, scale_ref, bias_ref, o_ref, *, act):
    # 1x1 convolution == channel matmul on the MXU (f32 accumulation),
    # fused BN scale/bias + optional Hardswish on the VPU.
    y = jnp.dot(x_ref[...], w_ref[...], preferred_element_type=jnp.float32)
    y = y * scale_ref[...] + bias_ref[...]
    if act:
        y = _hardswish(y)
    o_ref[...] = y.astype(o_ref.dtype)


def _ghost_kernel(xt_ref, xc_ref, xb_ref, w1_ref, s1_ref, b1_ref,
                  w2_ref, s2_ref, b2_ref, *rest,
                  act, K, TH, H, W, Cin, C, has_res):
    """Fused GhostConv for one (H-tile, image) grid step.

    cv1 (1x1 conv + BN (+act)) is computed on the MXU for the tile rows and
    their K//2-row halos (taken from neighbour row-blocks of x), the 5x5
    depthwise cv2 runs on the VPU over a zero-padded VMEM slab, and the
    channel concat [y, dw(y)] (+ optional residual) is written with a single
    lane-dense store.
    """
    if has_res:
        res_ref, o_ref, yslab = rest
    else:
        o_ref, yslab = rest
        res_ref = None

    pad = K // 2
    win = TH + 2 * pad
    row0 = pl.program_id(0) * TH          # first output row of this tile

    def cv1(xr):                          # (rows, W, Cin) -> (rows, W, C), f32
        rows = xr.shape[0]
        y = jnp.dot(xr.reshape(rows * W, Cin), w1_ref[...],
                    preferred_element_type=jnp.float32)
        y = y * s1_ref[...] + b1_ref[...]
        if act:
            y = _hardswish(y)
        return y.reshape(rows, W, C)

    # conv zero padding of cv1's output: column bands are always zero,
    # row halos are masked below when they fall outside the image.
    yslab[:, :pad, :] = jnp.zeros((win, pad, C), jnp.float32)
    yslab[:, pad + W:, :] = jnp.zeros((win, pad, C), jnp.float32)

    y_core = cv1(xc_ref[0])               # (TH, W, C) cv1 output of this tile
    yslab[pad:pad + TH, pad:pad + W, :] = y_core

    gt = jax.lax.broadcasted_iota(jnp.int32, (pad, 1, 1), 0) + (row0 - pad)
    yslab[:pad, pad:pad + W, :] = jnp.where(gt >= 0, cv1(xt_ref[0]), 0.0)

    gb = jax.lax.broadcasted_iota(jnp.int32, (pad, 1, 1), 0) + (row0 + TH)
    yslab[pad + TH:, pad:pad + W, :] = jnp.where(gb < H, cv1(xb_ref[0]), 0.0)

    # cv2: KxK depthwise conv + BN (+act).  Per-tap weights were reshaped to
    # (K*K, 1, C) outside the kernel (hoisted broadcasts).
    wk = w2_ref[...]
    acc = jnp.zeros((TH, W, C), jnp.float32)
    t = 0
    for dy in range(K):
        for dx in range(K):
            acc = acc + yslab[dy:dy + TH, dx:dx + W, :] * wk[t]
            t += 1
    y2 = acc * s2_ref[...] + b2_ref[...]
    if act:
        y2 = _hardswish(y2)

    out = jnp.concatenate([y_core, y2], axis=-1)       # (TH, W, 2C), one store
    if has_res:
        out = out + res_ref[0].astype(jnp.float32)     # fused bottleneck add
    o_ref[0] = out.astype(o_ref.dtype)


def _dw_kernel(xt_ref, xc_ref, xb_ref, w_ref, s_ref, b_ref, o_ref, xslab,
               *, act, K, s, TH, H, W, Wo, C):
    """Standalone depthwise KxK conv (stride s) + folded BN for one grid step."""
    pad = K // 2
    core = s * TH
    win = core + 2 * pad
    Wp = W + 2 * pad
    row0 = pl.program_id(0) * core

    # assemble the zero-padded input slab in VMEM (no HBM pad round trip)
    xslab[:, :pad, :] = jnp.zeros((win, pad, C), jnp.float32)
    xslab[:, pad + W:, :] = jnp.zeros((win, pad, C), jnp.float32)
    xslab[pad:pad + core, pad:pad + W, :] = xc_ref[0].astype(jnp.float32)
    gt = jax.lax.broadcasted_iota(jnp.int32, (pad, 1, 1), 0) + (row0 - pad)
    xslab[:pad, pad:pad + W, :] = jnp.where(
        gt >= 0, xt_ref[0].astype(jnp.float32), 0.0)
    gb = jax.lax.broadcasted_iota(jnp.int32, (pad, 1, 1), 0) + (row0 + core)
    xslab[pad + core:, pad:pad + W, :] = jnp.where(
        gb < H, xb_ref[0].astype(jnp.float32), 0.0)

    wk = w_ref[...]                                     # (K*K, 1, C)
    acc = jnp.zeros((TH, Wo, C), jnp.float32)
    if s == 1:
        t = 0
        for dy in range(K):
            for dx in range(K):
                acc = acc + xslab[dy:dy + TH, dx:dx + Wo, :] * wk[t]
                t += 1
    else:
        # column decimation hoisted to `s` strided slices per step (instead of
        # K*K sublane gathers); the per-tap row stride stays on the cheap
        # leading dimension.
        # TODO(synk): decimate columns at slab-assembly time to remove these too.
        xw = xslab[...]
        planes = [jax.lax.slice(xw, (0, par, 0), (win, Wp, C), (1, s, 1))
                  for par in range(s)]
        t = 0
        for dy in range(K):
            for dx in range(K):
                patch = jax.lax.slice(
                    planes[dx % s], (dy, dx // s, 0),
                    (dy + (TH - 1) * s + 1, dx // s + Wo, C), (s, 1, 1))
                acc = acc + patch * wk[t]
                t += 1

    y = acc * s_ref[...] + b_ref[...]
    if act:
        y = _hardswish(y)
    o_ref[0] = y.astype(o_ref.dtype)


# ---------------------------- Pallas wrappers ----------------------------

def pointwise_conv(x, p, act):
    """1x1 conv + folded BN + optional Hardswish.  x: (N,H,W,Cin); p['w']: (Cin,Cout)."""
    N, H, W, Cin = x.shape
    Cout = p["w"].shape[1]
    M = N * H * W
    xm = x.reshape(M, Cin)
    TM = M if M <= 4096 else 2048        # ragged last block handled by Pallas
    out = pl.pallas_call(
        functools.partial(_pw_kernel, act=act),
        out_shape=jax.ShapeDtypeStruct((M, Cout), x.dtype),
        grid=(pl.cdiv(M, TM),),
        in_specs=[
            pl.BlockSpec((TM, Cin), lambda i: (i, 0)),
            pl.BlockSpec((Cin, Cout), lambda i: (0, 0)),
            pl.BlockSpec((1, Cout), lambda i: (0, 0)),
            pl.BlockSpec((1, Cout), lambda i: (0, 0)),
        ],
        out_specs=pl.BlockSpec((TM, Cout), lambda i: (i, 0)),
        compiler_params=_cparams("parallel"),
    )(xm, p["w"], p["scale"].reshape(1, Cout), p["bias"].reshape(1, Cout))
    return out.reshape(N, H, W, Cout)


def ghost_conv(x, p, act, res=None):
    """Fused GhostConv: out = concat([cv1(x), dw5x5(cv1(x))], channels) (+ res)."""
    N, H, W, Cin = x.shape
    w1 = p["cv1"]["w"]
    C = w1.shape[1]
    w2 = p["cv2"]["w"]
    K = w2.shape[0]
    pad = K // 2
    assert H % pad == 0, "feature-map height must be a multiple of K//2"
    Cout = 2 * C
    itemsize = jnp.dtype(x.dtype).itemsize

    # per-output-row VMEM footprint (double-buffered in/out blocks + y slab row)
    row_bytes = (2 * W * Cin * itemsize + (W + 2 * pad) * C * 4
                 + 2 * W * Cout * itemsize
                 + (2 * W * Cout * itemsize if res is not None else 0))
    TH = _pick_h_tile(H, pad, row_bytes)
    r_blk = TH // pad
    hb_last = H // pad - 1
    win = TH + 2 * pad
    Wp = W + 2 * pad

    in_specs = [
        # top / core / bottom row-blocks of x (halo indices clamped at borders)
        pl.BlockSpec((1, pad, W, Cin),
                     lambda h, n: (n, jnp.maximum(h * r_blk - 1, 0), 0, 0)),
        pl.BlockSpec((1, TH, W, Cin), lambda h, n: (n, h, 0, 0)),
        pl.BlockSpec((1, pad, W, Cin),
                     lambda h, n: (n, jnp.minimum((h + 1) * r_blk, hb_last), 0, 0)),
        pl.BlockSpec((Cin, C), lambda h, n: (0, 0)),
        pl.BlockSpec((1, C), lambda h, n: (0, 0)),
        pl.BlockSpec((1, C), lambda h, n: (0, 0)),
        pl.BlockSpec((K * K, 1, C), lambda h, n: (0, 0, 0)),
        pl.BlockSpec((1, C), lambda h, n: (0, 0)),
        pl.BlockSpec((1, C), lambda h, n: (0, 0)),
    ]
    args = [x, x, x,
            w1, p["cv1"]["scale"].reshape(1, C), p["cv1"]["bias"].reshape(1, C),
            w2.reshape(K * K, 1, C),
            p["cv2"]["scale"].reshape(1, C), p["cv2"]["bias"].reshape(1, C)]
    if res is not None:
        in_specs.append(pl.BlockSpec((1, TH, W, Cout), lambda h, n: (n, h, 0, 0)))
        args.append(res)

    return pl.pallas_call(
        functools.partial(_ghost_kernel, act=act, K=K, TH=TH, H=H, W=W,
                          Cin=Cin, C=C, has_res=res is not None),
        out_shape=jax.ShapeDtypeStruct((N, H, W, Cout), x.dtype),
        grid=(H // TH, N),
        in_specs=in_specs,
        out_specs=pl.BlockSpec((1, TH, W, Cout), lambda h, n: (n, h, 0, 0)),
        scratch_shapes=[pltpu.VMEM((win, Wp, C), jnp.float32)],
        compiler_params=_cparams("parallel", "parallel"),
    )(*args)


def depthwise_conv(x, p, stride, act):
    """Standalone DWConv: KxK depthwise conv (stride s) + folded BN."""
    N, H, W, C = x.shape
    K = p["w"].shape[0]
    pad = K // 2
    Ho = (H + 2 * pad - K) // stride + 1
    Wo = (W + 2 * pad - K) // stride + 1
    assert H % pad == 0, "feature-map height must be a multiple of K//2"
    assert stride == 1 or (W % stride == 0 and H == stride * Ho), \
        "stride-2 path expects even spatial dims"

    itemsize = jnp.dtype(x.dtype).itemsize
    row_bytes = (2 * stride * W * C * itemsize
                 + stride * (W + 2 * pad) * C * 4 + 2 * Wo * C * itemsize)
    align = max(1, pad // math.gcd(pad, stride))
    TH = _pick_h_tile(Ho, align, row_bytes)
    core = stride * TH
    r_blk = core // pad
    hb_last = H // pad - 1
    win = core + 2 * pad
    Wp = W + 2 * pad

    in_specs = [
        pl.BlockSpec((1, pad, W, C),
                     lambda h, n: (n, jnp.maximum(h * r_blk - 1, 0), 0, 0)),
        pl.BlockSpec((1, core, W, C), lambda h, n: (n, h, 0, 0)),
        pl.BlockSpec((1, pad, W, C),
                     lambda h, n: (n, jnp.minimum((h + 1) * r_blk, hb_last), 0, 0)),
        pl.BlockSpec((K * K, 1, C), lambda h, n: (0, 0, 0)),
        pl.BlockSpec((1, C), lambda h, n: (0, 0)),
        pl.BlockSpec((1, C), lambda h, n: (0, 0)),
    ]
    return pl.pallas_call(
        functools.partial(_dw_kernel, act=act, K=K, s=stride, TH=TH,
                          H=H, W=W, Wo=Wo, C=C),
        out_shape=jax.ShapeDtypeStruct((N, Ho, Wo, C), x.dtype),
        grid=(Ho // TH, N),
        in_specs=in_specs,
        out_specs=pl.BlockSpec((1, TH, Wo, C), lambda h, n: (n, h, 0, 0)),
        scratch_shapes=[pltpu.VMEM((win, Wp, C), jnp.float32)],
        compiler_params=_cparams("parallel", "parallel"),
    )(x, x, x, p["w"].reshape(K * K, 1, C),
      p["scale"].reshape(1, C), p["bias"].reshape(1, C))


# ---------------------------- module composition ----------------------------

def ghost_bottleneck(x_nchw, params, k, s):
    """Forward of GhostBottleneck.  Input/output in PyTorch NCHW."""
    x = jnp.transpose(x_nchw, (0, 2, 3, 1))              # NCHW -> NHWC
    y = ghost_conv(x, params["gc1"], act=True)
    if s == 2:
        y = depthwise_conv(y, params["mid_dw"], stride=2, act=False)
        sc = depthwise_conv(x, params["sc_dw"], stride=2, act=False)
        sc = pointwise_conv(sc, params["sc_pw"], act=False)
    else:
        sc = x                                            # shortcut = Identity
    out = ghost_conv(y, params["gc2"], act=False, res=sc)  # residual fused in-kernel
    return jnp.transpose(out, (0, 3, 1, 2))               # NHWC -> NCHW


# ---------------------------- deterministic parameter init ----------------------------

def _init_bn(keys, c):
    gamma = 1.0 + 0.1 * jax.random.normal(keys[0], (c,), jnp.float32)
    beta = 0.1 * jax.random.normal(keys[1], (c,), jnp.float32)
    rmean = 0.1 * jax.random.normal(keys[2], (c,), jnp.float32)
    rvar = jnp.abs(1.0 + 0.1 * jax.random.normal(keys[3], (c,), jnp.float32))
    scale = gamma / jnp.sqrt(rvar + EPS)
    bias = beta - rmean * scale
    return scale, bias


def init_pw(key, cin, cout):
    kw, k1, k2, k3, k4 = jax.random.split(key, 5)
    w = jax.random.normal(kw, (cin, cout), jnp.float32) / np.sqrt(cin)
    scale, bias = _init_bn((k1, k2, k3, k4), cout)
    return dict(w=w, scale=scale, bias=bias)


def init_dw(key, c, k):
    kw, k1, k2, k3, k4 = jax.random.split(key, 5)
    w = jax.random.normal(kw, (k, k, c), jnp.float32) / np.sqrt(k * k)
    scale, bias = _init_bn((k1, k2, k3, k4), c)
    return dict(w=w, scale=scale, bias=bias)


def init_ghost_conv(key, cin, cout):
    c_ = cout // 2
    k1, k2 = jax.random.split(key)
    return dict(cv1=init_pw(k1, cin, c_), cv2=init_dw(k2, c_, 5))


def init_ghost_bottleneck(key, c1, c2, k, s):
    c_ = c2 // 2
    keys = jax.random.split(key, 5)
    params = dict(
        gc1=init_ghost_conv(keys[0], c1, c_),
        gc2=init_ghost_conv(keys[1], c_, c2),
    )
    if s == 2:
        params["mid_dw"] = init_dw(keys[2], c_, k)
        params["sc_dw"] = init_dw(keys[3], c1, k)
        params["sc_pw"] = init_pw(keys[4], c1, c2)
    return params


# ---------------------------- pure-JAX reference (for validation) ----------------------------

def _ref_pw(x, p, act):
    cin, cout = p["w"].shape
    y = jax.lax.conv_general_dilated(
        x, p["w"].reshape(1, 1, cin, cout), (1, 1), "VALID",
        dimension_numbers=("NHWC", "HWIO", "NHWC"))
    y = y * p["scale"] + p["bias"]
    return _hardswish(y) if act else y


def _ref_dw(x, p, stride, act):
    K, _, C = p["w"].shape
    pad = K // 2
    y = jax.lax.conv_general_dilated(
        x, p["w"].reshape(K, K, 1, C), (stride, stride),
        [(pad, pad), (pad, pad)],
        dimension_numbers=("NHWC", "HWIO", "NHWC"),
        feature_group_count=C)
    y = y * p["scale"] + p["bias"]
    return _hardswish(y) if act else y


def _ref_ghost_conv(x, p, act):
    y = _ref_pw(x, p["cv1"], act)
    return jnp.concatenate([y, _ref_dw(y, p["cv2"], 1, act)], axis=-1)


def _ref_bottleneck(x_nchw, params, k, s):
    x = jnp.transpose(x_nchw, (0, 2, 3, 1))
    y = _ref_ghost_conv(x, params["gc1"], True)
    if s == 2:
        y = _ref_dw(y, params["mid_dw"], 2, False)
    y = _ref_ghost_conv(y, params["gc2"], False)
    sc = x
    if s == 2:
        sc = _ref_pw(_ref_dw(x, params["sc_dw"], 2, False), params["sc_pw"], False)
    return jnp.transpose(y + sc, (0, 3, 1, 2))


# ---------------------------- demo ----------------------------

if __name__ == "__main__":
    key = jax.random.PRNGKey(0)
    k1, k2, k3, k4 = jax.random.split(key, 4)

    # Config A: GhostBottleneck(c1=32, c2=32, k=3, s=1) -- identity shortcut.
    c1 = c2 = 32
    k_sz, stride = 3, 1
    N, H, W = 2, 16, 16
    x_nchw = jax.random.normal(k1, (N, c1, H, W), jnp.float32)
    params = init_ghost_bottleneck(k2, c1, c2, k_sz, stride)

    out = jax.block_until_ready(ghost_bottleneck(x_nchw, params, k_sz, stride))
    ref = jax.block_until_ready(_ref_bottleneck(x_nchw, params, k_sz, stride))
    assert out.shape == (N, c2, H, W), out.shape
    np.testing.assert_allclose(np.asarray(out), np.asarray(ref), rtol=2e-2, atol=2e-2)

    # Config B: GhostBottleneck(c1=16, c2=32, k=3, s=2) -- downsampling + conv shortcut.
    c1b, c2b = 16, 32
    k_szb, strideb = 3, 2
    xb_nchw = jax.random.normal(k3, (N, c1b, H, W), jnp.float32)
    paramsb = init_ghost_bottleneck(k4, c1b, c2b, k_szb, strideb)

    outb = jax.block_until_ready(ghost_bottleneck(xb_nchw, paramsb, k_szb, strideb))
    refb = jax.block_until_ready(_ref_bottleneck(xb_nchw, paramsb, k_szb, strideb))
    assert outb.shape == (N, c2b, H // 2, W // 2), outb.shape
    np.testing.assert_allclose(np.asarray(outb), np.asarray(refb), rtol=2e-2, atol=2e-2)

    print("KERNEL_OK")
</pallas_src>

<mosaic_0001>
module attributes {stable_mosaic.version = 11 : i64} {
  func.func @_ghost_kernel(%arg0: i32, %arg1: i32, %arg2: memref<1x2x16x32xf32, #tpu.memory_space<vmem>>, %arg3: memref<1x16x16x32xf32, #tpu.memory_space<vmem>>, %arg4: memref<1x2x16x32xf32, #tpu.memory_space<vmem>>, %arg5: memref<32x8xf32, #tpu.memory_space<vmem>>, %arg6: memref<1x8xf32, #tpu.memory_space<vmem>>, %arg7: memref<1x8xf32, #tpu.memory_space<vmem>>, %arg8: memref<25x1x8xf32, #tpu.memory_space<vmem>>, %arg9: memref<1x8xf32, #tpu.memory_space<vmem>>, %arg10: memref<1x8xf32, #tpu.memory_space<vmem>>, %arg11: memref<1x16x16x16xf32, #tpu.memory_space<vmem>>, %arg12: memref<20x20x8xf32, #tpu.memory_space<vmem>>) attributes {dimension_semantics = [#tpu.dimension_semantics<parallel>, #tpu.dimension_semantics<parallel>], iteration_bounds = array<i64: 1, 2>, scalar_prefetch = 0 : i64, scratch_operands = 1 : i64, tpu.core_type = #tpu.core_type<tc>, window_params = [{transform_indices = @transform_0, window_bounds = array<i64: 1, 2, 16, 32>}, {transform_indices = @transform_1, window_bounds = array<i64: 1, 16, 16, 32>}, {transform_indices = @transform_2, window_bounds = array<i64: 1, 2, 16, 32>}, {pipeline_mode = #tpu.pipeline_mode<synchronous>, transform_indices = @transform_3, window_bounds = array<i64: 32, 8>}, {pipeline_mode = #tpu.pipeline_mode<synchronous>, transform_indices = @transform_4, window_bounds = array<i64: 1, 8>}, {pipeline_mode = #tpu.pipeline_mode<synchronous>, transform_indices = @transform_5, window_bounds = array<i64: 1, 8>}, {pipeline_mode = #tpu.pipeline_mode<synchronous>, transform_indices = @transform_6, window_bounds = array<i64: 25, 1, 8>}, {pipeline_mode = #tpu.pipeline_mode<synchronous>, transform_indices = @transform_7, window_bounds = array<i64: 1, 8>}, {pipeline_mode = #tpu.pipeline_mode<synchronous>, transform_indices = @transform_8, window_bounds = array<i64: 1, 8>}, {transform_indices = @transform_9, window_bounds = array<i64: 1, 16, 16, 16>}]} {
    %c16_i32 = arith.constant 16 : i32
    %0 = arith.muli %arg0, %c16_i32 : i32
    %cst = arith.constant 0.000000e+00 : f32
    %1 = vector.broadcast %cst : f32 to vector<20x2x8xf32>
    %c0 = arith.constant 0 : index
    %c0_0 = arith.constant 0 : index
    %c0_1 = arith.constant 0 : index
    %2 = vector.load %arg12[%c0, %c0_0, %c0_1] : memref<20x20x8xf32, #tpu.memory_space<vmem>>, vector<20x2x8xf32>
    tpu.vector_store %arg12[%c0, %c0_0, %c0_1], %1 {strides = array<i32>} : memref<20x20x8xf32, #tpu.memory_space<vmem>>, vector<20x2x8xf32>,
    %cst_2 = arith.constant 0.000000e+00 : f32
    %3 = vector.broadcast %cst_2 : f32 to vector<20x2x8xf32>
    %c0_3 = arith.constant 0 : index
    %c18 = arith.constant 18 : index
    %c0_4 = arith.constant 0 : index
    %4 = vector.load %arg12[%c0_3, %c18, %c0_4] : memref<20x20x8xf32, #tpu.memory_space<vmem>>, vector<20x2x8xf32>
    tpu.vector_store %arg12[%c0_3, %c18, %c0_4], %3 {strides = array<i32>} : memref<20x20x8xf32, #tpu.memory_space<vmem>>, vector<20x2x8xf32>,
    %c0_5 = arith.constant 0 : index
    %c0_6 = arith.constant 0 : index
    %c0_7 = arith.constant 0 : index
    %c0_8 = arith.constant 0 : index
    %5 = vector.load %arg3[%c0_5, %c0_6, %c0_7, %c0_8] : memref<1x16x16x32xf32, #tpu.memory_space<vmem>>, vector<1x16x16x32xf32>
    %6 = vector.shape_cast %5 : vector<1x16x16x32xf32> to vector<16x16x32xf32>
    %7 = vector.shape_cast %6 : vector<16x16x32xf32> to vector<256x32xf32>
    %c0_9 = arith.constant 0 : index
    %c0_10 = arith.constant 0 : index
    %8 = vector.load %arg5[%c0_9, %c0_10] : memref<32x8xf32, #tpu.memory_space<vmem>>, vector<32x8xf32>
    %cst_11 = arith.constant dense<0.000000e+00> : vector<256x8xf32>
    %9 = tpu.matmul %7, %8, %cst_11 {dimension_numbers = #tpu.dot_dimension_numbers<[1], [0], [0], [1], [0, 0, 1, 1], [], []>} : vector<256x32xf32>, vector<32x8xf32>, vector<256x8xf32> -> vector<256x8xf32>
    %c0_12 = arith.constant 0 : index
    %c0_13 = arith.constant 0 : index
    %10 = vector.load %arg6[%c0_12, %c0_13] : memref<1x8xf32, #tpu.memory_space<vmem>>, vector<1x8xf32>
    %11 = vector.broadcast %10 : vector<1x8xf32> to vector<256x8xf32>
    %12 = arith.mulf %9, %11 : vector<256x8xf32>
    %c0_14 = arith.constant 0 : index
    %c0_15 = arith.constant 0 : index
    %13 = vector.load %arg7[%c0_14, %c0_15] : memref<1x8xf32, #tpu.memory_space<vmem>>, vector<1x8xf32>
    %14 = vector.broadcast %13 : vector<1x8xf32> to vector<256x8xf32>
    %15 = arith.addf %12, %14 : vector<256x8xf32>
    %cst_16 = arith.constant 3.000000e+00 : f32
    %16 = vector.broadcast %cst_16 : f32 to vector<256x8xf32>
    %17 = arith.addf %15, %16 : vector<256x8xf32>
    %cst_17 = arith.constant 0.000000e+00 : f32
    %cst_18 = arith.constant 6.000000e+00 : f32
    %18 = vector.broadcast %cst_17 : f32 to vector<256x8xf32>
    %19 = arith.maximumf %18, %17 : vector<256x8xf32>
    %20 = vector.broadcast %cst_18 : f32 to vector<256x8xf32>
    %21 = arith.minimumf %20, %19 : vector<256x8xf32>
    %22 = arith.mulf %15, %21 : vector<256x8xf32>
    %cst_19 = arith.constant 0.166666672 : f32
    %23 = vector.broadcast %cst_19 : f32 to vector<256x8xf32>
    %24 = arith.mulf %22, %23 : vector<256x8xf32>
    %25 = vector.shape_cast %24 : vector<256x8xf32> to vector<16x16x8xf32>
    %c2 = arith.constant 2 : index
    %c2_20 = arith.constant 2 : index
    %c0_21 = arith.constant 0 : index
    %26 = vector.load %arg12[%c2, %c2_20, %c0_21] : memref<20x20x8xf32, #tpu.memory_space<vmem>>, vector<16x16x8xf32>
    tpu.vector_store %arg12[%c2, %c2_20, %c0_21], %25 {strides = array<i32>} : memref<20x20x8xf32, #tpu.memory_space<vmem>>, vector<16x16x8xf32>,
    %27 = tpu.iota {dimensions = array<i32: 0>} : vector<2x1x1xi32>
    %c2_i32 = arith.constant 2 : i32
    %28 = arith.subi %0, %c2_i32 : i32
    %29 = vector.broadcast %28 : i32 to vector<2x1x1xi32>
    %30 = arith.addi %27, %29 : vector<2x1x1xi32>
    %c0_i32 = arith.constant 0 : i32
    %31 = vector.broadcast %c0_i32 : i32 to vector<2x1x1xi32>
    %32 = arith.cmpi sge, %30, %31 : vector<2x1x1xi32>
    %c0_22 = arith.constant 0 : index
    %c0_23 = arith.constant 0 : index
    %c0_24 = arith.constant 0 : index
    %c0_25 = arith.constant 0 : index
    %33 = vector.load %arg2[%c0_22, %c0_23, %c0_24, %c0_25] : memref<1x2x16x32xf32, #tpu.memory_space<vmem>>, vector<1x2x16x32xf32>
    %34 = vector.shape_cast %33 : vector<1x2x16x32xf32> to vector<2x16x32xf32>
    %35 = vector.shape_cast %34 : vector<2x16x32xf32> to vector<32x32xf32>
    %c0_26 = arith.constant 0 : index
    %c0_27 = arith.constant 0 : index
    %36 = vector.load %arg5[%c0_26, %c0_27] : memref<32x8xf32, #tpu.memory_space<vmem>>, vector<32x8xf32>
    %cst_28 = arith.constant dense<0.000000e+00> : vector<32x8xf32>
    %37 = tpu.matmul %35, %36, %cst_28 {dimension_numbers = #tpu.dot_dimension_numbers<[1], [0], [0], [1], [0, 0, 1, 1], [], []>} : vector<32x32xf32>, vector<32x8xf32>, vector<32x8xf32> -> vector<32x8xf32>
    %c0_29 = arith.constant 0 : index
    %c0_30 = arith.constant 0 : index
    %38 = vector.load %arg6[%c0_29, %c0_30] : memref<1x8xf32, #tpu.memory_space<vmem>>, vector<1x8xf32>
    %39 = vector.broadcast %38 : vector<1x8xf32> to vector<32x8xf32>
    %40 = arith.mulf %37, %39 : vector<32x8xf32>
    %c0_31 = arith.constant 0 : index
    %c0_32 = arith.constant 0 : index
    %41 = vector.load %arg7[%c0_31, %c0_32] : memref<1x8xf32, #tpu.memory_space<vmem>>, vector<1x8xf32>
    %42 = vector.broadcast %41 : vector<1x8xf32> to vector<32x8xf32>
    %43 = arith.addf %40, %42 : vector<32x8xf32>
    %cst_33 = arith.constant 3.000000e+00 : f32
    %44 = vector.broadcast %cst_33 : f32 to vector<32x8xf32>
    %45 = arith.addf %43, %44 : vector<32x8xf32>
    %cst_34 = arith.constant 0.000000e+00 : f32
    %cst_35 = arith.constant 6.000000e+00 : f32
    %46 = vector.broadcast %cst_34 : f32 to vector<32x8xf32>
    %47 = arith.maximumf %46, %45 : vector<32x8xf32>
    %48 = vector.broadcast %cst_35 : f32 to vector<32x8xf32>
    %49 = arith.minimumf %48, %47 : vector<32x8xf32>
    %50 = arith.mulf %43, %49 : vector<32x8xf32>
    %cst_36 = arith.constant 0.166666672 : f32
    %51 = vector.broadcast %cst_36 : f32 to vector<32x8xf32>
    %52 = arith.mulf %50, %51 : vector<32x8xf32>
    %53 = vector.shape_cast %52 : vector<32x8xf32> to vector<2x16x8xf32>
    %cst_37 = arith.constant 0.000000e+00 : f32
    %54 = vector.shape_cast %32 : vector<2x1x1xi1> to vector<2x1x1xi1>
    %55 = vector.broadcast %54 : vector<2x1x1xi1> to vector<2x16x8xi1>
    %56 = vector.broadcast %cst_37 : f32 to vector<2x16x8xf32>
    %57 = arith.select %55, %53, %56 : vector<2x16x8xi1>, vector<2x16x8xf32>
    %c0_38 = arith.constant 0 : index
    %c2_39 = arith.constant 2 : index
    %c0_40 = arith.constant 0 : index
    %58 = vector.load %arg12[%c0_38, %c2_39, %c0_40] : memref<20x20x8xf32, #tpu.memory_space<vmem>>, vector<2x16x8xf32>
    tpu.vector_store %arg12[%c0_38, %c2_39, %c0_40], %57 {strides = array<i32>} : memref<20x20x8xf32, #tpu.memory_space<vmem>>, vector<2x16x8xf32>,
    %59 = tpu.iota {dimensions = array<i32: 0>} : vector<2x1x1xi32>
    %c16_i32_41 = arith.constant 16 : i32
    %60 = arith.addi %0, %c16_i32_41 : i32
    %61 = vector.broadcast %60 : i32 to vector<2x1x1xi32>
    %62 = arith.addi %59, %61 : vector<2x1x1xi32>
    %c16_i32_42 = arith.constant 16 : i32
    %63 = vector.broadcast %c16_i32_42 : i32 to vector<2x1x1xi32>
    %64 = arith.cmpi slt, %62, %63 : vector<2x1x1xi32>
    %c0_43 = arith.constant 0 : index
    %c0_44 = arith.constant 0 : index
    %c0_45 = arith.constant 0 : index
    %c0_46 = arith.constant 0 : index
    %65 = vector.load %arg4[%c0_43, %c0_44, %c0_45, %c0_46] : memref<1x2x16x32xf32, #tpu.memory_space<vmem>>, vector<1x2x16x32xf32>
    %66 = vector.shape_cast %65 : vector<1x2x16x32xf32> to vector<2x16x32xf32>
    %67 = vector.shape_cast %66 : vector<2x16x32xf32> to vector<32x32xf32>
    %c0_47 = arith.constant 0 : index
    %c0_48 = arith.constant 0 : index
    %68 = vector.load %arg5[%c0_47, %c0_48] : memref<32x8xf32, #tpu.memory_space<vmem>>, vector<32x8xf32>
    %cst_49 = arith.constant dense<0.000000e+00> : vector<32x8xf32>
    %69 = tpu.matmul %67, %68, %cst_49 {dimension_numbers = #tpu.dot_dimension_numbers<[1], [0], [0], [1], [0, 0, 1, 1], [], []>} : vector<32x32xf32>, vector<32x8xf32>, vector<32x8xf32> -> vector<32x8xf32>
    %c0_50 = arith.constant 0 : index
    %c0_51 = arith.constant 0 : index
    %70 = vector.load %arg6[%c0_50, %c0_51] : memref<1x8xf32, #tpu.memory_space<vmem>>, vector<1x8xf32>
    %71 = vector.broadcast %70 : vector<1x8xf32> to vector<32x8xf32>
    %72 = arith.mulf %69, %71 : vector<32x8xf32>
    %c0_52 = arith.constant 0 : index
    %c0_53 = arith.constant 0 : index
    %73 = vector.load %arg7[%c0_52, %c0_53] : memref<1x8xf32, #tpu.memory_space<vmem>>, vector<1x8xf32>
    %74 = vector.broadcast %73 : vector<1x8xf32> to vector<32x8xf32>
    %75 = arith.addf %72, %74 : vector<32x8xf32>
    %cst_54 = arith.constant 3.000000e+00 : f32
    %76 = vector.broadcast %cst_54 : f32 to vector<32x8xf32>
    %77 = arith.addf %75, %76 : vector<32x8xf32>
    %cst_55 = arith.constant 0.000000e+00 : f32
    %cst_56 = arith.constant 6.000000e+00 : f32
    %78 = vector.broadcast %cst_55 : f32 to vector<32x8xf32>
    %79 = arith.maximumf %78, %77 : vector<32x8xf32>
    %80 = vector.broadcast %cst_56 : f32 to vector<32x8xf32>
    %81 = arith.minimumf %80, %79 : vector<32x8xf32>
    %82 = arith.mulf %75, %81 : vector<32x8xf32>
    %cst_57 = arith.constant 0.166666672 : f32
    %83 = vector.broadcast %cst_57 : f32 to vector<32x8xf32>
    %84 = arith.mulf %82, %83 : vector<32x8xf32>
    %85 = vector.shape_cast %84 : vector<32x8xf32> to vector<2x16x8xf32>
    %cst_58 = arith.constant 0.000000e+00 : f32
    %86 = vector.shape_cast %64 : vector<2x1x1xi1> to vector<2x1x1xi1>
    %87 = vector.broadcast %86 : vector<2x1x1xi1> to vector<2x16x8xi1>
    %88 = vector.broadcast %cst_58 : f32 to vector<2x16x8xf32>
    %89 = arith.select %87, %85, %88 : vector<2x16x8xi1>, vector<2x16x8xf32>
    %c18_59 = arith.constant 18 : index
    %c2_60 = arith.constant 2 : index
    %c0_61 = arith.constant 0 : index
    %90 = vector.load %arg12[%c18_59, %c2_60, %c0_61] : memref<20x20x8xf32, #tpu.memory_space<vmem>>, vector<2x16x8xf32>
    tpu.vector_store %arg12[%c18_59, %c2_60, %c0_61], %89 {strides = array<i32>} : memref<20x20x8xf32, #tpu.memory_space<vmem>>, vector<2x16x8xf32>,
    %c0_62 = arith.constant 0 : index
    %c0_63 = arith.constant 0 : index
    %c0_64 = arith.constant 0 : index
    %91 = vector.load %arg8[%c0_62, %c0_63, %c0_64] : memref<25x1x8xf32, #tpu.memory_space<vmem>>, vector<25x1x8xf32>
    %cst_65 = arith.constant 0.000000e+00 : f32
    %92 = vector.broadcast %cst_65 : f32 to vector<16x16x8xf32>
    %c0_66 = arith.constant 0 : index
    %c0_67 = arith.constant 0 : index
    %c0_68 = arith.constant 0 : index
    %93 = vector.load %arg12[%c0_66, %c0_67, %c0_68] : memref<20x20x8xf32, #tpu.memory_space<vmem>>, vector<16x16x8xf32>
    %94 = vector.extract_strided_slice %91 {offsets = [0, 0, 0], sizes = [1, 1, 8], strides = [1, 1, 1]} : vector<25x1x8xf32> to vector<1x1x8xf32>
    %95 = vector.shape_cast %94 : vector<1x1x8xf32> to vector<1x8xf32>
    %96 = vector.shape_cast %95 : vector<1x8xf32> to vector<1x1x8xf32>
    %97 = vector.broadcast %96 : vector<1x1x8xf32> to vector<16x16x8xf32>
    %98 = arith.mulf %93, %97 : vector<16x16x8xf32>
    %99 = arith.addf %92, %98 : vector<16x16x8xf32>
    %c0_69 = arith.constant 0 : index
    %c1 = arith.constant 1 : index
    %c0_70 = arith.constant 0 : index
    %100 = vector.load %arg12[%c0_69, %c1, %c0_70] : memref<20x20x8xf32, #tpu.memory_space<vmem>>, vector<16x16x8xf32>
    %101 = vector.extract_strided_slice %91 {offsets = [1, 0, 0], sizes = [1, 1, 8], strides = [1, 1, 1]} : vector<25x1x8xf32> to vector<1x1x8xf32>
    %102 = vector.shape_cast %101 : vector<1x1x8xf32> to vector<1x8xf32>
    %103 = vector.shape_cast %102 : vector<1x8xf32> to vector<1x1x8xf32>
    %104 = vector.broadcast %103 : vector<1x1x8xf32> to vector<16x16x8xf32>
    %105 = arith.mulf %100, %104 : vector<16x16x8xf32>
    %106 = arith.addf %99, %105 : vector<16x16x8xf32>
    %c0_71 = arith.constant 0 : index
    %c2_72 = arith.constant 2 : index
    %c0_73 = arith.constant 0 : index
    %107 = vector.load %arg12[%c0_71, %c2_72, %c0_73] : memref<20x20x8xf32, #tpu.memory_space<vmem>>, vector<16x16x8xf32>
    %108 = vector.extract_strided_slice %91 {offsets = [2, 0, 0], sizes = [1, 1, 8], strides = [1, 1, 1]} : vector<25x1x8xf32> to vector<1x1x8xf32>
    %109 = vector.shape_cast %108 : vector<1x1x8xf32> to vector<1x8xf32>
    %110 = vector.shape_cast %109 : vector<1x8xf32> to vector<1x1x8xf32>
    %111 = vector.broadcast %110 : vector<1x1x8xf32> to vector<16x16x8xf32>
    %112 = arith.mulf %107, %111 : vector<16x16x8xf32>
    %113 = arith.addf %106, %112 : vector<16x16x8xf32>
    %c0_74 = arith.constant 0 : index
    %c3 = arith.constant 3 : index
    %c0_75 = arith.constant 0 : index
    %114 = vector.load %arg12[%c0_74, %c3, %c0_75] : memref<20x20x8xf32, #tpu.memory_space<vmem>>, vector<16x16x8xf32>
    %115 = vector.extract_strided_slice %91 {offsets = [3, 0, 0], sizes = [1, 1, 8], strides = [1, 1, 1]} : vector<25x1x8xf32> to vector<1x1x8xf32>
    %116 = vector.shape_cast %115 : vector<1x1x8xf32> to vector<1x8xf32>
    %117 = vector.shape_cast %116 : vector<1x8xf32> to vector<1x1x8xf32>
    %118 = vector.broadcast %117 : vector<1x1x8xf32> to vector<16x16x8xf32>
    %119 = arith.mulf %114, %118 : vector<16x16x8xf32>
    %120 = arith.addf %113, %119 : vector<16x16x8xf32>
    %c0_76 = arith.constant 0 : index
    %c4 = arith.constant 4 : index
    %c0_77 = arith.constant 0 : index
    %121 = vector.load %arg12[%c0_76, %c4, %c0_77] : memref<20x20x8xf32, #tpu.memory_space<vmem>>, vector<16x16x8xf32>
    %122 = vector.extract_strided_slice %91 {offsets = [4, 0, 0], sizes = [1, 1, 8], strides = [1, 1, 1]} : vector<25x1x8xf32> to vector<1x1x8xf32>
    %123 = vector.shape_cast %122 : vector<1x1x8xf32> to vector<1x8xf32>
    %124 = vector.shape_cast %123 : vector<1x8xf32> to vector<1x1x8xf32>
    %125 = vector.broadcast %124 : vector<1x1x8xf32> to vector<16x16x8xf32>
    %126 = arith.mulf %121, %125 : vector<16x16x8xf32>
    %127 = arith.addf %120, %126 : vector<16x16x8xf32>
    %c1_78 = arith.constant 1 : index
    %c0_79 = arith.constant 0 : index
    %c0_80 = arith.constant 0 : index
    %128 = vector.load %arg12[%c1_78, %c0_79, %c0_80] : memref<20x20x8xf32, #tpu.memory_space<vmem>>, vector<16x16x8xf32>
    %129 = vector.extract_strided_slice %91 {offsets = [5, 0, 0], sizes = [1, 1, 8], strides = [1, 1, 1]} : vector<25x1x8xf32> to vector<1x1x8xf32>
    %130 = vector.shape_cast %129 : vector<1x1x8xf32> to vector<1x8xf32>
    %131 = vector.shape_cast %130 : vector<1x8xf32> to vector<1x1x8xf32>
    %132 = vector.broadcast %131 : vector<1x1x8xf32> to vector<16x16x8xf32>
    %133 = arith.mulf %128, %132 : vector<16x16x8xf32>
    %134 = arith.addf %127, %133 : vector<16x16x8xf32>
    %c1_81 = arith.constant 1 : index
    %c1_82 = arith.constant 1 : index
    %c0_83 = arith.constant 0 : index
    %135 = vector.load %arg12[%c1_81, %c1_82, %c0_83] : memref<20x20x8xf32, #tpu.memory_space<vmem>>, vector<16x16x8xf32>
    %136 = vector.extract_strided_slice %91 {offsets = [6, 0, 0], sizes = [1, 1, 8], strides = [1, 1, 1]} : vector<25x1x8xf32> to vector<1x1x8xf32>
    %137 = vector.shape_cast %136 : vector<1x1x8xf32> to vector<1x8xf32>
    %138 = vector.shape_cast %137 : vector<1x8xf32> to vector<1x1x8xf32>
    %139 = vector.broadcast %138 : vector<1x1x8xf32> to vector<16x16x8xf32>
    %140 = arith.mulf %135, %139 : vector<16x16x8xf32>
    %141 = arith.addf %134, %140 : vector<16x16x8xf32>
    %c1_84 = arith.constant 1 : index
    %c2_85 = arith.constant 2 : index
    %c0_86 = arith.constant 0 : index
    %142 = vector.load %arg12[%c1_84, %c2_85, %c0_86] : memref<20x20x8xf32, #tpu.memory_space<vmem>>, vector<16x16x8xf32>
    %143 = vector.extract_strided_slice %91 {offsets = [7, 0, 0], sizes = [1, 1, 8], strides = [1, 1, 1]} : vector<25x1x8xf32> to vector<1x1x8xf32>
    %144 = vector.shape_cast %143 : vector<1x1x8xf32> to vector<1x8xf32>
    %145 = vector.shape_cast %144 : vector<1x8xf32> to vector<1x1x8xf32>
    %146 = vector.broadcast %145 : vector<1x1x8xf32> to vector<16x16x8xf32>
    %147 = arith.mulf %142, %146 : vector<16x16x8xf32>
    %148 = arith.addf %141, %147 : vector<16x16x8xf32>
    %c1_87 = arith.constant 1 : index
    %c3_88 = arith.constant 3 : index
    %c0_89 = arith.constant 0 : index
    %149 = vector.load %arg12[%c1_87, %c3_88, %c0_89] : memref<20x20x8xf32, #tpu.memory_space<vmem>>, vector<16x16x8xf32>
    %150 = vector.extract_strided_slice %91 {offsets = [8, 0, 0], sizes = [1, 1, 8], strides = [1, 1, 1]} : vector<25x1x8xf32> to vector<1x1x8xf32>
    %151 = vector.shape_cast %150 : vector<1x1x8xf32> to vector<1x8xf32>
    %152 = vector.shape_cast %151 : vector<1x8xf32> to vector<1x1x8xf32>
    %153 = vector.broadcast %152 : vector<1x1x8xf32> to vector<16x16x8xf32>
    %154 = arith.mulf %149, %153 : vector<16x16x8xf32>
    %155 = arith.addf %148, %154 : vector<16x16x8xf32>
    %c1_90 = arith.constant 1 : index
    %c4_91 = arith.constant 4 : index
    %c0_92 = arith.constant 0 : index
    %156 = vector.load %arg12[%c1_90, %c4_91, %c0_92] : memref<20x20x8xf32, #tpu.memory_space<vmem>>, vector<16x16x8xf32>
    %157 = vector.extract_strided_slice %91 {offsets = [9, 0, 0], sizes = [1, 1, 8], strides = [1, 1, 1]} : vector<25x1x8xf32> to vector<1x1x8xf32>
    %158 = vector.shape_cast %157 : vector<1x1x8xf32> to vector<1x8xf32>
    %159 = vector.shape_cast %158 : vector<1x8xf32> to vector<1x1x8xf32>
    %160 = vector.broadcast %159 : vector<1x1x8xf32> to vector<16x16x8xf32>
    %161 = arith.mulf %156, %160 : vector<16x16x8xf32>
    %162 = arith.addf %155, %161 : vector<16x16x8xf32>
    %c2_93 = arith.constant 2 : index
    %c0_94 = arith.constant 0 : index
    %c0_95 = arith.constant 0 : index
    %163 = vector.load %arg12[%c2_93, %c0_94, %c0_95] : memref<20x20x8xf32, #tpu.memory_space<vmem>>, vector<16x16x8xf32>
    %164 = vector.extract_strided_slice %91 {offsets = [10, 0, 0], sizes = [1, 1, 8], strides = [1, 1, 1]} : vector<25x1x8xf32> to vector<1x1x8xf32>
    %165 = vector.shape_cast %164 : vector<1x1x8xf32> to vector<1x8xf32>
    %166 = vector.shape_cast %165 : vector<1x8xf32> to vector<1x1x8xf32>
    %167 = vector.broadcast %166 : vector<1x1x8xf32> to vector<16x16x8xf32>
    %168 = arith.mulf %163, %167 : vector<16x16x8xf32>
    %169 = arith.addf %162, %168 : vector<16x16x8xf32>
    %c2_96 = arith.constant 2 : index
    %c1_97 = arith.constant 1 : index
    %c0_98 = arith.constant 0 : index
    %170 = vector.load %arg12[%c2_96, %c1_97, %c0_98] : memref<20x20x8xf32, #tpu.memory_space<vmem>>, vector<16x16x8xf32>
    %171 = vector.extract_strided_slice %91 {offsets = [11, 0, 0], sizes = [1, 1, 8], strides = [1, 1, 1]} : vector<25x1x8xf32> to vector<1x1x8xf32>
    %172 = vector.shape_cast %171 : vector<1x1x8xf32> to vector<1x8xf32>
    %173 = vector.shape_cast %172 : vector<1x8xf32> to vector<1x1x8xf32>
    %174 = vector.broadcast %173 : vector<1x1x8xf32> to vector<16x16x8xf32>
    %175 = arith.mulf %170, %174 : vector<16x16x8xf32>
    %176 = arith.addf %169, %175 : vector<16x16x8xf32>
    %c2_99 = arith.constant 2 : index
    %c2_100 = arith.constant 2 : index
    %c0_101 = arith.constant 0 : index
    %177 = vector.load %arg12[%c2_99, %c2_100, %c0_101] : memref<20x20x8xf32, #tpu.memory_space<vmem>>, vector<16x16x8xf32>
    %178 = vector.extract_strided_slice %91 {offsets = [12, 0, 0], sizes = [1, 1, 8], strides = [1, 1, 1]} : vector<25x1x8xf32> to vector<1x1x8xf32>
    %179 = vector.shape_cast %178 : vector<1x1x8xf32> to vector<1x8xf32>
    %180 = vector.shape_cast %179 : vector<1x8xf32> to vector<1x1x8xf32>
    %181 = vector.broadcast %180 : vector<1x1x8xf32> to vector<16x16x8xf32>
    %182 = arith.mulf %177, %181 : vector<16x16x8xf32>
    %183 = arith.addf %176, %182 : vector<16x16x8xf32>
    %c2_102 = arith.constant 2 : index
    %c3_103 = arith.constant 3 : index
    %c0_104 = arith.constant 0 : index
    %184 = vector.load %arg12[%c2_102, %c3_103, %c0_104] : memref<20x20x8xf32, #tpu.memory_space<vmem>>, vector<16x16x8xf32>
    %185 = vector.extract_strided_slice %91 {offsets = [13, 0, 0], sizes = [1, 1, 8], strides = [1, 1, 1]} : vector<25x1x8xf32> to vector<1x1x8xf32>
    %186 = vector.shape_cast %185 : vector<1x1x8xf32> to vector<1x8xf32>
    %187 = vector.shape_cast %186 : vector<1x8xf32> to vector<1x1x8xf32>
    %188 = vector.broadcast %187 : vector<1x1x8xf32> to vector<16x16x8xf32>
    %189 = arith.mulf %184, %188 : vector<16x16x8xf32>
    %190 = arith.addf %183, %189 : vector<16x16x8xf32>
    %c2_105 = arith.constant 2 : index
    %c4_106 = arith.constant 4 : index
    %c0_107 = arith.constant 0 : index
    %191 = vector.load %arg12[%c2_105, %c4_106, %c0_107] : memref<20x20x8xf32, #tpu.memory_space<vmem>>, vector<16x16x8xf32>
    %192 = vector.extract_strided_slice %91 {offsets = [14, 0, 0], sizes = [1, 1, 8], strides = [1, 1, 1]} : vector<25x1x8xf32> to vector<1x1x8xf32>
    %193 = vector.shape_cast %192 : vector<1x1x8xf32> to vector<1x8xf32>
    %194 = vector.shape_cast %193 : vector<1x8xf32> to vector<1x1x8xf32>
    %195 = vector.broadcast %194 : vector<1x1x8xf32> to vector<16x16x8xf32>
    %196 = arith.mulf %191, %195 : vector<16x16x8xf32>
    %197 = arith.addf %190, %196 : vector<16x16x8xf32>
    %c3_108 = arith.constant 3 : index
    %c0_109 = arith.constant 0 : index
    %c0_110 = arith.constant 0 : index
    %198 = vector.load %arg12[%c3_108, %c0_109, %c0_110] : memref<20x20x8xf32, #tpu.memory_space<vmem>>, vector<16x16x8xf32>
    %199 = vector.extract_strided_slice %91 {offsets = [15, 0, 0], sizes = [1, 1, 8], strides = [1, 1, 1]} : vector<25x1x8xf32> to vector<1x1x8xf32>
    %200 = vector.shape_cast %199 : vector<1x1x8xf32> to vector<1x8xf32>
    %201 = vector.shape_cast %200 : vector<1x8xf32> to vector<1x1x8xf32>
    %202 = vector.broadcast %201 : vector<1x1x8xf32> to vector<16x16x8xf32>
    %203 = arith.mulf %198, %202 : vector<16x16x8xf32>
    %204 = arith.addf %197, %203 : vector<16x16x8xf32>
    %c3_111 = arith.constant 3 : index
    %c1_112 = arith.constant 1 : index
    %c0_113 = arith.constant 0 : index
    %205 = vector.load %arg12[%c3_111, %c1_112, %c0_113] : memref<20x20x8xf32, #tpu.memory_space<vmem>>, vector<16x16x8xf32>
    %206 = vector.extract_strided_slice %91 {offsets = [16, 0, 0], sizes = [1, 1, 8], strides = [1, 1, 1]} : vector<25x1x8xf32> to vector<1x1x8xf32>
    %207 = vector.shape_cast %206 : vector<1x1x8xf32> to vector<1x8xf32>
    %208 = vector.shape_cast %207 : vector<1x8xf32> to vector<1x1x8xf32>
    %209 = vector.broadcast %208 : vector<1x1x8xf32> to vector<16x16x8xf32>
    %210 = arith.mulf %205, %209 : vector<16x16x8xf32>
    %211 = arith.addf %204, %210 : vector<16x16x8xf32>
    %c3_114 = arith.constant 3 : index
    %c2_115 = arith.constant 2 : index
    %c0_116 = arith.constant 0 : index
    %212 = vector.load %arg12[%c3_114, %c2_115, %c0_116] : memref<20x20x8xf32, #tpu.memory_space<vmem>>, vector<16x16x8xf32>
    %213 = vector.extract_strided_slice %91 {offsets = [17, 0, 0], sizes = [1, 1, 8], strides = [1, 1, 1]} : vector<25x1x8xf32> to vector<1x1x8xf32>
    %214 = vector.shape_cast %213 : vector<1x1x8xf32> to vector<1x8xf32>
    %215 = vector.shape_cast %214 : vector<1x8xf32> to vector<1x1x8xf32>
    %216 = vector.broadcast %215 : vector<1x1x8xf32> to vector<16x16x8xf32>
    %217 = arith.mulf %212, %216 : vector<16x16x8xf32>
    %218 = arith.addf %211, %217 : vector<16x16x8xf32>
    %c3_117 = arith.constant 3 : index
    %c3_118 = arith.constant 3 : index
    %c0_119 = arith.constant 0 : index
    %219 = vector.load %arg12[%c3_117, %c3_118, %c0_119] : memref<20x20x8xf32, #tpu.memory_space<vmem>>, vector<16x16x8xf32>
    %220 = vector.extract_strided_slice %91 {offsets = [18, 0, 0], sizes = [1, 1, 8], strides = [1, 1, 1]} : vector<25x1x8xf32> to vector<1x1x8xf32>
    %221 = vector.shape_cast %220 : vector<1x1x8xf32> to vector<1x8xf32>
    %222 = vector.shape_cast %221 : vector<1x8xf32> to vector<1x1x8xf32>
    %223 = vector.broadcast %222 : vector<1x1x8xf32> to vector<16x16x8xf32>
    %224 = arith.mulf %219, %223 : vector<16x16x8xf32>
    %225 = arith.addf %218, %224 : vector<16x16x8xf32>
    %c3_120 = arith.constant 3 : index
    %c4_121 = arith.constant 4 : index
    %c0_122 = arith.constant 0 : index
    %226 = vector.load %arg12[%c3_120, %c4_121, %c0_122] : memref<20x20x8xf32, #tpu.memory_space<vmem>>, vector<16x16x8xf32>
    %227 = vector.extract_strided_slice %91 {offsets = [19, 0, 0], sizes = [1, 1, 8], strides = [1, 1, 1]} : vector<25x1x8xf32> to vector<1x1x8xf32>
    %228 = vector.shape_cast %227 : vector<1x1x8xf32> to vector<1x8xf32>
    %229 = vector.shape_cast %228 : vector<1x8xf32> to vector<1x1x8xf32>
    %230 = vector.broadcast %229 : vector<1x1x8xf32> to vector<16x16x8xf32>
    %231 = arith.mulf %226, %230 : vector<16x16x8xf32>
    %232 = arith.addf %225, %231 : vector<16x16x8xf32>
    %c4_123 = arith.constant 4 : index
    %c0_124 = arith.constant 0 : index
    %c0_125 = arith.constant 0 : index
    %233 = vector.load %arg12[%c4_123, %c0_124, %c0_125] : memref<20x20x8xf32, #tpu.memory_space<vmem>>, vector<16x16x8xf32>
    %234 = vector.extract_strided_slice %91 {offsets = [20, 0, 0], sizes = [1, 1, 8], strides = [1, 1, 1]} : vector<25x1x8xf32> to vector<1x1x8xf32>
    %235 = vector.shape_cast %234 : vector<1x1x8xf32> to vector<1x8xf32>
    %236 = vector.shape_cast %235 : vector<1x8xf32> to vector<1x1x8xf32>
    %237 = vector.broadcast %236 : vector<1x1x8xf32> to vector<16x16x8xf32>
    %238 = arith.mulf %233, %237 : vector<16x16x8xf32>
    %239 = arith.addf %232, %238 : vector<16x16x8xf32>
    %c4_126 = arith.constant 4 : index
    %c1_127 = arith.constant 1 : index
    %c0_128 = arith.constant 0 : index
    %240 = vector.load %arg12[%c4_126, %c1_127, %c0_128] : memref<20x20x8xf32, #tpu.memory_space<vmem>>, vector<16x16x8xf32>
    %241 = vector.extract_strided_slice %91 {offsets = [21, 0, 0], sizes = [1, 1, 8], strides = [1, 1, 1]} : vector<25x1x8xf32> to vector<1x1x8xf32>
    %242 = vector.shape_cast %241 : vector<1x1x8xf32> to vector<1x8xf32>
    %243 = vector.shape_cast %242 : vector<1x8xf32> to vector<1x1x8xf32>
    %244 = vector.broadcast %243 : vector<1x1x8xf32> to vector<16x16x8xf32>
    %245 = arith.mulf %240, %244 : vector<16x16x8xf32>
    %246 = arith.addf %239, %245 : vector<16x16x8xf32>
    %c4_129 = arith.constant 4 : index
    %c2_130 = arith.constant 2 : index
    %c0_131 = arith.constant 0 : index
    %247 = vector.load %arg12[%c4_129, %c2_130, %c0_131] : memref<20x20x8xf32, #tpu.memory_space<vmem>>, vector<16x16x8xf32>
    %248 = vector.extract_strided_slice %91 {offsets = [22, 0, 0], sizes = [1, 1, 8], strides = [1, 1, 1]} : vector<25x1x8xf32> to vector<1x1x8xf32>
    %249 = vector.shape_cast %248 : vector<1x1x8xf32> to vector<1x8xf32>
    %250 = vector.shape_cast %249 : vector<1x8xf32> to vector<1x1x8xf32>
    %251 = vector.broadcast %250 : vector<1x1x8xf32> to vector<16x16x8xf32>
    %252 = arith.mulf %247, %251 : vector<16x16x8xf32>
    %253 = arith.addf %246, %252 : vector<16x16x8xf32>
    %c4_132 = arith.constant 4 : index
    %c3_133 = arith.constant 3 : index
    %c0_134 = arith.constant 0 : index
    %254 = vector.load %arg12[%c4_132, %c3_133, %c0_134] : memref<20x20x8xf32, #tpu.memory_space<vmem>>, vector<16x16x8xf32>
    %255 = vector.extract_strided_slice %91 {offsets = [23, 0, 0], sizes = [1, 1, 8], strides = [1, 1, 1]} : vector<25x1x8xf32> to vector<1x1x8xf32>
    %256 = vector.shape_cast %255 : vector<1x1x8xf32> to vector<1x8xf32>
    %257 = vector.shape_cast %256 : vector<1x8xf32> to vector<1x1x8xf32>
    %258 = vector.broadcast %257 : vector<1x1x8xf32> to vector<16x16x8xf32>
    %259 = arith.mulf %254, %258 : vector<16x16x8xf32>
    %260 = arith.addf %253, %259 : vector<16x16x8xf32>
    %c4_135 = arith.constant 4 : index
    %c4_136 = arith.constant 4 : index
    %c0_137 = arith.constant 0 : index
    %261 = vector.load %arg12[%c4_135, %c4_136, %c0_137] : memref<20x20x8xf32, #tpu.memory_space<vmem>>, vector<16x16x8xf32>
    %262 = vector.extract_strided_slice %91 {offsets = [24, 0, 0], sizes = [1, 1, 8], strides = [1, 1, 1]} : vector<25x1x8xf32> to vector<1x1x8xf32>
    %263 = vector.shape_cast %262 : vector<1x1x8xf32> to vector<1x8xf32>
    %264 = vector.shape_cast %263 : vector<1x8xf32> to vector<1x1x8xf32>
    %265 = vector.broadcast %264 : vector<1x1x8xf32> to vector<16x16x8xf32>
    %266 = arith.mulf %261, %265 : vector<16x16x8xf32>
    %267 = arith.addf %260, %266 : vector<16x16x8xf32>
    %c0_138 = arith.constant 0 : index
    %c0_139 = arith.constant 0 : index
    %268 = vector.load %arg9[%c0_138, %c0_139] : memref<1x8xf32, #tpu.memory_space<vmem>>, vector<1x8xf32>
    %269 = vector.shape_cast %268 : vector<1x8xf32> to vector<1x1x8xf32>
    %270 = vector.broadcast %269 : vector<1x1x8xf32> to vector<16x16x8xf32>
    %271 = arith.mulf %267, %270 : vector<16x16x8xf32>
    %c0_140 = arith.constant 0 : index
    %c0_141 = arith.constant 0 : index
    %272 = vector.load %arg10[%c0_140, %c0_141] : memref<1x8xf32, #tpu.memory_space<vmem>>, vector<1x8xf32>
    %273 = vector.shape_cast %272 : vector<1x8xf32> to vector<1x1x8xf32>
    %274 = vector.broadcast %273 : vector<1x1x8xf32> to vector<16x16x8xf32>
    %275 = arith.addf %271, %274 : vector<16x16x8xf32>
    %cst_142 = arith.constant 3.000000e+00 : f32
    %276 = vector.broadcast %cst_142 : f32 to vector<16x16x8xf32>
    %277 = arith.addf %275, %276 : vector<16x16x8xf32>
    %cst_143 = arith.constant 0.000000e+00 : f32
    %cst_144 = arith.constant 6.000000e+00 : f32
    %278 = vector.broadcast %cst_143 : f32 to vector<16x16x8xf32>
    %279 = arith.maximumf %278, %277 : vector<16x16x8xf32>
    %280 = vector.broadcast %cst_144 : f32 to vector<16x16x8xf32>
    %281 = arith.minimumf %280, %279 : vector<16x16x8xf32>
    %282 = arith.mulf %275, %281 : vector<16x16x8xf32>
    %cst_145 = arith.constant 0.166666672 : f32
    %283 = vector.broadcast %cst_145 : f32 to vector<16x16x8xf32>
    %284 = arith.mulf %282, %283 : vector<16x16x8xf32>
    %285 = tpu.concatenate %25, %284 in 2 : vector<16x16x8xf32>, vector<16x16x8xf32> -> vector<16x16x16xf32>
    %c0_146 = arith.constant 0 : index
    %c0_147 = arith.constant 0 : index
    %c0_148 = arith.constant 0 : index
    %c0_149 = arith.constant 0 : index
    %286 = vector.load %arg11[%c0_146, %c0_147, %c0_148, %c0_149] : memref<1x16x16x16xf32, #tpu.memory_space<vmem>>, vector<1x16x16x16xf32>
    %287 = vector.shape_cast %286 : vector<1x16x16x16xf32> to vector<16x16x16xf32>
    %288 = vector.shape_cast %285 : vector<16x16x16xf32> to vector<1x16x16x16xf32>
    tpu.vector_store %arg11[%c0_146, %c0_147, %c0_148, %c0_149], %288 {strides = array<i32>} : memref<1x16x16x16xf32, #tpu.memory_space<vmem>>, vector<1x16x16x16xf32>,
    return
  }
  func.func @transform_0(%arg0: i32, %arg1: i32) -> (i32, i32, i32, i32) {
    %c8_i32 = arith.constant 8 : i32
    %0 = arith.muli %arg0, %c8_i32 : i32
    %c1_i32 = arith.constant 1 : i32
    %1 = arith.subi %0, %c1_i32 : i32
    %c0_i32 = arith.constant 0 : i32
    %2 = arith.maxsi %1, %c0_i32 : i32
    %c0_i32_0 = arith.constant 0 : i32
    %c0_i32_1 = arith.constant 0 : i32
    %c0_i32_2 = arith.constant 0 : i32
    return %arg1, %2, %c0_i32_0, %c0_i32_1 : i32, i32, i32, i32
  }
  func.func @transform_1(%arg0: i32, %arg1: i32) -> (i32, i32, i32, i32) {
    %c0_i32 = arith.constant 0 : i32
    %c0_i32_0 = arith.constant 0 : i32
    %c0_i32_1 = arith.constant 0 : i32
    return %arg1, %arg0, %c0_i32, %c0_i32_0 : i32, i32, i32, i32
  }
  func.func @transform_2(%arg0: i32, %arg1: i32) -> (i32, i32, i32, i32) {
    %c1_i32 = arith.constant 1 : i32
    %0 = arith.addi %arg0, %c1_i32 : i32
    %c8_i32 = arith.constant 8 : i32
    %1 = arith.muli %0, %c8_i32 : i32
    %c7_i32 = arith.constant 7 : i32
    %2 = arith.minsi %1, %c7_i32 : i32
    %c0_i32 = arith.constant 0 : i32
    %c0_i32_0 = arith.constant 0 : i32
    %c0_i32_1 = arith.constant 0 : i32
    return %arg1, %2, %c0_i32, %c0_i32_0 : i32, i32, i32, i32
  }
  func.func @transform_3(%arg0: i32, %arg1: i32) -> (i32, i32) {
    %c0_i32 = arith.constant 0 : i32
    %c0_i32_0 = arith.constant 0 : i32
    %c0_i32_1 = arith.constant 0 : i32
    return %c0_i32, %c0_i32_0 : i32, i32
  }
  func.func @transform_4(%arg0: i32, %arg1: i32) -> (i32, i32) {
    %c0_i32 = arith.constant 0 : i32
    %c0_i32_0 = arith.constant 0 : i32
    %c0_i32_1 = arith.constant 0 : i32
    return %c0_i32, %c0_i32_0 : i32, i32
  }
  func.func @transform_5(%arg0: i32, %arg1: i32) -> (i32, i32) {
    %c0_i32 = arith.constant 0 : i32
    %c0_i32_0 = arith.constant 0 : i32
    %c0_i32_1 = arith.constant 0 : i32
    return %c0_i32, %c0_i32_0 : i32, i32
  }
  func.func @transform_6(%arg0: i32, %arg1: i32) -> (i32, i32, i32) {
    %c0_i32 = arith.constant 0 : i32
    %c0_i32_0 = arith.constant 0 : i32
    %c0_i32_1 = arith.constant 0 : i32
    %c0_i32_2 = arith.constant 0 : i32
    return %c0_i32, %c0_i32_0, %c0_i32_1 : i32, i32, i32
  }
  func.func @transform_7(%arg0: i32, %arg1: i32) -> (i32, i32) {
    %c0_i32 = arith.constant 0 : i32
    %c0_i32_0 = arith.constant 0 : i32
    %c0_i32_1 = arith.constant 0 : i32
    return %c0_i32, %c0_i32_0 : i32, i32
  }
  func.func @transform_8(%arg0: i32, %arg1: i32) -> (i32, i32) {
    %c0_i32 = arith.constant 0 : i32
    %c0_i32_0 = arith.constant 0 : i32
    %c0_i32_1 = arith.constant 0 : i32
    return %c0_i32, %c0_i32_0 : i32, i32
  }
  func.func @transform_9(%arg0: i32, %arg1: i32) -> (i32, i32, i32, i32) {
    %c0_i32 = arith.constant 0 : i32
    %c0_i32_0 = arith.constant 0 : i32
    %c0_i32_1 = arith.constant 0 : i32
    return %arg1, %arg0, %c0_i32, %c0_i32_0 : i32, i32, i32, i32
  }
}

</mosaic_0001>

<llo_original>
// kernel: tpu_custom_call.1
$region0: #{tpu_custom_call.1}
  #allocation0 [shape = 'u32[]', space=smem, size = 0x4, offset = 0x4, fixed_abs, tag = 'smem constant byte address 0x4 - core index']
  #allocation1 [shape = 'u32[144,128]{1,0:T(1,128)}', space=vmem, size = 0x12000, scoped, tag = 'internal scratch']
  #allocation2 [shape = 'f32[20,20,8]{2,1,0:T(8,128)}', space=vmem, size = 0x3c000, scoped, tag = 'scratch operand']
  %s0 = inlined_call_operand.hbm [shape: f32[2,16,16,32], index: 0, kind: input, shape index: {}]
  %s1 = inlined_call_operand.hbm [shape: f32[2,16,16,32], index: 1, kind: input, shape index: {}]
  %s2 = inlined_call_operand.hbm [shape: f32[2,16,16,32], index: 2, kind: input, shape index: {}]
  %s3 = inlined_call_operand.vmem [shape: f32[32,8], index: 3, kind: input, shape index: {}]
  %s4 = inlined_call_operand.vmem [shape: f32[1,8], index: 4, kind: input, shape index: {}]
  %s5 = inlined_call_operand.vmem [shape: f32[1,8], index: 5, kind: input, shape index: {}]
  %s6 = inlined_call_operand.vmem [shape: f32[25,1,8], index: 6, kind: input, shape index: {}]
  %s7 = inlined_call_operand.vmem [shape: f32[1,8], index: 7, kind: input, shape index: {}]
  %s8 = inlined_call_operand.vmem [shape: f32[1,8], index: 8, kind: input, shape index: {}]
  %s9 = inlined_call_operand.hbm [shape: f32[2,16,16,16], index: 9, kind: output, shape index: {}]
  %s10 = sld [smem:[#allocation0]]
  $region81: #{tpu_custom_call.1} parent=0
    _
  %s12 = ssub.s32 1, %s10
  %s13 = scalar_select 0, %s12, %s10
  $region1: #{tpu_custom_call.1} parent=0
    #allocation3 [shape = 'u8[32768]{0}', space=vmem, size = 0x8000, scoped, tag = 'input window, operand 0']
    #allocation4 [shape = 's32[2]{0}', space=sflag, size = 0x8, scoped, tag = 'scoped memory for tpu_custom_call.1']
    #allocation5 [shape = 's32[2]{0}', space=sflag, size = 0x8, scoped, tag = 'scoped memory for tpu_custom_call.1']
    #allocation6 [shape = 'u8[262144]{0}', space=vmem, size = 0x40000, scoped, tag = 'input window, operand 1']
    #allocation7 [shape = 's32[2]{0}', space=sflag, size = 0x8, scoped, tag = 'scoped memory for tpu_custom_call.1']
    #allocation8 [shape = 'u8[32768]{0}', space=vmem, size = 0x8000, scoped, tag = 'input window, operand 2']
    #allocation9 [shape = 'u8[262144]{0}', space=vmem, size = 0x40000, scoped, tag = 'output window, operand 0']
    %14 = vsyncpa [#allocation4], 0
    %s15 = scalar_lea.sflag [#allocation4], 1
    %16 = vsyncpa %s15, 0
    %17 = vsyncpa [#allocation7], 0
    %s18 = scalar_lea.sflag [#allocation7], 1
    %19 = vsyncpa %s18, 0
    %20 = vsyncpa [#allocation5], 0
    %s21 = scalar_lea.sflag [#allocation5], 1
    %22 = vsyncpa %s21, 0
    loop: start=0, step=1, limit=4
    $region2: #{tpu_custom_call.1} parent=1 // loop_pre_header
      _
    $region3: #{tpu_custom_call.1} parent=1 // loop_header
      %s24 = sphi 0, %s28
      %p25 = scmp.ge.s32.totalorder %s24, 4
      %s31 = sphi 0, %s43
      %s32 = sphi 0, %s39
      %s33 = sphi 0, %s31
      %s34 = sphi 0, %s32
      %s35 = sphi 0, %s33
      %s36 = sphi 0, %s34
      %s56 = sphi 0, %s58
      %s59 = sphi 0, %s56
      %s60 = sphi 0, %s59
      %s76 = sphi 0, %s60
      %s84 = sphi 0, %s86
      %s87 = sphi 0, %s84
      %s88 = sphi 0, %s87
      %s104 = sphi 0, %s88
      %s120 = sphi 0, %s122
      %s123 = sphi 0, %s120
      %s124 = sphi 0, %s123
      %s140 = sphi 0, %s124
      %s144 = sphi 0, %s144
      %s146 = sphi 0, %s144
      %s147 = sphi 0, %s146
      %s161 = sphi 0, %s147
      %s165 = sphi 0, %s165
      %s167 = sphi 0, %s165
      %s168 = sphi 0, %s167
      %s182 = sphi 0, %s168
      %s186 = sphi 0, %s186
      %s188 = sphi 0, %s186
      %s189 = sphi 0, %s188
      %s203 = sphi 0, %s189
      %s207 = sphi 0, %s207
      %s209 = sphi 0, %s207
      %s210 = sphi 0, %s209
      %s224 = sphi 0, %s210
      %s228 = sphi 0, %s228
      %s230 = sphi 0, %s228
      %s231 = sphi 0, %s230
      %s245 = sphi 0, %s231
      %s249 = sphi 0, %s249
      %s251 = sphi 0, %s249
      %s252 = sphi 0, %s251
      %s266 = sphi 0, %s252
      %s274 = sphi 0, %s276
      %s277 = sphi 0, %s274
      %s278 = sphi 0, %s277
      %s294 = sphi 0, %s278
    $region4: #{tpu_custom_call.1} parent=1 // loop_header_branch
      %27 = sbr.rel (%p25) target = $region8
    $region5: #{tpu_custom_call.1} parent=1 // loop_body
      %s29 = ssub.s32 %s24, 1
      %s30 = ssub.s32 %s24, 2
      %s37 = sadd.s32 1, %s32
      %p38 = scmp.ge.s32.totalorder %s37, 2
      %s39 = scalar_select %p38, 0, %s37
      %s40 = sadd.s32 1, %s31
      %s41 = scalar_select %p38, %s40, %s31
      %p42 = scmp.ge.s32.totalorder %s41, 1
      %s43 = scalar_select %p42, 0, %s41
      %s44 = smul.u32 %s31, 8
      %s45 = ssub.s32 %s44, 1
      %p46 = scmp.gt.s32.totalorder %s45, 0
      %s47 = scalar_select %p46, %s45, 0
      %s48 = smul.u32 %s43, 8
      %s49 = ssub.s32 %s48, 1
      %p50 = scmp.gt.s32.totalorder %s49, 0
      %s51 = scalar_select %p50, %s49, 0
      %s52 = ssub.s32 %s32, %s39
      %s53 = ssub.s32 %s47, %s51
      %s54 = sor.u32 %s52, %s53
      %p55 = scmp.eq.s32.totalorder %s54, 0
      %s57 = sadd.s32 %s56, 1
      %s58 = scalar_select %p55, %s56, %s57
      %p61 = pneg %p55
      %p62 = scmp.eq.s32.totalorder %s24, 1
      %p63 = por %p61, %p62
      %p64 = scmp.ne.s32.totalorder %s56, %s59
      %p65 = scmp.eq.s32.totalorder %s24, 0
      %p66 = por %p64, %p65
      %p67 = scmp.ne.s32.totalorder %s56, %s59
      %p68 = scmp.eq.s32.totalorder %s29, 1
      %p69 = por %p67, %p68
      %p70 = scmp.ne.s32.totalorder %s59, %s60
      %p71 = scmp.eq.s32.totalorder %s29, 0
      %p72 = por %p70, %p71
      %p73 = scmp.ne.s32.totalorder %s59, %s60
      %p74 = scmp.eq.s32.totalorder %s30, 1
      %p75 = por %p73, %p74
      %p77 = scmp.ne.s32.totalorder %s60, %s76
      %p78 = scmp.eq.s32.totalorder %s30, 0
      %p79 = por %p77, %p78
      %s80 = ssub.s32 %s32, %s39
      %s81 = ssub.s32 %s31, %s43
      %s82 = sor.u32 %s80, %s81
      %p83 = scmp.eq.s32.totalorder %s82, 0
      %s85 = sadd.s32 %s84, 1
      %s86 = scalar_select %p83, %s84, %s85
      %p89 = pneg %p83
      %p90 = scmp.eq.s32.totalorder %s24, 1
      %p91 = por %p89, %p90
      %p92 = scmp.ne.s32.totalorder %s84, %s87
      %p93 = scmp.eq.s32.totalorder %s24, 0
      %p94 = por %p92, %p93
      %p95 = scmp.ne.s32.totalorder %s84, %s87
      %p96 = scmp.eq.s32.totalorder %s29, 1
      %p97 = por %p95, %p96
      %p98 = scmp.ne.s32.totalorder %s87, %s88
      %p99 = scmp.eq.s32.totalorder %s29, 0
      %p100 = por %p98, %p99
      %p101 = scmp.ne.s32.totalorder %s87, %s88
      %p102 = scmp.eq.s32.totalorder %s30, 1
      %p103 = por %p101, %p102
      %p105 = scmp.ne.s32.totalorder %s88, %s104
      %p106 = scmp.eq.s32.totalorder %s30, 0
      %p107 = por %p105, %p106
      %s108 = sadd.s32 %s31, 1
      %s109 = smul.u32 %s108, 8
      %p110 = scmp.lt.s32.totalorder %s109, 7
      %s111 = scalar_select %p110, %s109, 7
      %s112 = sadd.s32 %s43, 1
      %s113 = smul.u32 %s112, 8
      %p114 = scmp.lt.s32.totalorder %s113, 7
      %s115 = scalar_select %p114, %s113, 7
      %s116 = ssub.s32 %s32, %s39
      %s117 = ssub.s32 %s111, %s115
      %s118 = sor.u32 %s116, %s117
      %p119 = scmp.eq.s32.totalorder %s118, 0
      %s121 = sadd.s32 %s120, 1
      %s122 = scalar_select %p119, %s120, %s121
      %p125 = pneg %p119
      %p126 = scmp.eq.s32.totalorder %s24, 1
      %p127 = por %p125, %p126
      %p128 = scmp.ne.s32.totalorder %s120, %s123
      %p129 = scmp.eq.s32.totalorder %s24, 0
      %p130 = por %p128, %p129
      %p131 = scmp.ne.s32.totalorder %s120, %s123
      %p132 = scmp.eq.s32.totalorder %s29, 1
      %p133 = por %p131, %p132
      %p134 = scmp.ne.s32.totalorder %s123, %s124
      %p135 = scmp.eq.s32.totalorder %s29, 0
      %p136 = por %p134, %p135
      %p137 = scmp.ne.s32.totalorder %s123, %s124
      %p138 = scmp.eq.s32.totalorder %s30, 1
      %p139 = por %p137, %p138
      %p141 = scmp.ne.s32.totalorder %s124, %s140
      %p142 = scmp.eq.s32.totalorder %s30, 0
      %p143 = por %p141, %p142
      %s145 = sadd.s32 %s144, 1
      %p148 = scmp.eq.s32.totalorder %s24, 1
      %p149 = scmp.ne.s32.totalorder %s144, %s146
      %p150 = scmp.eq.s32.totalorder %s24, 0
      %p151 = por %p149, %p150
      %p152 = scmp.ne.s32.totalorder %s144, %s146
      %p153 = scmp.eq.s32.totalorder %s29, 1
      %p154 = por %p152, %p153
      %p155 = scmp.ne.s32.totalorder %s146, %s147
      %p156 = scmp.eq.s32.totalorder %s29, 0
      %p157 = por %p155, %p156
      %p158 = scmp.ne.s32.totalorder %s146, %s147
      %p159 = scmp.eq.s32.totalorder %s30, 1
      %p160 = por %p158, %p159
      %p162 = scmp.ne.s32.totalorder %s147, %s161
      %p163 = scmp.eq.s32.totalorder %s30, 0
      %p164 = por %p162, %p163
      %s166 = sadd.s32 %s165, 1
      %p169 = scmp.eq.s32.totalorder %s24, 1
      %p170 = scmp.ne.s32.totalorder %s165, %s167
      %p171 = scmp.eq.s32.totalorder %s24, 0
      %p172 = por %p170, %p171
      %p173 = scmp.ne.s32.totalorder %s165, %s167
      %p174 = scmp.eq.s32.totalorder %s29, 1
      %p175 = por %p173, %p174
      %p176 = scmp.ne.s32.totalorder %s167, %s168
      %p177 = scmp.eq.s32.totalorder %s29, 0
      %p178 = por %p176, %p177
      %p179 = scmp.ne.s32.totalorder %s167, %s168
      %p180 = scmp.eq.s32.totalorder %s30, 1
      %p181 = por %p179, %p180
      %p183 = scmp.ne.s32.totalorder %s168, %s182
      %p184 = scmp.eq.s32.totalorder %s30, 0
      %p185 = por %p183, %p184
      %s187 = sadd.s32 %s186, 1
      %p190 = scmp.eq.s32.totalorder %s24, 1
      %p191 = scmp.ne.s32.totalorder %s186, %s188
      %p192 = scmp.eq.s32.totalorder %s24, 0
      %p193 = por %p191, %p192
      %p194 = scmp.ne.s32.totalorder %s186, %s188
      %p195 = scmp.eq.s32.totalorder %s29, 1
      %p196 = por %p194, %p195
      %p197 = scmp.ne.s32.totalorder %s188, %s189
      %p198 = scmp.eq.s32.totalorder %s29, 0
      %p199 = por %p197, %p198
      %p200 = scmp.ne.s32.totalorder %s188, %s189
      %p201 = scmp.eq.s32.totalorder %s30, 1
      %p202 = por %p200, %p201
      %p204 = scmp.ne.s32.totalorder %s189, %s203
      %p205 = scmp.eq.s32.totalorder %s30, 0
      %p206 = por %p204, %p205
      %s208 = sadd.s32 %s207, 1
      %p211 = scmp.eq.s32.totalorder %s24, 1
      %p212 = scmp.ne.s32.totalorder %s207, %s209
      %p213 = scmp.eq.s32.totalorder %s24, 0
      %p214 = por %p212, %p213
      %p215 = scmp.ne.s32.totalorder %s207, %s209
      %p216 = scmp.eq.s32.totalorder %s29, 1
      %p217 = por %p215, %p216
      %p218 = scmp.ne.s32.totalorder %s209, %s210
      %p219 = scmp.eq.s32.totalorder %s29, 0
      %p220 = por %p218, %p219
      %p221 = scmp.ne.s32.totalorder %s209, %s210
      %p222 = scmp.eq.s32.totalorder %s30, 1
      %p223 = por %p221, %p222
      %p225 = scmp.ne.s32.totalorder %s210, %s224
      %p226 = scmp.eq.s32.totalorder %s30, 0
      %p227 = por %p225, %p226
      %s229 = sadd.s32 %s228, 1
      %p232 = scmp.eq.s32.totalorder %s24, 1
      %p233 = scmp.ne.s32.totalorder %s228, %s230
      %p234 = scmp.eq.s32.totalorder %s24, 0
      %p235 = por %p233, %p234
      %p236 = scmp.ne.s32.totalorder %s228, %s230
      %p237 = scmp.eq.s32.totalorder %s29, 1
      %p238 = por %p236, %p237
      %p239 = scmp.ne.s32.totalorder %s230, %s231
      %p240 = scmp.eq.s32.totalorder %s29, 0
      %p241 = por %p239, %p240
      %p242 = scmp.ne.s32.totalorder %s230, %s231
      %p243 = scmp.eq.s32.totalorder %s30, 1
      %p244 = por %p242, %p243
      %p246 = scmp.ne.s32.totalorder %s231, %s245
      %p247 = scmp.eq.s32.totalorder %s30, 0
      %p248 = por %p246, %p247
      %s250 = sadd.s32 %s249, 1
      %p253 = scmp.eq.s32.totalorder %s24, 1
      %p254 = scmp.ne.s32.totalorder %s249, %s251
      %p255 = scmp.eq.s32.totalorder %s24, 0
      %p256 = por %p254, %p255
      %p257 = scmp.ne.s32.totalorder %s249, %s251
      %p258 = scmp.eq.s32.totalorder %s29, 1
      %p259 = por %p257, %p258
      %p260 = scmp.ne.s32.totalorder %s251, %s252
      %p261 = scmp.eq.s32.totalorder %s29, 0
      %p262 = por %p260, %p261
      %p263 = scmp.ne.s32.totalorder %s251, %s252
      %p264 = scmp.eq.s32.totalorder %s30, 1
      %p265 = por %p263, %p264
      %p267 = scmp.ne.s32.totalorder %s252, %s266
      %p268 = scmp.eq.s32.totalorder %s30, 0
      %p269 = por %p267, %p268
      %s270 = ssub.s32 %s32, %s39
      %s271 = ssub.s32 %s31, %s43
      %s272 = sor.u32 %s270, %s271
      %p273 = scmp.eq.s32.totalorder %s272, 0
      %s275 = sadd.s32 %s274, 1
      %s276 = scalar_select %p273, %s274, %s275
      %p279 = pneg %p273
      %p280 = scmp.eq.s32.totalorder %s24, 1
      %p281 = por %p279, %p280
      %p282 = scmp.ne.s32.totalorder %s274, %s277
      %p283 = scmp.eq.s32.totalorder %s24, 0
      %p284 = por %p282, %p283
      %p285 = scmp.ne.s32.totalorder %s274, %s277
      %p286 = scmp.eq.s32.totalorder %s29, 1
      %p287 = por %p285, %p286
      %p288 = scmp.ne.s32.totalorder %s277, %s278
      %p289 = scmp.eq.s32.totalorder %s29, 0
      %p290 = por %p288, %p289
      %p291 = scmp.ne.s32.totalorder %s277, %s278
      %p292 = scmp.eq.s32.totalorder %s30, 1
      %p293 = por %p291, %p292
      %p295 = scmp.ne.s32.totalorder %s278, %s294
      %p296 = scmp.eq.s32.totalorder %s30, 0
      %p297 = por %p295, %p296
      %p298 = scmp.le.s32.totalorder 1, %s24
      %p299 = scmp.lt.s32.totalorder %s24, 3
      %p300 = pnand %p298, %p299
      %p301 = pneg %p300
      // Predicated region
      $region9: #{tpu_custom_call.1} parent=5 // pred_check
        _
      $region10: #{tpu_custom_call.1} parent=5 // pred_check_branch
        %303 = sbr.rel (%p300) target = $region12
      $region11: #{tpu_custom_call.1} parent=5 // pred_region
        %s304 = ssub.s32 %s24, 1
        // Predicated region
        $region13: #{tpu_custom_call.1} parent=11 // pred_check
          %p305 = pneg %p157
        $region14: #{tpu_custom_call.1} parent=11 // pred_check_branch
          %307 = sbr.rel (%p305) target = $region16
        $region15: #{tpu_custom_call.1} parent=11 // pred_region
          _
        $region16: #{tpu_custom_call.1} parent=11 // pred_fallthru
          _
        // Predicated region
        $region17: #{tpu_custom_call.1} parent=11 // pred_check
          %p308 = pneg %p178
        $region18: #{tpu_custom_call.1} parent=11 // pred_check_branch
          %310 = sbr.rel (%p308) target = $region20
        $region19: #{tpu_custom_call.1} parent=11 // pred_region
          _
        $region20: #{tpu_custom_call.1} parent=11 // pred_fallthru
          _
        // Predicated region
        $region21: #{tpu_custom_call.1} parent=11 // pred_check
          %p311 = pneg %p199
        $region22: #{tpu_custom_call.1} parent=11 // pred_check_branch
          %313 = sbr.rel (%p311) target = $region24
        $region23: #{tpu_custom_call.1} parent=11 // pred_region
          _
        $region24: #{tpu_custom_call.1} parent=11 // pred_fallthru
          _
        // Predicated region
        $region25: #{tpu_custom_call.1} parent=11 // pred_check
          %p314 = pneg %p220
        $region26: #{tpu_custom_call.1} parent=11 // pred_check_branch
          %316 = sbr.rel (%p314) target = $region28
        $region27: #{tpu_custom_call.1} parent=11 // pred_region
          _
        $region28: #{tpu_custom_call.1} parent=11 // pred_fallthru
          _
        // Predicated region
        $region29: #{tpu_custom_call.1} parent=11 // pred_check
          %p317 = pneg %p241
        $region30: #{tpu_custom_call.1} parent=11 // pred_check_branch
          %319 = sbr.rel (%p317) target = $region32
        $region31: #{tpu_custom_call.1} parent=11 // pred_region
          _
        $region32: #{tpu_custom_call.1} parent=11 // pred_fallthru
          _
        // Predicated region
        $region33: #{tpu_custom_call.1} parent=11 // pred_check
          %p320 = pneg %p262
        $region34: #{tpu_custom_call.1} parent=11 // pred_check_branch
          %322 = sbr.rel (%p320) target = $region36
        $region35: #{tpu_custom_call.1} parent=11 // pred_region
          _
        $region36: #{tpu_custom_call.1} parent=11 // pred_fallthru
          _
      $region12: #{tpu_custom_call.1} parent=5 // pred_fallthru
        _
      %p323 = scmp.lt.s32.totalorder %s24, 2
      // Predicated region
      $region37: #{tpu_custom_call.1} parent=5 // pred_check
        %p324 = pneg %p323
      $region38: #{tpu_custom_call.1} parent=5 // pred_check_branch
        %326 = sbr.rel (%p324) target = $region40
      $region39: #{tpu_custom_call.1} parent=5 // pred_region
        // Predicated region
        $region41: #{tpu_custom_call.1} parent=39 // pred_check
          %p327 = pneg %p66
        $region42: #{tpu_custom_call.1} parent=39 // pred_check_branch
          %329 = sbr.rel (%p327) target = $region44
        $region43: #{tpu_custom_call.1} parent=39 // pred_region
          %s330 = sand.u32 %s56, 1
          %s331 = scalar_lea.sflag [#allocation4], %s330
          %s332 = sand.u32 %s56, 1
          %s333 = smul.addr %s332, 32
          %s334 = scalar_lea.vmem [#allocation3], %s333
          %s335 = smul.u32 %s31, 8
          %s336 = ssub.s32 %s335, 1
          %p337 = scmp.gt.s32.totalorder %s336, 0
          %s338 = scalar_select %p337, %s336, 0
          %s339 = smul.u32 2, %s338
          %s341 = ssub.s32 512, 512
          %342 = vsyncadd %s331, %s341
          %s343 = smul.addr %s339, 2
          %s344 = smul.addr %s32, 32
          %s345 = sadd.s32 %s343, %s344
          %s346 = smul.addr %s345, 128
          %s347 = scalar_lea.hbm %s0, %s346
          %s348 = sshll.u32 %s334, 4
          %s349 = int_to_ptr.vmem [resolvable:$true] %s348
          %354 = dma.hbm_to_vmem [thread:$0]  %s347, 512, %s349, %s331, 128, 128, 8
        $region44: #{tpu_custom_call.1} parent=39 // pred_fallthru
          _
        // Predicated region
        $region45: #{tpu_custom_call.1} parent=39 // pred_check
          %p355 = pneg %p94
        $region46: #{tpu_custom_call.1} parent=39 // pred_check_branch
          %357 = sbr.rel (%p355) target = $region48
        $region47: #{tpu_custom_call.1} parent=39 // pred_region
          %s358 = sand.u32 %s24, 1
          %s359 = scalar_lea.sflag [#allocation7], %s358
          %s360 = sand.u32 %s84, 1
          %s361 = smul.addr %s360, 256
          %s362 = scalar_lea.vmem [#allocation6], %s361
          %s363 = smul.u32 16, %s31
          %s365 = ssub.s32 4096, 4096
          %366 = vsyncadd %s359, %s365
          %s367 = smul.addr %s363, 2
          %s368 = smul.addr %s32, 32
          %s369 = sadd.s32 %s367, %s368
          %s370 = smul.addr %s369, 128
          %s371 = scalar_lea.hbm %s1, %s370
          %s372 = sshll.u32 %s362, 4
          %s373 = int_to_ptr.vmem [resolvable:$true] %s372
          %378 = dma.hbm_to_vmem [thread:$0]  %s371, 4096, %s373, %s359, 128, 128, 8
        $region48: #{tpu_custom_call.1} parent=39 // pred_fallthru
          _
        // Predicated region
        $region49: #{tpu_custom_call.1} parent=39 // pred_check
          %p379 = pneg %p130
        $region50: #{tpu_custom_call.1} parent=39 // pred_check_branch
          %381 = sbr.rel (%p379) target = $region52
        $region51: #{tpu_custom_call.1} parent=39 // pred_region
          %s382 = sand.u32 %s24, 1
          %s383 = scalar_lea.sflag [#allocation7], %s382
          %s384 = sand.u32 %s120, 1
          %s385 = smul.addr %s384, 32
          %s386 = scalar_lea.vmem [#allocation8], %s385
          %s387 = sadd.s32 %s31, 1
          %s388 = smul.u32 %s387, 8
          %p389 = scmp.lt.s32.totalorder %s388, 7
          %s390 = scalar_select %p389, %s388, 7
          %s391 = smul.u32 2, %s390
          %s393 = ssub.s32 512, 512
          %394 = vsyncadd %s383, %s393
          %s395 = smul.addr %s391, 2
          %s396 = smul.addr %s32, 32
          %s397 = sadd.s32 %s395, %s396
          %s398 = smul.addr %s397, 128
          %s399 = scalar_lea.hbm %s2, %s398
          %s400 = sshll.u32 %s386, 4
          %s401 = int_to_ptr.vmem [resolvable:$true] %s400
          %406 = dma.hbm_to_vmem [thread:$0]  %s399, 512, %s401, %s383, 128, 128, 8
        $region52: #{tpu_custom_call.1} parent=39 // pred_fallthru
          _
      $region40: #{tpu_custom_call.1} parent=5 // pred_fallthru
        _
      %p407 = scmp.le.s32.totalorder 1, %s24
      %p408 = scmp.lt.s32.totalorder %s24, 3
      %p409 = pnand %p407, %p408
      %p410 = pneg %p409
      // Predicated region
      $region53: #{tpu_custom_call.1} parent=5 // pred_check
        _
      $region54: #{tpu_custom_call.1} parent=5 // pred_check_branch
        %412 = sbr.rel (%p409) target = $region56
      $region55: #{tpu_custom_call.1} parent=5 // pred_region
        %s413 = ssub.s32 %s24, 1
        %s414 = sand.u32 %s59, 1
        %s415 = scalar_lea.sflag [#allocation4], %s414
        %s416 = sand.u32 %s59, 1
        %s417 = smul.addr %s416, 32
        %s418 = scalar_lea.vmem [#allocation3], %s417
        // Predicated region
        $region57: #{tpu_custom_call.1} parent=55 // pred_check
          %p419 = pneg %p72
        $region58: #{tpu_custom_call.1} parent=55 // pred_check_branch
          %421 = sbr.rel (%p419) target = $region60
        $region59: #{tpu_custom_call.1} parent=55 // pred_region
          %422 = dma.done %s415, 512
        $region60: #{tpu_custom_call.1} parent=55 // pred_fallthru
          _
        %s423 = sand.u32 %s29, 1
        %s424 = scalar_lea.sflag [#allocation7], %s423
        %s425 = sand.u32 %s87, 1
        %s426 = smul.addr %s425, 256
        %s427 = scalar_lea.vmem [#allocation6], %s426
        // Predicated region
        $region61: #{tpu_custom_call.1} parent=55 // pred_check
          %p428 = pneg %p100
        $region62: #{tpu_custom_call.1} parent=55 // pred_check_branch
          %430 = sbr.rel (%p428) target = $region64
        $region63: #{tpu_custom_call.1} parent=55 // pred_region
          %431 = dma.done %s424, 4096
        $region64: #{tpu_custom_call.1} parent=55 // pred_fallthru
          _
        %s432 = sand.u32 %s29, 1
        %s433 = scalar_lea.sflag [#allocation7], %s432
        %s434 = sand.u32 %s123, 1
        %s435 = smul.addr %s434, 32
        %s436 = scalar_lea.vmem [#allocation8], %s435
        // Predicated region
        $region65: #{tpu_custom_call.1} parent=55 // pred_check
          %p437 = pneg %p136
        $region66: #{tpu_custom_call.1} parent=55 // pred_check_branch
          %439 = sbr.rel (%p437) target = $region68
        $region67: #{tpu_custom_call.1} parent=55 // pred_region
          %440 = dma.done %s433, 512
        $region68: #{tpu_custom_call.1} parent=55 // pred_fallthru
          _
        %s441 = sand.u32 %s59, 1
        %s442 = scalar_lea.sflag [#allocation4], %s441
        %s443 = sand.u32 %s59, 1
        %s444 = smul.addr %s443, 32
        %s445 = scalar_lea.vmem [#allocation3], %s444
        %p446 = pneg %p72
        %p447 = pneg %p69
        %s448 = sand.u32 %s29, 1
        %s449 = scalar_lea.sflag [#allocation7], %s448
        %s450 = sand.u32 %s87, 1
        %s451 = smul.addr %s450, 256
        %s452 = scalar_lea.vmem [#allocation6], %s451
        %p453 = pneg %p100
        %p454 = pneg %p97
        %s455 = sand.u32 %s29, 1
        %s456 = scalar_lea.sflag [#allocation7], %s455
        %s457 = sand.u32 %s123, 1
        %s458 = smul.addr %s457, 32
        %s459 = scalar_lea.vmem [#allocation8], %s458
        %p460 = pneg %p136
        %p461 = pneg %p133
        %p462 = pneg %p157
        %p463 = pneg %p154
        %p464 = pneg %p178
        %p465 = pneg %p175
        %p466 = pneg %p199
        %p467 = pneg %p196
        %p468 = pneg %p220
        %p469 = pneg %p217
        %p470 = pneg %p241
        %p471 = pneg %p238
        %p472 = pneg %p262
        %p473 = pneg %p259
        %p474 = pneg %p290
        %p475 = pneg %p287
        %s476 = sand.u32 %s277, 1
        %s477 = scalar_lea.sflag [#allocation5], %s476
        %s478 = sand.u32 %s277, 1
        %s479 = smul.addr %s478, 256
        %s480 = scalar_lea.vmem [#allocation9], %s479
        %s481 = smul.u32 %s33, 8
        %s482 = ssub.s32 %s481, 1
        %p483 = scmp.gt.s32.totalorder %s482, 0
        %s484 = scalar_select %p483, %s482, 0
        %s485 = smul.u32 2, %s484
        %s486 = smul.u32 16, %s33
        %s487 = sadd.s32 %s33, 1
        %s488 = smul.u32 %s487, 8
        %p489 = scmp.lt.s32.totalorder %s488, 7
        %s490 = scalar_select %p489, %s488, 7
        %s491 = smul.u32 2, %s490
        %s492 = smul.u32 16, %s33
        %s493 = smul.u32 %s33, 16
        %vm494 = vcmask 58368
        %495 = vst.msk [vmem:[#allocation2] sm:$0x3] %vm494, 0.0
        %496 = vst.msk [vmem:[#allocation2 + $0x18] sm:$0x3] %vm494, 0.0
        %497 = vst.msk [vmem:[#allocation2 + $0x30] sm:$0x3] %vm494, 0.0
        %498 = vst.msk [vmem:[#allocation2 + $0x48] sm:$0x3] %vm494, 0.0
        %499 = vst.msk [vmem:[#allocation2 + $0x60] sm:$0x3] %vm494, 0.0
        %500 = vst.msk [vmem:[#allocation2 + $0x78] sm:$0x3] %vm494, 0.0
        %501 = vst.msk [vmem:[#allocation2 + $0x90] sm:$0x3] %vm494, 0.0
        %502 = vst.msk [vmem:[#allocation2 + $0xa8] sm:$0x3] %vm494, 0.0
        %503 = vst.msk [vmem:[#allocation2 + $0xc0] sm:$0x3] %vm494, 0.0
        %504 = vst.msk [vmem:[#allocation2 + $0xd8] sm:$0x3] %vm494, 0.0
        %505 = vst.msk [vmem:[#allocation2 + $0xf0] sm:$0x3] %vm494, 0.0
        %506 = vst.msk [vmem:[#allocation2 + $0x108] sm:$0x3] %vm494, 0.0
        %507 = vst.msk [vmem:[#allocation2 + $0x120] sm:$0x3] %vm494, 0.0
        %508 = vst.msk [vmem:[#allocation2 + $0x138] sm:$0x3] %vm494, 0.0
        %509 = vst.msk [vmem:[#allocation2 + $0x150] sm:$0x3] %vm494, 0.0
        %510 = vst.msk [vmem:[#allocation2 + $0x168] sm:$0x3] %vm494, 0.0
        %511 = vst.msk [vmem:[#allocation2 + $0x180] sm:$0x3] %vm494, 0.0
        %512 = vst.msk [vmem:[#allocation2 + $0x198] sm:$0x3] %vm494, 0.0
        %513 = vst.msk [vmem:[#allocation2 + $0x1b0] sm:$0x3] %vm494, 0.0
        %514 = vst.msk [vmem:[#allocation2 + $0x1c8] sm:$0x3] %vm494, 0.0
        %515 = vst.msk [vmem:[#allocation2 + $0x12] sm:$0x3] %vm494, 0.0
        %516 = vst.msk [vmem:[#allocation2 + $0x2a] sm:$0x3] %vm494, 0.0
        %517 = vst.msk [vmem:[#allocation2 + $0x42] sm:$0x3] %vm494, 0.0
        %518 = vst.msk [vmem:[#allocation2 + $0x5a] sm:$0x3] %vm494, 0.0
        %519 = vst.msk [vmem:[#allocation2 + $0x72] sm:$0x3] %vm494, 0.0
        %520 = vst.msk [vmem:[#allocation2 + $0x8a] sm:$0x3] %vm494, 0.0
        %521 = vst.msk [vmem:[#allocation2 + $0xa2] sm:$0x3] %vm494, 0.0
        %522 = vst.msk [vmem:[#allocation2 + $0xba] sm:$0x3] %vm494, 0.0
        %523 = vst.msk [vmem:[#allocation2 + $0xd2] sm:$0x3] %vm494, 0.0
        %524 = vst.msk [vmem:[#allocation2 + $0xea] sm:$0x3] %vm494, 0.0
        %525 = vst.msk [vmem:[#allocation2 + $0x102] sm:$0x3] %vm494, 0.0
        %526 = vst.msk [vmem:[#allocation2 + $0x11a] sm:$0x3] %vm494, 0.0
        %527 = vst.msk [vmem:[#allocation2 + $0x132] sm:$0x3] %vm494, 0.0
        %528 = vst.msk [vmem:[#allocation2 + $0x14a] sm:$0x3] %vm494, 0.0
        %529 = vst.msk [vmem:[#allocation2 + $0x162] sm:$0x3] %vm494, 0.0
        %530 = vst.msk [vmem:[#allocation2 + $0x17a] sm:$0x3] %vm494, 0.0
        %531 = vst.msk [vmem:[#allocation2 + $0x192] sm:$0x3] %vm494, 0.0
        %532 = vst.msk [vmem:[#allocation2 + $0x1aa] sm:$0x3] %vm494, 0.0
        %533 = vst.msk [vmem:[#allocation2 + $0x1c2] sm:$0x3] %vm494, 0.0
        %534 = vst.msk [vmem:[#allocation2 + $0x1da] sm:$0x3] %vm494, 0.0
        %v535 = vld [vmem:[%s427] sm:$0xff]
        %v536 = vld [vmem:[%s427 + $0x8] sm:$0xff]
        %v537 = vld [vmem:[%s427 + $0x10] sm:$0xff]
        %v538 = vld [vmem:[%s427 + $0x18] sm:$0xff]
        %v539 = vld [vmem:[%s427 + $0x20] sm:$0xff]
        %v540 = vld [vmem:[%s427 + $0x28] sm:$0xff]
        %v541 = vld [vmem:[%s427 + $0x30] sm:$0xff]
        %v542 = vld [vmem:[%s427 + $0x38] sm:$0xff]
        %v543 = vld [vmem:[%s427 + $0x40] sm:$0xff]
        %v544 = vld [vmem:[%s427 + $0x48] sm:$0xff]
        %v545 = vld [vmem:[%s427 + $0x50] sm:$0xff]
        %v546 = vld [vmem:[%s427 + $0x58] sm:$0xff]
        %v547 = vld [vmem:[%s427 + $0x60] sm:$0xff]
        %v548 = vld [vmem:[%s427 + $0x68] sm:$0xff]
        %v549 = vld [vmem:[%s427 + $0x70] sm:$0xff]
        %v550 = vld [vmem:[%s427 + $0x78] sm:$0xff]
        %v551 = vld [vmem:[%s427 + $0x80] sm:$0xff]
        %v552 = vld [vmem:[%s427 + $0x88] sm:$0xff]
        %v553 = vld [vmem:[%s427 + $0x90] sm:$0xff]
        %v554 = vld [vmem:[%s427 + $0x98] sm:$0xff]
        %v555 = vld [vmem:[%s427 + $0xa0] sm:$0xff]
        %v556 = vld [vmem:[%s427 + $0xa8] sm:$0xff]
        %v557 = vld [vmem:[%s427 + $0xb0] sm:$0xff]
        %v558 = vld [vmem:[%s427 + $0xb8] sm:$0xff]
        %v559 = vld [vmem:[%s427 + $0xc0] sm:$0xff]
        %v560 = vld [vmem:[%s427 + $0xc8] sm:$0xff]
        %v561 = vld [vmem:[%s427 + $0xd0] sm:$0xff]
        %v562 = vld [vmem:[%s427 + $0xd8] sm:$0xff]
        %v563 = vld [vmem:[%s427 + $0xe0] sm:$0xff]
        %v564 = vld [vmem:[%s427 + $0xe8] sm:$0xff]
        %v565 = vld [vmem:[%s427 + $0xf0] sm:$0xff]
        %v566 = vld [vmem:[%s427 + $0xf8] sm:$0xff]
        %v567 = vld [vmem:[%s3] sm:$0xff]
        %v568 = vld [vmem:[%s3 + $0x8] sm:$0xff]
        %v569 = vld [vmem:[%s3 + $0x10] sm:$0xff]
        %v570 = vld [vmem:[%s3 + $0x18] sm:$0xff]
        %vm571 = vcmask 261120
        %v573 = vsel %vm571, %v535, 0
        %v576 = vsel %vm571, %v536, 0
        %v579 = vsel %vm571, %v537, 0
        %v582 = vsel %vm571, %v538, 0
        %v585 = vsel %vm571, %v539, 0
        %v588 = vsel %vm571, %v540, 0
        %v591 = vsel %vm571, %v541, 0
        %v594 = vsel %vm571, %v542, 0
        %v597 = vsel %vm571, %v543, 0
        %v600 = vsel %vm571, %v544, 0
        %v603 = vsel %vm571, %v545, 0
        %v606 = vsel %vm571, %v546, 0
        %v609 = vsel %vm571, %v547, 0
        %v612 = vsel %vm571, %v548, 0
        %v615 = vsel %vm571, %v549, 0
        %v618 = vsel %vm571, %v550, 0
        %v621 = vsel %vm571, %v551, 0
        %v624 = vsel %vm571, %v552, 0
        %v627 = vsel %vm571, %v553, 0
        %v630 = vsel %vm571, %v554, 0
        %v633 = vsel %vm571, %v555, 0
        %v636 = vsel %vm571, %v556, 0
        %v639 = vsel %vm571, %v557, 0
        %v642 = vsel %vm571, %v558, 0
        %v645 = vsel %vm571, %v559, 0
        %v648 = vsel %vm571, %v560, 0
        %v651 = vsel %vm571, %v561, 0
        %v654 = vsel %vm571, %v562, 0
        %v657 = vsel %vm571, %v563, 0
        %v660 = vsel %vm571, %v564, 0
        %v663 = vsel %vm571, %v565, 0
        %v666 = vsel %vm571, %v566, 0
        %668 = vmatprep.subr.mxu0 0.0
        %669 = vmatpush1.msra.mxu0 %v567
        %670 = vmatprep.subr.mxu0 0.0
        %671 = vmatpush1.msra.mxu0 %v568
        %672 = vmatprep.subr.mxu0 0.0
        %673 = vmatpush1.msra.mxu0 %v569
        %674 = vmatprep.subr.mxu0 0.0
        %675 = vmatpush1.msra.mxu0 %v570
        %676 = vmatprep.subr.mxu0 0.0
        %677 = vmatpush1.msra.mxu0 0.0
        %678 = vmatprep.subr.mxu0 0.0
        %679 = vmatpush1.msra.mxu0 0.0
        %680 = vmatprep.subr.mxu0 0.0
        %681 = vmatpush1.msra.mxu0 0.0
        %682 = vmatprep.subr.mxu0 0.0
        %683 = vmatpush1.msra.mxu0 0.0
        %684 = vmatprep.subr.mxu0 0.0
        %685 = vmatpush1.msra.mxu0 0.0
        %686 = vmatprep.subr.mxu0 0.0
        %687 = vmatpush1.msra.mxu0 0.0
        %688 = vmatprep.subr.mxu0 0.0
        %689 = vmatpush1.msra.mxu0 0.0
        %690 = vmatprep.subr.mxu0 0.0
        %691 = vmatpush1.msra.mxu0 0.0
        %692 = vmatprep.subr.mxu0 0.0
        %693 = vmatpush1.msra.mxu0 0.0
        %694 = vmatprep.subr.mxu0 0.0
        %695 = vmatpush1.msra.mxu0 0.0
        %696 = vmatprep.subr.mxu0 0.0
        %697 = vmatpush1.msra.mxu0 0.0
        %698 = vmatprep.subr.mxu0 0.0
        %699 = vmatpush1.msra.mxu0 0.0
        %700 = vmatprep.subr.mxu0 0.0
        %701 = vmatpush1.msra.mxu0 0.0
        %702 = vmatprep.subr.mxu0 0.0
        %703 = vmatpush1.msra.mxu0 0.0
        %704 = vmatprep.subr.mxu0 0.0
        %705 = vmatpush1.msra.mxu0 0.0
        %706 = vmatprep.subr.mxu0 0.0
        %707 = vmatpush1.msra.mxu0 0.0
        %708 = vmatprep.subr.mxu0 0.0
        %709 = vmatpush1.msra.mxu0 0.0
        %710 = vmatprep.subr.mxu0 0.0
        %711 = vmatpush1.msra.mxu0 0.0
        %712 = vmatprep.subr.mxu0 0.0
        %713 = vmatpush1.msra.mxu0 0.0
        %714 = vmatprep.subr.mxu0 0.0
        %715 = vmatpush1.msra.mxu0 0.0
        %716 = vmatprep.subr.mxu0 0.0
        %717 = vmatpush1.msra.mxu0 0.0
        %718 = vmatprep.subr.mxu0 0.0
        %719 = vmatpush1.msra.mxu0 0.0
        %720 = vmatprep.subr.mxu0 0.0
        %721 = vmatpush1.msra.mxu0 0.0
        %722 = vmatprep.subr.mxu0 0.0
        %723 = vmatpush1.msra.mxu0 0.0
        %724 = vmatprep.subr.mxu0 0.0
        %725 = vmatpush1.msra.mxu0 0.0
        %726 = vmatprep.subr.mxu0 0.0
        %727 = vmatpush1.msra.mxu0 0.0
        %728 = vmatprep.subr.mxu0 0.0
        %729 = vmatpush1.msra.mxu0 0.0
        %730 = vmatprep.subr.mxu0 0.0
        %731 = vmatpush1.msra.mxu0 0.0
        %732 = vmatprep.mubr.f32.mxu0 0.0
        %733 = vmatmul.mubr.f32.gmra.mrb[0].mxu0 %v573
        %v734 = vpop.f32.mrb[0].mxu0
        %v735 = vadd.f32 0.0, %v734
        %v736 = vpop.f32.mrb[0].mxu0
        %737 = vmatprep.mubr.f32.mxu0 0.0
        %738 = vmatmul.mubr.f32.gmra.mrb[0].mxu0 %v576
        %v739 = vpop.f32.mrb[0].mxu0
        %v740 = vadd.f32 0.0, %v739
        %v741 = vpop.f32.mrb[0].mxu0
        %742 = vmatprep.mubr.f32.mxu0 0.0
        %743 = vmatmul.mubr.f32.gmra.mrb[0].mxu0 %v579
        %v744 = vpop.f32.mrb[0].mxu0
        %v745 = vadd.f32 0.0, %v744
        %v746 = vpop.f32.mrb[0].mxu0
        %747 = vmatprep.mubr.f32.mxu0 0.0
        %748 = vmatmul.mubr.f32.gmra.mrb[0].mxu0 %v582
        %v749 = vpop.f32.mrb[0].mxu0
        %v750 = vadd.f32 0.0, %v749
        %v751 = vpop.f32.mrb[0].mxu0
        %752 = vmatprep.mubr.f32.mxu0 0.0
        %753 = vmatmul.mubr.f32.gmra.mrb[0].mxu0 %v585
        %v754 = vpop.f32.mrb[0].mxu0
        %v755 = vadd.f32 0.0, %v754
        %v756 = vpop.f32.mrb[0].mxu0
        %757 = vmatprep.mubr.f32.mxu0 0.0
        %758 = vmatmul.mubr.f32.gmra.mrb[0].mxu0 %v588
        %v759 = vpop.f32.mrb[0].mxu0
        %v760 = vadd.f32 0.0, %v759
        %v761 = vpop.f32.mrb[0].mxu0
        %762 = vmatprep.mubr.f32.mxu0 0.0
        %763 = vmatmul.mubr.f32.gmra.mrb[0].mxu0 %v591
        %v764 = vpop.f32.mrb[0].mxu0
        %v765 = vadd.f32 0.0, %v764
        %v766 = vpop.f32.mrb[0].mxu0
        %767 = vmatprep.mubr.f32.mxu0 0.0
        %768 = vmatmul.mubr.f32.gmra.mrb[0].mxu0 %v594
        %v769 = vpop.f32.mrb[0].mxu0
        %v770 = vadd.f32 0.0, %v769
        %v771 = vpop.f32.mrb[0].mxu0
        %772 = vmatprep.mubr.f32.mxu0 0.0
        %773 = vmatmul.mubr.f32.gmra.mrb[0].mxu0 %v597
        %v774 = vpop.f32.mrb[0].mxu0
        %v775 = vadd.f32 0.0, %v774
        %v776 = vpop.f32.mrb[0].mxu0
        %777 = vmatprep.mubr.f32.mxu0 0.0
        %778 = vmatmul.mubr.f32.gmra.mrb[0].mxu0 %v600
        %v779 = vpop.f32.mrb[0].mxu0
        %v780 = vadd.f32 0.0, %v779
        %v781 = vpop.f32.mrb[0].mxu0
        %782 = vmatprep.mubr.f32.mxu0 0.0
        %783 = vmatmul.mubr.f32.gmra.mrb[0].mxu0 %v603
        %v784 = vpop.f32.mrb[0].mxu0
        %v785 = vadd.f32 0.0, %v784
        %v786 = vpop.f32.mrb[0].mxu0
        %787 = vmatprep.mubr.f32.mxu0 0.0
        %788 = vmatmul.mubr.f32.gmra.mrb[0].mxu0 %v606
        %v789 = vpop.f32.mrb[0].mxu0
        %v790 = vadd.f32 0.0, %v789
        %v791 = vpop.f32.mrb[0].mxu0
        %792 = vmatprep.mubr.f32.mxu0 0.0
        %793 = vmatmul.mubr.f32.gmra.mrb[0].mxu0 %v609
        %v794 = vpop.f32.mrb[0].mxu0
        %v795 = vadd.f32 0.0, %v794
        %v796 = vpop.f32.mrb[0].mxu0
        %797 = vmatprep.mubr.f32.mxu0 0.0
        %798 = vmatmul.mubr.f32.gmra.mrb[0].mxu0 %v612
        %v799 = vpop.f32.mrb[0].mxu0
        %v800 = vadd.f32 0.0, %v799
        %v801 = vpop.f32.mrb[0].mxu0
        %802 = vmatprep.mubr.f32.mxu0 0.0
        %803 = vmatmul.mubr.f32.gmra.mrb[0].mxu0 %v615
        %v804 = vpop.f32.mrb[0].mxu0
        %v805 = vadd.f32 0.0, %v804
        %v806 = vpop.f32.mrb[0].mxu0
        %807 = vmatprep.mubr.f32.mxu0 0.0
        %808 = vmatmul.mubr.f32.gmra.mrb[0].mxu0 %v618
        %v809 = vpop.f32.mrb[0].mxu0
        %v810 = vadd.f32 0.0, %v809
        %v811 = vpop.f32.mrb[0].mxu0
        %812 = vmatprep.mubr.f32.mxu0 0.0
        %813 = vmatmul.mubr.f32.gmra.mrb[0].mxu0 %v621
        %v814 = vpop.f32.mrb[0].mxu0
        %v815 = vadd.f32 0.0, %v814
        %v816 = vpop.f32.mrb[0].mxu0
        %817 = vmatprep.mubr.f32.mxu0 0.0
        %818 = vmatmul.mubr.f32.gmra.mrb[0].mxu0 %v624
        %v819 = vpop.f32.mrb[0].mxu0
        %v820 = vadd.f32 0.0, %v819
        %v821 = vpop.f32.mrb[0].mxu0
        %822 = vmatprep.mubr.f32.mxu0 0.0
        %823 = vmatmul.mubr.f32.gmra.mrb[0].mxu0 %v627
        %v824 = vpop.f32.mrb[0].mxu0
        %v825 = vadd.f32 0.0, %v824
        %v826 = vpop.f32.mrb[0].mxu0
        %827 = vmatprep.mubr.f32.mxu0 0.0
        %828 = vmatmul.mubr.f32.gmra.mrb[0].mxu0 %v630
        %v829 = vpop.f32.mrb[0].mxu0
        %v830 = vadd.f32 0.0, %v829
        %v831 = vpop.f32.mrb[0].mxu0
        %832 = vmatprep.mubr.f32.mxu0 0.0
        %833 = vmatmul.mubr.f32.gmra.mrb[0].mxu0 %v633
        %v834 = vpop.f32.mrb[0].mxu0
        %v835 = vadd.f32 0.0, %v834
        %v836 = vpop.f32.mrb[0].mxu0
        %837 = vmatprep.mubr.f32.mxu0 0.0
        %838 = vmatmul.mubr.f32.gmra.mrb[0].mxu0 %v636
        %v839 = vpop.f32.mrb[0].mxu0
        %v840 = vadd.f32 0.0, %v839
        %v841 = vpop.f32.mrb[0].mxu0
        %842 = vmatprep.mubr.f32.mxu0 0.0
        %843 = vmatmul.mubr.f32.gmra.mrb[0].mxu0 %v639
        %v844 = vpop.f32.mrb[0].mxu0
        %v845 = vadd.f32 0.0, %v844
        %v846 = vpop.f32.mrb[0].mxu0
        %847 = vmatprep.mubr.f32.mxu0 0.0
        %848 = vmatmul.mubr.f32.gmra.mrb[0].mxu0 %v642
        %v849 = vpop.f32.mrb[0].mxu0
        %v850 = vadd.f32 0.0, %v849
        %v851 = vpop.f32.mrb[0].mxu0
        %852 = vmatprep.mubr.f32.mxu0 0.0
        %853 = vmatmul.mubr.f32.gmra.mrb[0].mxu0 %v645
        %v854 = vpop.f32.mrb[0].mxu0
        %v855 = vadd.f32 0.0, %v854
        %v856 = vpop.f32.mrb[0].mxu0
        %857 = vmatprep.mubr.f32.mxu0 0.0
        %858 = vmatmul.mubr.f32.gmra.mrb[0].mxu0 %v648
        %v859 = vpop.f32.mrb[0].mxu0
        %v860 = vadd.f32 0.0, %v859
        %v861 = vpop.f32.mrb[0].mxu0
        %862 = vmatprep.mubr.f32.mxu0 0.0
        %863 = vmatmul.mubr.f32.gmra.mrb[0].mxu0 %v651
        %v864 = vpop.f32.mrb[0].mxu0
        %v865 = vadd.f32 0.0, %v864
        %v866 = vpop.f32.mrb[0].mxu0
        %867 = vmatprep.mubr.f32.mxu0 0.0
        %868 = vmatmul.mubr.f32.gmra.mrb[0].mxu0 %v654
        %v869 = vpop.f32.mrb[0].mxu0
        %v870 = vadd.f32 0.0, %v869
        %v871 = vpop.f32.mrb[0].mxu0
        %872 = vmatprep.mubr.f32.mxu0 0.0
        %873 = vmatmul.mubr.f32.gmra.mrb[0].mxu0 %v657
        %v874 = vpop.f32.mrb[0].mxu0
        %v875 = vadd.f32 0.0, %v874
        %v876 = vpop.f32.mrb[0].mxu0
        %877 = vmatprep.mubr.f32.mxu0 0.0
        %878 = vmatmul.mubr.f32.gmra.mrb[0].mxu0 %v660
        %v879 = vpop.f32.mrb[0].mxu0
        %v880 = vadd.f32 0.0, %v879
        %v881 = vpop.f32.mrb[0].mxu0
        %882 = vmatprep.mubr.f32.mxu0 0.0
        %883 = vmatmul.mubr.f32.gmra.mrb[0].mxu0 %v663
        %v884 = vpop.f32.mrb[0].mxu0
        %v885 = vadd.f32 0.0, %v884
        %v886 = vpop.f32.mrb[0].mxu0
        %887 = vmatprep.mubr.f32.mxu0 0.0
        %888 = vmatmul.mubr.f32.gmra.mrb[0].mxu0 %v666
        %v889 = vpop.f32.mrb[0].mxu0
        %v890 = vadd.f32 0.0, %v889
        %v891 = vpop.f32.mrb[0].mxu0
        %892 = vdwg.mxu0
        %v893 = vld [vmem:[%s4] sm:$0x1]
        %v895 = vlaneseq
        %v896 = vshrl.u32 %v895, 7
        %v897 = vsub.s32 0, %v896
        %v898 = vrot.slane %v893, %v897
        %v900 = vmul.f32 %v735, %v898
        %v901 = vmul.f32 %v740, %v898
        %v902 = vmul.f32 %v745, %v898
        %v903 = vmul.f32 %v750, %v898
        %v904 = vmul.f32 %v755, %v898
        %v905 = vmul.f32 %v760, %v898
        %v906 = vmul.f32 %v765, %v898
        %v907 = vmul.f32 %v770, %v898
        %v908 = vmul.f32 %v775, %v898
        %v909 = vmul.f32 %v780, %v898
        %v910 = vmul.f32 %v785, %v898
        %v911 = vmul.f32 %v790, %v898
        %v912 = vmul.f32 %v795, %v898
        %v913 = vmul.f32 %v800, %v898
        %v914 = vmul.f32 %v805, %v898
        %v915 = vmul.f32 %v810, %v898
        %v916 = vmul.f32 %v815, %v898
        %v917 = vmul.f32 %v820, %v898
        %v918 = vmul.f32 %v825, %v898
        %v919 = vmul.f32 %v830, %v898
        %v920 = vmul.f32 %v835, %v898
        %v921 = vmul.f32 %v840, %v898
        %v922 = vmul.f32 %v845, %v898
        %v923 = vmul.f32 %v850, %v898
        %v924 = vmul.f32 %v855, %v898
        %v925 = vmul.f32 %v860, %v898
        %v926 = vmul.f32 %v865, %v898
        %v927 = vmul.f32 %v870, %v898
        %v928 = vmul.f32 %v875, %v898
        %v929 = vmul.f32 %v880, %v898
        %v930 = vmul.f32 %v885, %v898
        %v931 = vmul.f32 %v890, %v898
        %v932 = vld [vmem:[%s5] sm:$0x1]
        %v934 = vlaneseq
        %v935 = vshrl.u32 %v934, 7
        %v936 = vsub.s32 0, %v935
        %v937 = vrot.slane %v932, %v936
        %v939 = vadd.f32 %v900, %v937
        %v940 = vadd.f32 %v901, %v937
        %v941 = vadd.f32 %v902, %v937
        %v942 = vadd.f32 %v903, %v937
        %v943 = vadd.f32 %v904, %v937
        %v944 = vadd.f32 %v905, %v937
        %v945 = vadd.f32 %v906, %v937
        %v946 = vadd.f32 %v907, %v937
        %v947 = vadd.f32 %v908, %v937
        %v948 = vadd.f32 %v909, %v937
        %v949 = vadd.f32 %v910, %v937
        %v950 = vadd.f32 %v911, %v937
        %v951 = vadd.f32 %v912, %v937
        %v952 = vadd.f32 %v913, %v937
        %v953 = vadd.f32 %v914, %v937
        %v954 = vadd.f32 %v915, %v937
        %v955 = vadd.f32 %v916, %v937
        %v956 = vadd.f32 %v917, %v937
        %v957 = vadd.f32 %v918, %v937
        %v958 = vadd.f32 %v919, %v937
        %v959 = vadd.f32 %v920, %v937
        %v960 = vadd.f32 %v921, %v937
        %v961 = vadd.f32 %v922, %v937
        %v962 = vadd.f32 %v923, %v937
        %v963 = vadd.f32 %v924, %v937
        %v964 = vadd.f32 %v925, %v937
        %v965 = vadd.f32 %v926, %v937
        %v966 = vadd.f32 %v927, %v937
        %v967 = vadd.f32 %v928, %v937
        %v968 = vadd.f32 %v929, %v937
        %v969 = vadd.f32 %v930, %v937
        %v970 = vadd.f32 %v931, %v937
        %v971 = vadd.f32 %v939, 3.0
        %v972 = vadd.f32 %v940, 3.0
        %v973 = vadd.f32 %v941, 3.0
        %v974 = vadd.f32 %v942, 3.0
        %v975 = vadd.f32 %v943, 3.0
        %v976 = vadd.f32 %v944, 3.0
        %v977 = vadd.f32 %v945, 3.0
        %v978 = vadd.f32 %v946, 3.0
        %v979 = vadd.f32 %v947, 3.0
        %v980 = vadd.f32 %v948, 3.0
        %v981 = vadd.f32 %v949, 3.0
        %v982 = vadd.f32 %v950, 3.0
        %v983 = vadd.f32 %v951, 3.0
        %v984 = vadd.f32 %v952, 3.0
        %v985 = vadd.f32 %v953, 3.0
        %v986 = vadd.f32 %v954, 3.0
        %v987 = vadd.f32 %v955, 3.0
        %v988 = vadd.f32 %v956, 3.0
        %v989 = vadd.f32 %v957, 3.0
        %v990 = vadd.f32 %v958, 3.0
        %v991 = vadd.f32 %v959, 3.0
        %v992 = vadd.f32 %v960, 3.0
        %v993 = vadd.f32 %v961, 3.0
        %v994 = vadd.f32 %v962, 3.0
        %v995 = vadd.f32 %v963, 3.0
        %v996 = vadd.f32 %v964, 3.0
        %v997 = vadd.f32 %v965, 3.0
        %v998 = vadd.f32 %v966, 3.0
        %v999 = vadd.f32 %v967, 3.0
        %v1000 = vadd.f32 %v968, 3.0
        %v1001 = vadd.f32 %v969, 3.0
        %v1002 = vadd.f32 %v970, 3.0
        %v1003 = vmax.f32 %v971, 0.0
        %v1004 = vmax.f32 %v972, 0.0
        %v1005 = vmax.f32 %v973, 0.0
        %v1006 = vmax.f32 %v974, 0.0
        %v1007 = vmax.f32 %v975, 0.0
        %v1008 = vmax.f32 %v976, 0.0
        %v1009 = vmax.f32 %v977, 0.0
        %v1010 = vmax.f32 %v978, 0.0
        %v1011 = vmax.f32 %v979, 0.0
        %v1012 = vmax.f32 %v980, 0.0
        %v1013 = vmax.f32 %v981, 0.0
        %v1014 = vmax.f32 %v982, 0.0
        %v1015 = vmax.f32 %v983, 0.0
        %v1016 = vmax.f32 %v984, 0.0
        %v1017 = vmax.f32 %v985, 0.0
        %v1018 = vmax.f32 %v986, 0.0
        %v1019 = vmax.f32 %v987, 0.0
        %v1020 = vmax.f32 %v988, 0.0
        %v1021 = vmax.f32 %v989, 0.0
        %v1022 = vmax.f32 %v990, 0.0
        %v1023 = vmax.f32 %v991, 0.0
        %v1024 = vmax.f32 %v992, 0.0
        %v1025 = vmax.f32 %v993, 0.0
        %v1026 = vmax.f32 %v994, 0.0
        %v1027 = vmax.f32 %v995, 0.0
        %v1028 = vmax.f32 %v996, 0.0
        %v1029 = vmax.f32 %v997, 0.0
        %v1030 = vmax.f32 %v998, 0.0
        %v1031 = vmax.f32 %v999, 0.0
        %v1032 = vmax.f32 %v1000, 0.0
        %v1033 = vmax.f32 %v1001, 0.0
        %v1034 = vmax.f32 %v1002, 0.0
        %v1035 = vmin.f32 %v1003, 6.0
        %v1036 = vmin.f32 %v1004, 6.0
        %v1037 = vmin.f32 %v1005, 6.0
        %v1038 = vmin.f32 %v1006, 6.0
        %v1039 = vmin.f32 %v1007, 6.0
        %v1040 = vmin.f32 %v1008, 6.0
        %v1041 = vmin.f32 %v1009, 6.0
        %v1042 = vmin.f32 %v1010, 6.0
        %v1043 = vmin.f32 %v1011, 6.0
        %v1044 = vmin.f32 %v1012, 6.0
        %v1045 = vmin.f32 %v1013, 6.0
        %v1046 = vmin.f32 %v1014, 6.0
        %v1047 = vmin.f32 %v1015, 6.0
        %v1048 = vmin.f32 %v1016, 6.0
        %v1049 = vmin.f32 %v1017, 6.0
        %v1050 = vmin.f32 %v1018, 6.0
        %v1051 = vmin.f32 %v1019, 6.0
        %v1052 = vmin.f32 %v1020, 6.0
        %v1053 = vmin.f32 %v1021, 6.0
        %v1054 = vmin.f32 %v1022, 6.0
        %v1055 = vmin.f32 %v1023, 6.0
        %v1056 = vmin.f32 %v1024, 6.0
        %v1057 = vmin.f32 %v1025, 6.0
        %v1058 = vmin.f32 %v1026, 6.0
        %v1059 = vmin.f32 %v1027, 6.0
        %v1060 = vmin.f32 %v1028, 6.0
        %v1061 = vmin.f32 %v1029, 6.0
        %v1062 = vmin.f32 %v1030, 6.0
        %v1063 = vmin.f32 %v1031, 6.0
        %v1064 = vmin.f32 %v1032, 6.0
        %v1065 = vmin.f32 %v1033, 6.0
        %v1066 = vmin.f32 %v1034, 6.0
        %v1067 = vmul.f32 %v939, %v1035
        %v1068 = vmul.f32 %v940, %v1036
        %v1069 = vmul.f32 %v941, %v1037
        %v1070 = vmul.f32 %v942, %v1038
        %v1071 = vmul.f32 %v943, %v1039
        %v1072 = vmul.f32 %v944, %v1040
        %v1073 = vmul.f32 %v945, %v1041
        %v1074 = vmul.f32 %v946, %v1042
        %v1075 = vmul.f32 %v947, %v1043
        %v1076 = vmul.f32 %v948, %v1044
        %v1077 = vmul.f32 %v949, %v1045
        %v1078 = vmul.f32 %v950, %v1046
        %v1079 = vmul.f32 %v951, %v1047
        %v1080 = vmul.f32 %v952, %v1048
        %v1081 = vmul.f32 %v953, %v1049
        %v1082 = vmul.f32 %v954, %v1050
        %v1083 = vmul.f32 %v955, %v1051
        %v1084 = vmul.f32 %v956, %v1052
        %v1085 = vmul.f32 %v957, %v1053
        %v1086 = vmul.f32 %v958, %v1054
        %v1087 = vmul.f32 %v959, %v1055
        %v1088 = vmul.f32 %v960, %v1056
        %v1089 = vmul.f32 %v961, %v1057
        %v1090 = vmul.f32 %v962, %v1058
        %v1091 = vmul.f32 %v963, %v1059
        %v1092 = vmul.f32 %v964, %v1060
        %v1093 = vmul.f32 %v965, %v1061
        %v1094 = vmul.f32 %v966, %v1062
        %v1095 = vmul.f32 %v967, %v1063
        %v1096 = vmul.f32 %v968, %v1064
        %v1097 = vmul.f32 %v969, %v1065
        %v1098 = vmul.f32 %v970, %v1066
        %v1099 = vmul.f32 %v1067, 0.16666667
        %v1100 = vmul.f32 %v1068, 0.16666667
        %v1101 = vmul.f32 %v1069, 0.16666667
        %v1102 = vmul.f32 %v1070, 0.16666667
        %v1103 = vmul.f32 %v1071, 0.16666667
        %v1104 = vmul.f32 %v1072, 0.16666667
        %v1105 = vmul.f32 %v1073, 0.16666667
        %v1106 = vmul.f32 %v1074, 0.16666667
        %v1107 = vmul.f32 %v1075, 0.16666667
        %v1108 = vmul.f32 %v1076, 0.16666667
        %v1109 = vmul.f32 %v1077, 0.16666667
        %v1110 = vmul.f32 %v1078, 0.16666667
        %v1111 = vmul.f32 %v1079, 0.16666667
        %v1112 = vmul.f32 %v1080, 0.16666667
        %v1113 = vmul.f32 %v1081, 0.16666667
        %v1114 = vmul.f32 %v1082, 0.16666667
        %v1115 = vmul.f32 %v1083, 0.16666667
        %v1116 = vmul.f32 %v1084, 0.16666667
        %v1117 = vmul.f32 %v1085, 0.16666667
        %v1118 = vmul.f32 %v1086, 0.16666667
        %v1119 = vmul.f32 %v1087, 0.16666667
        %v1120 = vmul.f32 %v1088, 0.16666667
        %v1121 = vmul.f32 %v1089, 0.16666667
        %v1122 = vmul.f32 %v1090, 0.16666667
        %v1123 = vmul.f32 %v1091, 0.16666667
        %v1124 = vmul.f32 %v1092, 0.16666667
        %v1125 = vmul.f32 %v1093, 0.16666667
        %v1126 = vmul.f32 %v1094, 0.16666667
        %v1127 = vmul.f32 %v1095, 0.16666667
        %v1128 = vmul.f32 %v1096, 0.16666667
        %v1129 = vmul.f32 %v1097, 0.16666667
        %v1130 = vmul.f32 %v1098, 0.16666667
        %s1131 = scalar_lea.vmem [#allocation2], 48
        %vm1132 = vcmask 64512
        %1133 = vst.msk [vmem:[%s1131 + $0x2] sm:$0xff] %vm1132, %v1099
        %1134 = vst.msk [vmem:[%s1131 + $0xa] sm:$0xff] %vm1132, %v1100
        %1135 = vst.msk [vmem:[%s1131 + $0x1a] sm:$0xff] %vm1132, %v1101
        %1136 = vst.msk [vmem:[%s1131 + $0x22] sm:$0xff] %vm1132, %v1102
        %1137 = vst.msk [vmem:[%s1131 + $0x32] sm:$0xff] %vm1132, %v1103
        %1138 = vst.msk [vmem:[%s1131 + $0x3a] sm:$0xff] %vm1132, %v1104
        %1139 = vst.msk [vmem:[%s1131 + $0x4a] sm:$0xff] %vm1132, %v1105
        %1140 = vst.msk [vmem:[%s1131 + $0x52] sm:$0xff] %vm1132, %v1106
        %1141 = vst.msk [vmem:[%s1131 + $0x62] sm:$0xff] %vm1132, %v1107
        %1142 = vst.msk [vmem:[%s1131 + $0x6a] sm:$0xff] %vm1132, %v1108
        %1143 = vst.msk [vmem:[%s1131 + $0x7a] sm:$0xff] %vm1132, %v1109
        %1144 = vst.msk [vmem:[%s1131 + $0x82] sm:$0xff] %vm1132, %v1110
        %1145 = vst.msk [vmem:[%s1131 + $0x92] sm:$0xff] %vm1132, %v1111
        %1146 = vst.msk [vmem:[%s1131 + $0x9a] sm:$0xff] %vm1132, %v1112
        %1147 = vst.msk [vmem:[%s1131 + $0xaa] sm:$0xff] %vm1132, %v1113
        %1148 = vst.msk [vmem:[%s1131 + $0xb2] sm:$0xff] %vm1132, %v1114
        %1149 = vst.msk [vmem:[%s1131 + $0xc2] sm:$0xff] %vm1132, %v1115
        %1150 = vst.msk [vmem:[%s1131 + $0xca] sm:$0xff] %vm1132, %v1116
        %1151 = vst.msk [vmem:[%s1131 + $0xda] sm:$0xff] %vm1132, %v1117
        %1152 = vst.msk [vmem:[%s1131 + $0xe2] sm:$0xff] %vm1132, %v1118
        %1153 = vst.msk [vmem:[%s1131 + $0xf2] sm:$0xff] %vm1132, %v1119
        %1154 = vst.msk [vmem:[%s1131 + $0xfa] sm:$0xff] %vm1132, %v1120
        %1155 = vst.msk [vmem:[%s1131 + $0x10a] sm:$0xff] %vm1132, %v1121
        %1156 = vst.msk [vmem:[%s1131 + $0x112] sm:$0xff] %vm1132, %v1122
        %1157 = vst.msk [vmem:[%s1131 + $0x122] sm:$0xff] %vm1132, %v1123
        %1158 = vst.msk [vmem:[%s1131 + $0x12a] sm:$0xff] %vm1132, %v1124
        %1159 = vst.msk [vmem:[%s1131 + $0x13a] sm:$0xff] %vm1132, %v1125
        %1160 = vst.msk [vmem:[%s1131 + $0x142] sm:$0xff] %vm1132, %v1126
        %1161 = vst.msk [vmem:[%s1131 + $0x152] sm:$0xff] %vm1132, %v1127
        %1162 = vst.msk [vmem:[%s1131 + $0x15a] sm:$0xff] %vm1132, %v1128
        %1163 = vst.msk [vmem:[%s1131 + $0x16a] sm:$0xff] %vm1132, %v1129
        %1164 = vst.msk [vmem:[%s1131 + $0x172] sm:$0xff] %vm1132, %v1130
        %s1165 = ssub.s32 %s493, 2
        %v1166 = vstv %s1165
        %v1167 = vadd.s32 %v1166, 1
        %vm1168 = vcmp.ge.s32.totalorder %v1166, 0
        %vm1169 = vcmp.ge.s32.totalorder %v1167, 0
        %v1170 = vld [vmem:[%s418] sm:$0xff]
        %v1171 = vld [vmem:[%s418 + $0x8] sm:$0xff]
        %v1172 = vld [vmem:[%s418 + $0x10] sm:$0xff]
        %v1173 = vld [vmem:[%s418 + $0x18] sm:$0xff]
        %v1174 = vld [vmem:[%s3] sm:$0xff]
        %v1175 = vld [vmem:[%s3 + $0x8] sm:$0xff]
        %v1176 = vld [vmem:[%s3 + $0x10] sm:$0xff]
        %v1177 = vld [vmem:[%s3 + $0x18] sm:$0xff]
        %v1179 = vsel %vm571, %v1170, 0
        %v1182 = vsel %vm571, %v1171, 0
        %v1185 = vsel %vm571, %v1172, 0
        %v1188 = vsel %vm571, %v1173, 0
        %1190 = vmatprep.subr.mxu0 0.0
        %1191 = vmatpush1.msra.mxu0 %v1174
        %1192 = vmatprep.subr.mxu0 0.0
        %1193 = vmatpush1.msra.mxu0 %v1175
        %1194 = vmatprep.subr.mxu0 0.0
        %1195 = vmatpush1.msra.mxu0 %v1176
        %1196 = vmatprep.subr.mxu0 0.0
        %1197 = vmatpush1.msra.mxu0 %v1177
        %1198 = vmatprep.subr.mxu0 0.0
        %1199 = vmatpush1.msra.mxu0 0.0
        %1200 = vmatprep.subr.mxu0 0.0
        %1201 = vmatpush1.msra.mxu0 0.0
        %1202 = vmatprep.subr.mxu0 0.0
        %1203 = vmatpush1.msra.mxu0 0.0
        %1204 = vmatprep.subr.mxu0 0.0
        %1205 = vmatpush1.msra.mxu0 0.0
        %1206 = vmatprep.subr.mxu0 0.0
        %1207 = vmatpush1.msra.mxu0 0.0
        %1208 = vmatprep.subr.mxu0 0.0
        %1209 = vmatpush1.msra.mxu0 0.0
        %1210 = vmatprep.subr.mxu0 0.0
        %1211 = vmatpush1.msra.mxu0 0.0
        %1212 = vmatprep.subr.mxu0 0.0
        %1213 = vmatpush1.msra.mxu0 0.0
        %1214 = vmatprep.subr.mxu0 0.0
        %1215 = vmatpush1.msra.mxu0 0.0
        %1216 = vmatprep.subr.mxu0 0.0
        %1217 = vmatpush1.msra.mxu0 0.0
        %1218 = vmatprep.subr.mxu0 0.0
        %1219 = vmatpush1.msra.mxu0 0.0
        %1220 = vmatprep.subr.mxu0 0.0
        %1221 = vmatpush1.msra.mxu0 0.0
        %1222 = vmatprep.subr.mxu0 0.0
        %1223 = vmatpush1.msra.mxu0 0.0
        %1224 = vmatprep.subr.mxu0 0.0
        %1225 = vmatpush1.msra.mxu0 0.0
        %1226 = vmatprep.subr.mxu0 0.0
        %1227 = vmatpush1.msra.mxu0 0.0
        %1228 = vmatprep.subr.mxu0 0.0
        %1229 = vmatpush1.msra.mxu0 0.0
        %1230 = vmatprep.subr.mxu0 0.0
        %1231 = vmatpush1.msra.mxu0 0.0
        %1232 = vmatprep.subr.mxu0 0.0
        %1233 = vmatpush1.msra.mxu0 0.0
        %1234 = vmatprep.subr.mxu0 0.0
        %1235 = vmatpush1.msra.mxu0 0.0
        %1236 = vmatprep.subr.mxu0 0.0
        %1237 = vmatpush1.msra.mxu0 0.0
        %1238 = vmatprep.subr.mxu0 0.0
        %1239 = vmatpush1.msra.mxu0 0.0
        %1240 = vmatprep.subr.mxu0 0.0
        %1241 = vmatpush1.msra.mxu0 0.0
        %1242 = vmatprep.subr.mxu0 0.0
        %1243 = vmatpush1.msra.mxu0 0.0
        %1244 = vmatprep.subr.mxu0 0.0
        %1245 = vmatpush1.msra.mxu0 0.0
        %1246 = vmatprep.subr.mxu0 0.0
        %1247 = vmatpush1.msra.mxu0 0.0
        %1248 = vmatprep.subr.mxu0 0.0
        %1249 = vmatpush1.msra.mxu0 0.0
        %1250 = vmatprep.subr.mxu0 0.0
        %1251 = vmatpush1.msra.mxu0 0.0
        %1252 = vmatprep.subr.mxu0 0.0
        %1253 = vmatpush1.msra.mxu0 0.0
        %1254 = vmatprep.mubr.f32.mxu0 0.0
        %1255 = vmatmul.mubr.f32.gmra.mrb[0].mxu0 %v1179
        %v1256 = vpop.f32.mrb[0].mxu0
        %v1257 = vadd.f32 0.0, %v1256
        %v1258 = vpop.f32.mrb[0].mxu0
        %1259 = vmatprep.mubr.f32.mxu0 0.0
        %1260 = vmatmul.mubr.f32.gmra.mrb[0].mxu0 %v1182
        %v1261 = vpop.f32.mrb[0].mxu0
        %v1262 = vadd.f32 0.0, %v1261
        %v1263 = vpop.f32.mrb[0].mxu0
        %1264 = vmatprep.mubr.f32.mxu0 0.0
        %1265 = vmatmul.mubr.f32.gmra.mrb[0].mxu0 %v1185
        %v1266 = vpop.f32.mrb[0].mxu0
        %v1267 = vadd.f32 0.0, %v1266
        %v1268 = vpop.f32.mrb[0].mxu0
        %1269 = vmatprep.mubr.f32.mxu0 0.0
        %1270 = vmatmul.mubr.f32.gmra.mrb[0].mxu0 %v1188
        %v1271 = vpop.f32.mrb[0].mxu0
        %v1272 = vadd.f32 0.0, %v1271
        %v1273 = vpop.f32.mrb[0].mxu0
        %1274 = vdwg.mxu0
        %v1275 = vld [vmem:[%s4] sm:$0x1]
        %v1277 = vlaneseq
        %v1278 = vshrl.u32 %v1277, 7
        %v1279 = vsub.s32 0, %v1278
        %v1280 = vrot.slane %v1275, %v1279
        %v1282 = vmul.f32 %v1257, %v1280
        %v1283 = vmul.f32 %v1262, %v1280
        %v1284 = vmul.f32 %v1267, %v1280
        %v1285 = vmul.f32 %v1272, %v1280
        %v1286 = vld [vmem:[%s5] sm:$0x1]
        %v1288 = vlaneseq
        %v1289 = vshrl.u32 %v1288, 7
        %v1290 = vsub.s32 0, %v1289
        %v1291 = vrot.slane %v1286, %v1290
        %v1293 = vadd.f32 %v1282, %v1291
        %v1294 = vadd.f32 %v1283, %v1291
        %v1295 = vadd.f32 %v1284, %v1291
        %v1296 = vadd.f32 %v1285, %v1291
        %v1297 = vadd.f32 %v1293, 3.0
        %v1298 = vadd.f32 %v1294, 3.0
        %v1299 = vadd.f32 %v1295, 3.0
        %v1300 = vadd.f32 %v1296, 3.0
        %v1301 = vmax.f32 %v1297, 0.0
        %v1302 = vmax.f32 %v1298, 0.0
        %v1303 = vmax.f32 %v1299, 0.0
        %v1304 = vmax.f32 %v1300, 0.0
        %v1305 = vmin.f32 %v1301, 6.0
        %v1306 = vmin.f32 %v1302, 6.0
        %v1307 = vmin.f32 %v1303, 6.0
        %v1308 = vmin.f32 %v1304, 6.0
        %v1309 = vmul.f32 %v1293, %v1305
        %v1310 = vmul.f32 %v1294, %v1306
        %v1311 = vmul.f32 %v1295, %v1307
        %v1312 = vmul.f32 %v1296, %v1308
        %v1313 = vmul.f32 %v1309, 0.16666667
        %v1314 = vmul.f32 %v1310, 0.16666667
        %v1315 = vmul.f32 %v1311, 0.16666667
        %v1316 = vmul.f32 %v1312, 0.16666667
        %v1317 = vsel %vm1168, 1, 0
        %v1318 = vsel %vm1169, 1, 0
        %vm1319 = vcmp.eq.s32.totalorder %v1317, 1
        %vm1320 = vcmp.eq.s32.totalorder %v1318, 1
        %v1321 = vsel %vm1319, %v1313, 0.0
        %v1322 = vsel %vm1319, %v1314, 0.0
        %v1323 = vsel %vm1320, %v1315, 0.0
        %v1324 = vsel %vm1320, %v1316, 0.0
        %1325 = vst.msk [vmem:[#allocation2 + $0x2] sm:$0xff] %vm1132, %v1321
        %1326 = vst.msk [vmem:[#allocation2 + $0xa] sm:$0xff] %vm1132, %v1322
        %1327 = vst.msk [vmem:[#allocation2 + $0x1a] sm:$0xff] %vm1132, %v1323
        %1328 = vst.msk [vmem:[#allocation2 + $0x22] sm:$0xff] %vm1132, %v1324
        %s1329 = sadd.s32 %s493, 16
        %v1330 = vstv %s1329
        %v1331 = vadd.s32 %v1330, 1
        %vm1332 = vcmp.lt.s32.totalorder %v1330, 16
        %vm1333 = vcmp.lt.s32.totalorder %v1331, 16
        %v1334 = vld [vmem:[%s436] sm:$0xff]
        %v1335 = vld [vmem:[%s436 + $0x8] sm:$0xff]
        %v1336 = vld [vmem:[%s436 + $0x10] sm:$0xff]
        %v1337 = vld [vmem:[%s436 + $0x18] sm:$0xff]
        %v1338 = vld [vmem:[%s3] sm:$0xff]
        %v1339 = vld [vmem:[%s3 + $0x8] sm:$0xff]
        %v1340 = vld [vmem:[%s3 + $0x10] sm:$0xff]
        %v1341 = vld [vmem:[%s3 + $0x18] sm:$0xff]
        %v1343 = vsel %vm571, %v1334, 0
        %v1346 = vsel %vm571, %v1335, 0
        %v1349 = vsel %vm571, %v1336, 0
        %v1352 = vsel %vm571, %v1337, 0
        %1354 = vmatprep.subr.mxu0 0.0
        %1355 = vmatpush1.msra.mxu0 %v1338
        %1356 = vmatprep.subr.mxu0 0.0
        %1357 = vmatpush1.msra.mxu0 %v1339
        %1358 = vmatprep.subr.mxu0 0.0
        %1359 = vmatpush1.msra.mxu0 %v1340
        %1360 = vmatprep.subr.mxu0 0.0
        %1361 = vmatpush1.msra.mxu0 %v1341
        %1362 = vmatprep.subr.mxu0 0.0
        %1363 = vmatpush1.msra.mxu0 0.0
        %1364 = vmatprep.subr.mxu0 0.0
        %1365 = vmatpush1.msra.mxu0 0.0
        %1366 = vmatprep.subr.mxu0 0.0
        %1367 = vmatpush1.msra.mxu0 0.0
        %1368 = vmatprep.subr.mxu0 0.0
        %1369 = vmatpush1.msra.mxu0 0.0
        %1370 = vmatprep.subr.mxu0 0.0
        %1371 = vmatpush1.msra.mxu0 0.0
        %1372 = vmatprep.subr.mxu0 0.0
        %1373 = vmatpush1.msra.mxu0 0.0
        %1374 = vmatprep.subr.mxu0 0.0
        %1375 = vmatpush1.msra.mxu0 0.0
        %1376 = vmatprep.subr.mxu0 0.0
        %1377 = vmatpush1.msra.mxu0 0.0
        %1378 = vmatprep.subr.mxu0 0.0
        %1379 = vmatpush1.msra.mxu0 0.0
        %1380 = vmatprep.subr.mxu0 0.0
        %1381 = vmatpush1.msra.mxu0 0.0
        %1382 = vmatprep.subr.mxu0 0.0
        %1383 = vmatpush1.msra.mxu0 0.0
        %1384 = vmatprep.subr.mxu0 0.0
        %1385 = vmatpush1.msra.mxu0 0.0
        %1386 = vmatprep.subr.mxu0 0.0
        %1387 = vmatpush1.msra.mxu0 0.0
        %1388 = vmatprep.subr.mxu0 0.0
        %1389 = vmatpush1.msra.mxu0 0.0
        %1390 = vmatprep.subr.mxu0 0.0
        %1391 = vmatpush1.msra.mxu0 0.0
        %1392 = vmatprep.subr.mxu0 0.0
        %1393 = vmatpush1.msra.mxu0 0.0
        %1394 = vmatprep.subr.mxu0 0.0
        %1395 = vmatpush1.msra.mxu0 0.0
        %1396 = vmatprep.subr.mxu0 0.0
        %1397 = vmatpush1.msra.mxu0 0.0
        %1398 = vmatprep.subr.mxu0 0.0
        %1399 = vmatpush1.msra.mxu0 0.0
        %1400 = vmatprep.subr.mxu0 0.0
        %1401 = vmatpush1.msra.mxu0 0.0
        %1402 = vmatprep.subr.mxu0 0.0
        %1403 = vmatpush1.msra.mxu0 0.0
        %1404 = vmatprep.subr.mxu0 0.0
        %1405 = vmatpush1.msra.mxu0 0.0
        %1406 = vmatprep.subr.mxu0 0.0
        %1407 = vmatpush1.msra.mxu0 0.0
        %1408 = vmatprep.subr.mxu0 0.0
        %1409 = vmatpush1.msra.mxu0 0.0
        %1410 = vmatprep.subr.mxu0 0.0
        %1411 = vmatpush1.msra.mxu0 0.0
        %1412 = vmatprep.subr.mxu0 0.0
        %1413 = vmatpush1.msra.mxu0 0.0
        %1414 = vmatprep.subr.mxu0 0.0
        %1415 = vmatpush1.msra.mxu0 0.0
        %1416 = vmatprep.subr.mxu0 0.0
        %1417 = vmatpush1.msra.mxu0 0.0
        %1418 = vmatprep.mubr.f32.mxu0 0.0
        %1419 = vmatmul.mubr.f32.gmra.mrb[0].mxu0 %v1343
        %v1420 = vpop.f32.mrb[0].mxu0
        %v1421 = vadd.f32 0.0, %v1420
        %v1422 = vpop.f32.mrb[0].mxu0
        %1423 = vmatprep.mubr.f32.mxu0 0.0
        %1424 = vmatmul.mubr.f32.gmra.mrb[0].mxu0 %v1346
        %v1425 = vpop.f32.mrb[0].mxu0
        %v1426 = vadd.f32 0.0, %v1425
        %v1427 = vpop.f32.mrb[0].mxu0
        %1428 = vmatprep.mubr.f32.mxu0 0.0
        %1429 = vmatmul.mubr.f32.gmra.mrb[0].mxu0 %v1349
        %v1430 = vpop.f32.mrb[0].mxu0
        %v1431 = vadd.f32 0.0, %v1430
        %v1432 = vpop.f32.mrb[0].mxu0
        %1433 = vmatprep.mubr.f32.mxu0 0.0
        %1434 = vmatmul.mubr.f32.gmra.mrb[0].mxu0 %v1352
        %v1435 = vpop.f32.mrb[0].mxu0
        %v1436 = vadd.f32 0.0, %v1435
        %v1437 = vpop.f32.mrb[0].mxu0
        %1438 = vdwg.mxu0
        %v1439 = vld [vmem:[%s4] sm:$0x1]
        %v1441 = vlaneseq
        %v1442 = vshrl.u32 %v1441, 7
        %v1443 = vsub.s32 0, %v1442
        %v1444 = vrot.slane %v1439, %v1443
        %v1446 = vmul.f32 %v1421, %v1444
        %v1447 = vmul.f32 %v1426, %v1444
        %v1448 = vmul.f32 %v1431, %v1444
        %v1449 = vmul.f32 %v1436, %v1444
        %v1450 = vld [vmem:[%s5] sm:$0x1]
        %v1452 = vlaneseq
        %v1453 = vshrl.u32 %v1452, 7
        %v1454 = vsub.s32 0, %v1453
        %v1455 = vrot.slane %v1450, %v1454
        %v1457 = vadd.f32 %v1446, %v1455
        %v1458 = vadd.f32 %v1447, %v1455
        %v1459 = vadd.f32 %v1448, %v1455
        %v1460 = vadd.f32 %v1449, %v1455
        %v1461 = vadd.f32 %v1457, 3.0
        %v1462 = vadd.f32 %v1458, 3.0
        %v1463 = vadd.f32 %v1459, 3.0
        %v1464 = vadd.f32 %v1460, 3.0
        %v1465 = vmax.f32 %v1461, 0.0
        %v1466 = vmax.f32 %v1462, 0.0
        %v1467 = vmax.f32 %v1463, 0.0
        %v1468 = vmax.f32 %v1464, 0.0
        %v1469 = vmin.f32 %v1465, 6.0
        %v1470 = vmin.f32 %v1466, 6.0
        %v1471 = vmin.f32 %v1467, 6.0
        %v1472 = vmin.f32 %v1468, 6.0
        %v1473 = vmul.f32 %v1457, %v1469
        %v1474 = vmul.f32 %v1458, %v1470
        %v1475 = vmul.f32 %v1459, %v1471
        %v1476 = vmul.f32 %v1460, %v1472
        %v1477 = vmul.f32 %v1473, 0.16666667
        %v1478 = vmul.f32 %v1474, 0.16666667
        %v1479 = vmul.f32 %v1475, 0.16666667
        %v1480 = vmul.f32 %v1476, 0.16666667
        %v1481 = vsel %vm1332, 1, 0
        %v1482 = vsel %vm1333, 1, 0
        %vm1483 = vcmp.eq.s32.totalorder %v1481, 1
        %vm1484 = vcmp.eq.s32.totalorder %v1482, 1
        %v1485 = vsel %vm1483, %v1477, 0.0
        %v1486 = vsel %vm1483, %v1478, 0.0
        %v1487 = vsel %vm1484, %v1479, 0.0
        %v1488 = vsel %vm1484, %v1480, 0.0
        %s1489 = scalar_lea.vmem [#allocation2], 432
        %1490 = vst.msk [vmem:[%s1489 + $0x2] sm:$0xff] %vm1132, %v1485
        %1491 = vst.msk [vmem:[%s1489 + $0xa] sm:$0xff] %vm1132, %v1486
        %1492 = vst.msk [vmem:[%s1489 + $0x1a] sm:$0xff] %vm1132, %v1487
        %1493 = vst.msk [vmem:[%s1489 + $0x22] sm:$0xff] %vm1132, %v1488
        %v1494 = vld [vmem:[%s6] sm:$0x1]
        %v1495 = vld [vmem:[%s6 + $0x1] sm:$0x1]
        %v1496 = vld [vmem:[%s6 + $0x2] sm:$0x1]
        %v1497 = vld [vmem:[%s6 + $0x3] sm:$0x1]
        %v1498 = vld [vmem:[%s6 + $0x4] sm:$0x1]
        %v1499 = vld [vmem:[%s6 + $0x5] sm:$0x1]
        %v1500 = vld [vmem:[%s6 + $0x6] sm:$0x1]
        %v1501 = vld [vmem:[%s6 + $0x7] sm:$0x1]
        %v1502 = vld [vmem:[%s6 + $0x8] sm:$0x1]
        %v1503 = vld [vmem:[%s6 + $0x9] sm:$0x1]
        %v1504 = vld [vmem:[%s6 + $0xa] sm:$0x1]
        %v1505 = vld [vmem:[%s6 + $0xb] sm:$0x1]
        %v1506 = vld [vmem:[%s6 + $0xc] sm:$0x1]
        %v1507 = vld [vmem:[%s6 + $0xd] sm:$0x1]
        %v1508 = vld [vmem:[%s6 + $0xe] sm:$0x1]
        %v1509 = vld [vmem:[%s6 + $0xf] sm:$0x1]
        %v1510 = vld [vmem:[%s6 + $0x10] sm:$0x1]
        %v1511 = vld [vmem:[%s6 + $0x11] sm:$0x1]
        %v1512 = vld [vmem:[%s6 + $0x12] sm:$0x1]
        %v1513 = vld [vmem:[%s6 + $0x13] sm:$0x1]
        %v1514 = vld [vmem:[%s6 + $0x14] sm:$0x1]
        %v1515 = vld [vmem:[%s6 + $0x15] sm:$0x1]
        %v1516 = vld [vmem:[%s6 + $0x16] sm:$0x1]
        %v1517 = vld [vmem:[%s6 + $0x17] sm:$0x1]
        %v1518 = vld [vmem:[%s6 + $0x18] sm:$0x1]
        %v1519 = vld [vmem:[#allocation2] sm:$0xff]
        %v1520 = vld [vmem:[#allocation2 + $0x8] sm:$0xff]
        %v1521 = vld [vmem:[#allocation2 + $0x18] sm:$0xff]
        %v1522 = vld [vmem:[#allocation2 + $0x20] sm:$0xff]
        %v1523 = vld [vmem:[#allocation2 + $0x30] sm:$0xff]
        %v1524 = vld [vmem:[#allocation2 + $0x38] sm:$0xff]
        %v1525 = vld [vmem:[#allocation2 + $0x48] sm:$0xff]
        %v1526 = vld [vmem:[#allocation2 + $0x50] sm:$0xff]
        %v1527 = vld [vmem:[#allocation2 + $0x60] sm:$0xff]
        %v1528 = vld [vmem:[#allocation2 + $0x68] sm:$0xff]
        %v1529 = vld [vmem:[#allocation2 + $0x78] sm:$0xff]
        %v1530 = vld [vmem:[#allocation2 + $0x80] sm:$0xff]
        %v1531 = vld [vmem:[#allocation2 + $0x90] sm:$0xff]
        %v1532 = vld [vmem:[#allocation2 + $0x98] sm:$0xff]
        %v1533 = vld [vmem:[#allocation2 + $0xa8] sm:$0xff]
        %v1534 = vld [vmem:[#allocation2 + $0xb0] sm:$0xff]
        %v1535 = vld [vmem:[#allocation2 + $0xc0] sm:$0xff]
        %v1536 = vld [vmem:[#allocation2 + $0xc8] sm:$0xff]
        %v1537 = vld [vmem:[#allocation2 + $0xd8] sm:$0xff]
        %v1538 = vld [vmem:[#allocation2 + $0xe0] sm:$0xff]
        %v1539 = vld [vmem:[#allocation2 + $0xf0] sm:$0xff]
        %v1540 = vld [vmem:[#allocation2 + $0xf8] sm:$0xff]
        %v1541 = vld [vmem:[#allocation2 + $0x108] sm:$0xff]
        %v1542 = vld [vmem:[#allocation2 + $0x110] sm:$0xff]
        %v1543 = vld [vmem:[#allocation2 + $0x120] sm:$0xff]
        %v1544 = vld [vmem:[#allocation2 + $0x128] sm:$0xff]
        %v1545 = vld [vmem:[#allocation2 + $0x138] sm:$0xff]
        %v1546 = vld [vmem:[#allocation2 + $0x140] sm:$0xff]
        %v1547 = vld [vmem:[#allocation2 + $0x150] sm:$0xff]
        %v1548 = vld [vmem:[#allocation2 + $0x158] sm:$0xff]
        %v1549 = vld [vmem:[#allocation2 + $0x168] sm:$0xff]
        %v1550 = vld [vmem:[#allocation2 + $0x170] sm:$0xff]
        %v1552 = vlaneseq
        %v1553 = vshrl.u32 %v1552, 7
        %v1554 = vsub.s32 0, %v1553
        %v1555 = vrot.slane %v1494, %v1554
        %v1557 = vmul.f32 %v1519, %v1555
        %v1558 = vmul.f32 %v1520, %v1555
        %v1559 = vmul.f32 %v1521, %v1555
        %v1560 = vmul.f32 %v1522, %v1555
        %v1561 = vmul.f32 %v1523, %v1555
        %v1562 = vmul.f32 %v1524, %v1555
        %v1563 = vmul.f32 %v1525, %v1555
        %v1564 = vmul.f32 %v1526, %v1555
        %v1565 = vmul.f32 %v1527, %v1555
        %v1566 = vmul.f32 %v1528, %v1555
        %v1567 = vmul.f32 %v1529, %v1555
        %v1568 = vmul.f32 %v1530, %v1555
        %v1569 = vmul.f32 %v1531, %v1555
        %v1570 = vmul.f32 %v1532, %v1555
        %v1571 = vmul.f32 %v1533, %v1555
        %v1572 = vmul.f32 %v1534, %v1555
        %v1573 = vmul.f32 %v1535, %v1555
        %v1574 = vmul.f32 %v1536, %v1555
        %v1575 = vmul.f32 %v1537, %v1555
        %v1576 = vmul.f32 %v1538, %v1555
        %v1577 = vmul.f32 %v1539, %v1555
        %v1578 = vmul.f32 %v1540, %v1555
        %v1579 = vmul.f32 %v1541, %v1555
        %v1580 = vmul.f32 %v1542, %v1555
        %v1581 = vmul.f32 %v1543, %v1555
        %v1582 = vmul.f32 %v1544, %v1555
        %v1583 = vmul.f32 %v1545, %v1555
        %v1584 = vmul.f32 %v1546, %v1555
        %v1585 = vmul.f32 %v1547, %v1555
        %v1586 = vmul.f32 %v1548, %v1555
        %v1587 = vmul.f32 %v1549, %v1555
        %v1588 = vmul.f32 %v1550, %v1555
        %v1589 = vadd.f32 %v1557, 0.0
        %v1590 = vadd.f32 %v1558, 0.0
        %v1591 = vadd.f32 %v1559, 0.0
        %v1592 = vadd.f32 %v1560, 0.0
        %v1593 = vadd.f32 %v1561, 0.0
        %v1594 = vadd.f32 %v1562, 0.0
        %v1595 = vadd.f32 %v1563, 0.0
        %v1596 = vadd.f32 %v1564, 0.0
        %v1597 = vadd.f32 %v1565, 0.0
        %v1598 = vadd.f32 %v1566, 0.0
        %v1599 = vadd.f32 %v1567, 0.0
        %v1600 = vadd.f32 %v1568, 0.0
        %v1601 = vadd.f32 %v1569, 0.0
        %v1602 = vadd.f32 %v1570, 0.0
        %v1603 = vadd.f32 %v1571, 0.0
        %v1604 = vadd.f32 %v1572, 0.0
        %v1605 = vadd.f32 %v1573, 0.0
        %v1606 = vadd.f32 %v1574, 0.0
        %v1607 = vadd.f32 %v1575, 0.0
        %v1608 = vadd.f32 %v1576, 0.0
        %v1609 = vadd.f32 %v1577, 0.0
        %v1610 = vadd.f32 %v1578, 0.0
        %v1611 = vadd.f32 %v1579, 0.0
        %v1612 = vadd.f32 %v1580, 0.0
        %v1613 = vadd.f32 %v1581, 0.0
        %v1614 = vadd.f32 %v1582, 0.0
        %v1615 = vadd.f32 %v1583, 0.0
        %v1616 = vadd.f32 %v1584, 0.0
        %v1617 = vadd.f32 %v1585, 0.0
        %v1618 = vadd.f32 %v1586, 0.0
        %v1619 = vadd.f32 %v1587, 0.0
        %v1620 = vadd.f32 %v1588, 0.0
        %v1621 = vld [vmem:[#allocation2 + $0x1] sm:$0xff]
        %v1622 = vld [vmem:[#allocation2 + $0x9] sm:$0xff]
        %v1623 = vld [vmem:[#allocation2 + $0x19] sm:$0xff]
        %v1624 = vld [vmem:[#allocation2 + $0x21] sm:$0xff]
        %v1625 = vld [vmem:[#allocation2 + $0x31] sm:$0xff]
        %v1626 = vld [vmem:[#allocation2 + $0x39] sm:$0xff]
        %v1627 = vld [vmem:[#allocation2 + $0x49] sm:$0xff]
        %v1628 = vld [vmem:[#allocation2 + $0x51] sm:$0xff]
        %v1629 = vld [vmem:[#allocation2 + $0x61] sm:$0xff]
        %v1630 = vld [vmem:[#allocation2 + $0x69] sm:$0xff]
        %v1631 = vld [vmem:[#allocation2 + $0x79] sm:$0xff]
        %v1632 = vld [vmem:[#allocation2 + $0x81] sm:$0xff]
        %v1633 = vld [vmem:[#allocation2 + $0x91] sm:$0xff]
        %v1634 = vld [vmem:[#allocation2 + $0x99] sm:$0xff]
        %v1635 = vld [vmem:[#allocation2 + $0xa9] sm:$0xff]
        %v1636 = vld [vmem:[#allocation2 + $0xb1] sm:$0xff]
        %v1637 = vld [vmem:[#allocation2 + $0xc1] sm:$0xff]
        %v1638 = vld [vmem:[#allocation2 + $0xc9] sm:$0xff]
        %v1639 = vld [vmem:[#allocation2 + $0xd9] sm:$0xff]
        %v1640 = vld [vmem:[#allocation2 + $0xe1] sm:$0xff]
        %v1641 = vld [vmem:[#allocation2 + $0xf1] sm:$0xff]
        %v1642 = vld [vmem:[#allocation2 + $0xf9] sm:$0xff]
        %v1643 = vld [vmem:[#allocation2 + $0x109] sm:$0xff]
        %v1644 = vld [vmem:[#allocation2 + $0x111] sm:$0xff]
        %v1645 = vld [vmem:[#allocation2 + $0x121] sm:$0xff]
        %v1646 = vld [vmem:[#allocation2 + $0x129] sm:$0xff]
        %v1647 = vld [vmem:[#allocation2 + $0x139] sm:$0xff]
        %v1648 = vld [vmem:[#allocation2 + $0x141] sm:$0xff]
        %v1649 = vld [vmem:[#allocation2 + $0x151] sm:$0xff]
        %v1650 = vld [vmem:[#allocation2 + $0x159] sm:$0xff]
        %v1651 = vld [vmem:[#allocation2 + $0x169] sm:$0xff]
        %v1652 = vld [vmem:[#allocation2 + $0x171] sm:$0xff]
        %v1654 = vlaneseq
        %v1655 = vshrl.u32 %v1654, 7
        %v1656 = vsub.s32 0, %v1655
        %v1657 = vrot.slane %v1495, %v1656
        %v1659 = vmul.f32 %v1621, %v1657
        %v1660 = vmul.f32 %v1622, %v1657
        %v1661 = vmul.f32 %v1623, %v1657
        %v1662 = vmul.f32 %v1624, %v1657
        %v1663 = vmul.f32 %v1625, %v1657
        %v1664 = vmul.f32 %v1626, %v1657
        %v1665 = vmul.f32 %v1627, %v1657
        %v1666 = vmul.f32 %v1628, %v1657
        %v1667 = vmul.f32 %v1629, %v1657
        %v1668 = vmul.f32 %v1630, %v1657
        %v1669 = vmul.f32 %v1631, %v1657
        %v1670 = vmul.f32 %v1632, %v1657
        %v1671 = vmul.f32 %v1633, %v1657
        %v1672 = vmul.f32 %v1634, %v1657
        %v1673 = vmul.f32 %v1635, %v1657
        %v1674 = vmul.f32 %v1636, %v1657
        %v1675 = vmul.f32 %v1637, %v1657
        %v1676 = vmul.f32 %v1638, %v1657
        %v1677 = vmul.f32 %v1639, %v1657
        %v1678 = vmul.f32 %v1640, %v1657
        %v1679 = vmul.f32 %v1641, %v1657
        %v1680 = vmul.f32 %v1642, %v1657
        %v1681 = vmul.f32 %v1643, %v1657
        %v1682 = vmul.f32 %v1644, %v1657
        %v1683 = vmul.f32 %v1645, %v1657
        %v1684 = vmul.f32 %v1646, %v1657
        %v1685 = vmul.f32 %v1647, %v1657
        %v1686 = vmul.f32 %v1648, %v1657
        %v1687 = vmul.f32 %v1649, %v1657
        %v1688 = vmul.f32 %v1650, %v1657
        %v1689 = vmul.f32 %v1651, %v1657
        %v1690 = vmul.f32 %v1652, %v1657
        %v1691 = vadd.f32 %v1589, %v1659
        %v1692 = vadd.f32 %v1590, %v1660
        %v1693 = vadd.f32 %v1591, %v1661
        %v1694 = vadd.f32 %v1592, %v1662
        %v1695 = vadd.f32 %v1593, %v1663
        %v1696 = vadd.f32 %v1594, %v1664
        %v1697 = vadd.f32 %v1595, %v1665
        %v1698 = vadd.f32 %v1596, %v1666
        %v1699 = vadd.f32 %v1597, %v1667
        %v1700 = vadd.f32 %v1598, %v1668
        %v1701 = vadd.f32 %v1599, %v1669
        %v1702 = vadd.f32 %v1600, %v1670
        %v1703 = vadd.f32 %v1601, %v1671
        %v1704 = vadd.f32 %v1602, %v1672
        %v1705 = vadd.f32 %v1603, %v1673
        %v1706 = vadd.f32 %v1604, %v1674
        %v1707 = vadd.f32 %v1605, %v1675
        %v1708 = vadd.f32 %v1606, %v1676
        %v1709 = vadd.f32 %v1607, %v1677
        %v1710 = vadd.f32 %v1608, %v1678
        %v1711 = vadd.f32 %v1609, %v1679
        %v1712 = vadd.f32 %v1610, %v1680
        %v1713 = vadd.f32 %v1611, %v1681
        %v1714 = vadd.f32 %v1612, %v1682
        %v1715 = vadd.f32 %v1613, %v1683
        %v1716 = vadd.f32 %v1614, %v1684
        %v1717 = vadd.f32 %v1615, %v1685
        %v1718 = vadd.f32 %v1616, %v1686
        %v1719 = vadd.f32 %v1617, %v1687
        %v1720 = vadd.f32 %v1618, %v1688
        %v1721 = vadd.f32 %v1619, %v1689
        %v1722 = vadd.f32 %v1620, %v1690
        %v1723 = vld [vmem:[#allocation2 + $0x2] sm:$0xff]
        %v1724 = vld [vmem:[#allocation2 + $0xa] sm:$0xff]
        %v1725 = vld [vmem:[#allocation2 + $0x1a] sm:$0xff]
        %v1726 = vld [vmem:[#allocation2 + $0x22] sm:$0xff]
        %v1727 = vld [vmem:[#allocation2 + $0x32] sm:$0xff]
        %v1728 = vld [vmem:[#allocation2 + $0x3a] sm:$0xff]
        %v1729 = vld [vmem:[#allocation2 + $0x4a] sm:$0xff]
        %v1730 = vld [vmem:[#allocation2 + $0x52] sm:$0xff]
        %v1731 = vld [vmem:[#allocation2 + $0x62] sm:$0xff]
        %v1732 = vld [vmem:[#allocation2 + $0x6a] sm:$0xff]
        %v1733 = vld [vmem:[#allocation2 + $0x7a] sm:$0xff]
        %v1734 = vld [vmem:[#allocation2 + $0x82] sm:$0xff]
        %v1735 = vld [vmem:[#allocation2 + $0x92] sm:$0xff]
        %v1736 = vld [vmem:[#allocation2 + $0x9a] sm:$0xff]
        %v1737 = vld [vmem:[#allocation2 + $0xaa] sm:$0xff]
        %v1738 = vld [vmem:[#allocation2 + $0xb2] sm:$0xff]
        %v1739 = vld [vmem:[#allocation2 + $0xc2] sm:$0xff]
        %v1740 = vld [vmem:[#allocation2 + $0xca] sm:$0xff]
        %v1741 = vld [vmem:[#allocation2 + $0xda] sm:$0xff]
        %v1742 = vld [vmem:[#allocation2 + $0xe2] sm:$0xff]
        %v1743 = vld [vmem:[#allocation2 + $0xf2] sm:$0xff]
        %v1744 = vld [vmem:[#allocation2 + $0xfa] sm:$0xff]
        %v1745 = vld [vmem:[#allocation2 + $0x10a] sm:$0xff]
        %v1746 = vld [vmem:[#allocation2 + $0x112] sm:$0xff]
        %v1747 = vld [vmem:[#allocation2 + $0x122] sm:$0xff]
        %v1748 = vld [vmem:[#allocation2 + $0x12a] sm:$0xff]
        %v1749 = vld [vmem:[#allocation2 + $0x13a] sm:$0xff]
        %v1750 = vld [vmem:[#allocation2 + $0x142] sm:$0xff]
        %v1751 = vld [vmem:[#allocation2 + $0x152] sm:$0xff]
        %v1752 = vld [vmem:[#allocation2 + $0x15a] sm:$0xff]
        %v1753 = vld [vmem:[#allocation2 + $0x16a] sm:$0xff]
        %v1754 = vld [vmem:[#allocation2 + $0x172] sm:$0xff]
        %v1756 = vlaneseq
        %v1757 = vshrl.u32 %v1756, 7
        %v1758 = vsub.s32 0, %v1757
        %v1759 = vrot.slane %v1496, %v1758
        %v1761 = vmul.f32 %v1723, %v1759
        %v1762 = vmul.f32 %v1724, %v1759
        %v1763 = vmul.f32 %v1725, %v1759
        %v1764 = vmul.f32 %v1726, %v1759
        %v1765 = vmul.f32 %v1727, %v1759
        %v1766 = vmul.f32 %v1728, %v1759
        %v1767 = vmul.f32 %v1729, %v1759
        %v1768 = vmul.f32 %v1730, %v1759
        %v1769 = vmul.f32 %v1731, %v1759
        %v1770 = vmul.f32 %v1732, %v1759
        %v1771 = vmul.f32 %v1733, %v1759
        %v1772 = vmul.f32 %v1734, %v1759
        %v1773 = vmul.f32 %v1735, %v1759
        %v1774 = vmul.f32 %v1736, %v1759
        %v1775 = vmul.f32 %v1737, %v1759
        %v1776 = vmul.f32 %v1738, %v1759
        %v1777 = vmul.f32 %v1739, %v1759
        %v1778 = vmul.f32 %v1740, %v1759
        %v1779 = vmul.f32 %v1741, %v1759
        %v1780 = vmul.f32 %v1742, %v1759
        %v1781 = vmul.f32 %v1743, %v1759
        %v1782 = vmul.f32 %v1744, %v1759
        %v1783 = vmul.f32 %v1745, %v1759
        %v1784 = vmul.f32 %v1746, %v1759
        %v1785 = vmul.f32 %v1747, %v1759
        %v1786 = vmul.f32 %v1748, %v1759
        %v1787 = vmul.f32 %v1749, %v1759
        %v1788 = vmul.f32 %v1750, %v1759
        %v1789 = vmul.f32 %v1751, %v1759
        %v1790 = vmul.f32 %v1752, %v1759
        %v1791 = vmul.f32 %v1753, %v1759
        %v1792 = vmul.f32 %v1754, %v1759
        %v1793 = vadd.f32 %v1691, %v1761
        %v1794 = vadd.f32 %v1692, %v1762
        %v1795 = vadd.f32 %v1693, %v1763
        %v1796 = vadd.f32 %v1694, %v1764
        %v1797 = vadd.f32 %v1695, %v1765
        %v1798 = vadd.f32 %v1696, %v1766
        %v1799 = vadd.f32 %v1697, %v1767
        %v1800 = vadd.f32 %v1698, %v1768
        %v1801 = vadd.f32 %v1699, %v1769
        %v1802 = vadd.f32 %v1700, %v1770
        %v1803 = vadd.f32 %v1701, %v1771
        %v1804 = vadd.f32 %v1702, %v1772
        %v1805 = vadd.f32 %v1703, %v1773
        %v1806 = vadd.f32 %v1704, %v1774
        %v1807 = vadd.f32 %v1705, %v1775
        %v1808 = vadd.f32 %v1706, %v1776
        %v1809 = vadd.f32 %v1707, %v1777
        %v1810 = vadd.f32 %v1708, %v1778
        %v1811 = vadd.f32 %v1709, %v1779
        %v1812 = vadd.f32 %v1710, %v1780
        %v1813 = vadd.f32 %v1711, %v1781
        %v1814 = vadd.f32 %v1712, %v1782
        %v1815 = vadd.f32 %v1713, %v1783
        %v1816 = vadd.f32 %v1714, %v1784
        %v1817 = vadd.f32 %v1715, %v1785
        %v1818 = vadd.f32 %v1716, %v1786
        %v1819 = vadd.f32 %v1717, %v1787
        %v1820 = vadd.f32 %v1718, %v1788
        %v1821 = vadd.f32 %v1719, %v1789
        %v1822 = vadd.f32 %v1720, %v1790
        %v1823 = vadd.f32 %v1721, %v1791
        %v1824 = vadd.f32 %v1722, %v1792
        %v1825 = vld [vmem:[#allocation2 + $0x3] sm:$0xff]
        %v1826 = vld [vmem:[#allocation2 + $0xb] sm:$0xff]
        %v1827 = vld [vmem:[#allocation2 + $0x1b] sm:$0xff]
        %v1828 = vld [vmem:[#allocation2 + $0x23] sm:$0xff]
        %v1829 = vld [vmem:[#allocation2 + $0x33] sm:$0xff]
        %v1830 = vld [vmem:[#allocation2 + $0x3b] sm:$0xff]
        %v1831 = vld [vmem:[#allocation2 + $0x4b] sm:$0xff]
        %v1832 = vld [vmem:[#allocation2 + $0x53] sm:$0xff]
        %v1833 = vld [vmem:[#allocation2 + $0x63] sm:$0xff]
        %v1834 = vld [vmem:[#allocation2 + $0x6b] sm:$0xff]
        %v1835 = vld [vmem:[#allocation2 + $0x7b] sm:$0xff]
        %v1836 = vld [vmem:[#allocation2 + $0x83] sm:$0xff]
        %v1837 = vld [vmem:[#allocation2 + $0x93] sm:$0xff]
        %v1838 = vld [vmem:[#allocation2 + $0x9b] sm:$0xff]
        %v1839 = vld [vmem:[#allocation2 + $0xab] sm:$0xff]
        %v1840 = vld [vmem:[#allocation2 + $0xb3] sm:$0xff]
        %v1841 = vld [vmem:[#allocation2 + $0xc3] sm:$0xff]
        %v1842 = vld [vmem:[#allocation2 + $0xcb] sm:$0xff]
        %v1843 = vld [vmem:[#allocation2 + $0xdb] sm:$0xff]
        %v1844 = vld [vmem:[#allocation2 + $0xe3] sm:$0xff]
        %v1845 = vld [vmem:[#allocation2 + $0xf3] sm:$0xff]
        %v1846 = vld [vmem:[#allocation2 + $0xfb] sm:$0xff]
        %v1847 = vld [vmem:[#allocation2 + $0x10b] sm:$0xff]
        %v1848 = vld [vmem:[#allocation2 + $0x113] sm:$0xff]
        %v1849 = vld [vmem:[#allocation2 + $0x123] sm:$0xff]
        %v1850 = vld [vmem:[#allocation2 + $0x12b] sm:$0xff]
        %v1851 = vld [vmem:[#allocation2 + $0x13b] sm:$0xff]
        %v1852 = vld [vmem:[#allocation2 + $0x143] sm:$0xff]
        %v1853 = vld [vmem:[#allocation2 + $0x153] sm:$0xff]
        %v1854 = vld [vmem:[#allocation2 + $0x15b] sm:$0xff]
        %v1855 = vld [vmem:[#allocation2 + $0x16b] sm:$0xff]
        %v1856 = vld [vmem:[#allocation2 + $0x173] sm:$0xff]
        %v1858 = vlaneseq
        %v1859 = vshrl.u32 %v1858, 7
        %v1860 = vsub.s32 0, %v1859
        %v1861 = vrot.slane %v1497, %v1860
        %v1863 = vmul.f32 %v1825, %v1861
        %v1864 = vmul.f32 %v1826, %v1861
        %v1865 = vmul.f32 %v1827, %v1861
        %v1866 = vmul.f32 %v1828, %v1861
        %v1867 = vmul.f32 %v1829, %v1861
        %v1868 = vmul.f32 %v1830, %v1861
        %v1869 = vmul.f32 %v1831, %v1861
        %v1870 = vmul.f32 %v1832, %v1861
        %v1871 = vmul.f32 %v1833, %v1861
        %v1872 = vmul.f32 %v1834, %v1861
        %v1873 = vmul.f32 %v1835, %v1861
        %v1874 = vmul.f32 %v1836, %v1861
        %v1875 = vmul.f32 %v1837, %v1861
        %v1876 = vmul.f32 %v1838, %v1861
        %v1877 = vmul.f32 %v1839, %v1861
        %v1878 = vmul.f32 %v1840, %v1861
        %v1879 = vmul.f32 %v1841, %v1861
        %v1880 = vmul.f32 %v1842, %v1861
        %v1881 = vmul.f32 %v1843, %v1861
        %v1882 = vmul.f32 %v1844, %v1861
        %v1883 = vmul.f32 %v1845, %v1861
        %v1884 = vmul.f32 %v1846, %v1861
        %v1885 = vmul.f32 %v1847, %v1861
        %v1886 = vmul.f32 %v1848, %v1861
        %v1887 = vmul.f32 %v1849, %v1861
        %v1888 = vmul.f32 %v1850, %v1861
        %v1889 = vmul.f32 %v1851, %v1861
        %v1890 = vmul.f32 %v1852, %v1861
        %v1891 = vmul.f32 %v1853, %v1861
        %v1892 = vmul.f32 %v1854, %v1861
        %v1893 = vmul.f32 %v1855, %v1861
        %v1894 = vmul.f32 %v1856, %v1861
        %v1895 = vadd.f32 %v1793, %v1863
        %v1896 = vadd.f32 %v1794, %v1864
        %v1897 = vadd.f32 %v1795, %v1865
        %v1898 = vadd.f32 %v1796, %v1866
        %v1899 = vadd.f32 %v1797, %v1867
        %v1900 = vadd.f32 %v1798, %v1868
        %v1901 = vadd.f32 %v1799, %v1869
        %v1902 = vadd.f32 %v1800, %v1870
        %v1903 = vadd.f32 %v1801, %v1871
        %v1904 = vadd.f32 %v1802, %v1872
        %v1905 = vadd.f32 %v1803, %v1873
        %v1906 = vadd.f32 %v1804, %v1874
        %v1907 = vadd.f32 %v1805, %v1875
        %v1908 = vadd.f32 %v1806, %v1876
        %v1909 = vadd.f32 %v1807, %v1877
        %v1910 = vadd.f32 %v1808, %v1878
        %v1911 = vadd.f32 %v1809, %v1879
        %v1912 = vadd.f32 %v1810, %v1880
        %v1913 = vadd.f32 %v1811, %v1881
        %v1914 = vadd.f32 %v1812, %v1882
        %v1915 = vadd.f32 %v1813, %v1883
        %v1916 = vadd.f32 %v1814, %v1884
        %v1917 = vadd.f32 %v1815, %v1885
        %v1918 = vadd.f32 %v1816, %v1886
        %v1919 = vadd.f32 %v1817, %v1887
        %v1920 = vadd.f32 %v1818, %v1888
        %v1921 = vadd.f32 %v1819, %v1889
        %v1922 = vadd.f32 %v1820, %v1890
        %v1923 = vadd.f32 %v1821, %v1891
        %v1924 = vadd.f32 %v1822, %v1892
        %v1925 = vadd.f32 %v1823, %v1893
        %v1926 = vadd.f32 %v1824, %v1894
        %v1927 = vld [vmem:[#allocation2 + $0x4] sm:$0xff]
        %v1928 = vld [vmem:[#allocation2 + $0xc] sm:$0xff]
        %v1929 = vld [vmem:[#allocation2 + $0x1c] sm:$0xff]
        %v1930 = vld [vmem:[#allocation2 + $0x24] sm:$0xff]
        %v1931 = vld [vmem:[#allocation2 + $0x34] sm:$0xff]
        %v1932 = vld [vmem:[#allocation2 + $0x3c] sm:$0xff]
        %v1933 = vld [vmem:[#allocation2 + $0x4c] sm:$0xff]
        %v1934 = vld [vmem:[#allocation2 + $0x54] sm:$0xff]
        %v1935 = vld [vmem:[#allocation2 + $0x64] sm:$0xff]
        %v1936 = vld [vmem:[#allocation2 + $0x6c] sm:$0xff]
        %v1937 = vld [vmem:[#allocation2 + $0x7c] sm:$0xff]
        %v1938 = vld [vmem:[#allocation2 + $0x84] sm:$0xff]
        %v1939 = vld [vmem:[#allocation2 + $0x94] sm:$0xff]
        %v1940 = vld [vmem:[#allocation2 + $0x9c] sm:$0xff]
        %v1941 = vld [vmem:[#allocation2 + $0xac] sm:$0xff]
        %v1942 = vld [vmem:[#allocation2 + $0xb4] sm:$0xff]
        %v1943 = vld [vmem:[#allocation2 + $0xc4] sm:$0xff]
        %v1944 = vld [vmem:[#allocation2 + $0xcc] sm:$0xff]
        %v1945 = vld [vmem:[#allocation2 + $0xdc] sm:$0xff]
        %v1946 = vld [vmem:[#allocation2 + $0xe4] sm:$0xff]
        %v1947 = vld [vmem:[#allocation2 + $0xf4] sm:$0xff]
        %v1948 = vld [vmem:[#allocation2 + $0xfc] sm:$0xff]
        %v1949 = vld [vmem:[#allocation2 + $0x10c] sm:$0xff]
        %v1950 = vld [vmem:[#allocation2 + $0x114] sm:$0xff]
        %v1951 = vld [vmem:[#allocation2 + $0x124] sm:$0xff]
        %v1952 = vld [vmem:[#allocation2 + $0x12c] sm:$0xff]
        %v1953 = vld [vmem:[#allocation2 + $0x13c] sm:$0xff]
        %v1954 = vld [vmem:[#allocation2 + $0x144] sm:$0xff]
        %v1955 = vld [vmem:[#allocation2 + $0x154] sm:$0xff]
        %v1956 = vld [vmem:[#allocation2 + $0x15c] sm:$0xff]
        %v1957 = vld [vmem:[#allocation2 + $0x16c] sm:$0xff]
        %v1958 = vld [vmem:[#allocation2 + $0x174] sm:$0xff]
        %v1960 = vlaneseq
        %v1961 = vshrl.u32 %v1960, 7
        %v1962 = vsub.s32 0, %v1961
        %v1963 = vrot.slane %v1498, %v1962
        %v1965 = vmul.f32 %v1927, %v1963
        %v1966 = vmul.f32 %v1928, %v1963
        %v1967 = vmul.f32 %v1929, %v1963
        %v1968 = vmul.f32 %v1930, %v1963
        %v1969 = vmul.f32 %v1931, %v1963
        %v1970 = vmul.f32 %v1932, %v1963
        %v1971 = vmul.f32 %v1933, %v1963
        %v1972 = vmul.f32 %v1934, %v1963
        %v1973 = vmul.f32 %v1935, %v1963
        %v1974 = vmul.f32 %v1936, %v1963
        %v1975 = vmul.f32 %v1937, %v1963
        %v1976 = vmul.f32 %v1938, %v1963
        %v1977 = vmul.f32 %v1939, %v1963
        %v1978 = vmul.f32 %v1940, %v1963
        %v1979 = vmul.f32 %v1941, %v1963
        %v1980 = vmul.f32 %v1942, %v1963
        %v1981 = vmul.f32 %v1943, %v1963
        %v1982 = vmul.f32 %v1944, %v1963
        %v1983 = vmul.f32 %v1945, %v1963
        %v1984 = vmul.f32 %v1946, %v1963
        %v1985 = vmul.f32 %v1947, %v1963
        %v1986 = vmul.f32 %v1948, %v1963
        %v1987 = vmul.f32 %v1949, %v1963
        %v1988 = vmul.f32 %v1950, %v1963
        %v1989 = vmul.f32 %v1951, %v1963
        %v1990 = vmul.f32 %v1952, %v1963
        %v1991 = vmul.f32 %v1953, %v1963
        %v1992 = vmul.f32 %v1954, %v1963
        %v1993 = vmul.f32 %v1955, %v1963
        %v1994 = vmul.f32 %v1956, %v1963
        %v1995 = vmul.f32 %v1957, %v1963
        %v1996 = vmul.f32 %v1958, %v1963
        %v1997 = vadd.f32 %v1895, %v1965
        %v1998 = vadd.f32 %v1896, %v1966
        %v1999 = vadd.f32 %v1897, %v1967
        %v2000 = vadd.f32 %v1898, %v1968
        %v2001 = vadd.f32 %v1899, %v1969
        %v2002 = vadd.f32 %v1900, %v1970
        %v2003 = vadd.f32 %v1901, %v1971
        %v2004 = vadd.f32 %v1902, %v1972
        %v2005 = vadd.f32 %v1903, %v1973
        %v2006 = vadd.f32 %v1904, %v1974
        %v2007 = vadd.f32 %v1905, %v1975
        %v2008 = vadd.f32 %v1906, %v1976
        %v2009 = vadd.f32 %v1907, %v1977
        %v2010 = vadd.f32 %v1908, %v1978
        %v2011 = vadd.f32 %v1909, %v1979
        %v2012 = vadd.f32 %v1910, %v1980
        %v2013 = vadd.f32 %v1911, %v1981
        %v2014 = vadd.f32 %v1912, %v1982
        %v2015 = vadd.f32 %v1913, %v1983
        %v2016 = vadd.f32 %v1914, %v1984
        %v2017 = vadd.f32 %v1915, %v1985
        %v2018 = vadd.f32 %v1916, %v1986
        %v2019 = vadd.f32 %v1917, %v1987
        %v2020 = vadd.f32 %v1918, %v1988
        %v2021 = vadd.f32 %v1919, %v1989
        %v2022 = vadd.f32 %v1920, %v1990
        %v2023 = vadd.f32 %v1921, %v1991
        %v2024 = vadd.f32 %v1922, %v1992
        %v2025 = vadd.f32 %v1923, %v1993
        %v2026 = vadd.f32 %v1924, %v1994
        %v2027 = vadd.f32 %v1925, %v1995
        %v2028 = vadd.f32 %v1926, %v1996
        %s2029 = scalar_lea.vmem [#allocation2], 24
        %v2030 = vld [vmem:[%s2029] sm:$0xff]
        %v2031 = vld [vmem:[%s2029 + $0x8] sm:$0xff]
        %v2032 = vld [vmem:[%s2029 + $0x18] sm:$0xff]
        %v2033 = vld [vmem:[%s2029 + $0x20] sm:$0xff]
        %v2034 = vld [vmem:[%s2029 + $0x30] sm:$0xff]
        %v2035 = vld [vmem:[%s2029 + $0x38] sm:$0xff]
        %v2036 = vld [vmem:[%s2029 + $0x48] sm:$0xff]
        %v2037 = vld [vmem:[%s2029 + $0x50] sm:$0xff]
        %v2038 = vld [vmem:[%s2029 + $0x60] sm:$0xff]
        %v2039 = vld [vmem:[%s2029 + $0x68] sm:$0xff]
        %v2040 = vld [vmem:[%s2029 + $0x78] sm:$0xff]
        %v2041 = vld [vmem:[%s2029 + $0x80] sm:$0xff]
        %v2042 = vld [vmem:[%s2029 + $0x90] sm:$0xff]
        %v2043 = vld [vmem:[%s2029 + $0x98] sm:$0xff]
        %v2044 = vld [vmem:[%s2029 + $0xa8] sm:$0xff]
        %v2045 = vld [vmem:[%s2029 + $0xb0] sm:$0xff]
        %v2046 = vld [vmem:[%s2029 + $0xc0] sm:$0xff]
        %v2047 = vld [vmem:[%s2029 + $0xc8] sm:$0xff]
        %v2048 = vld [vmem:[%s2029 + $0xd8] sm:$0xff]
        %v2049 = vld [vmem:[%s2029 + $0xe0] sm:$0xff]
        %v2050 = vld [vmem:[%s2029 + $0xf0] sm:$0xff]
        %v2051 = vld [vmem:[%s2029 + $0xf8] sm:$0xff]
        %v2052 = vld [vmem:[%s2029 + $0x108] sm:$0xff]
        %v2053 = vld [vmem:[%s2029 + $0x110] sm:$0xff]
        %v2054 = vld [vmem:[%s2029 + $0x120] sm:$0xff]
        %v2055 = vld [vmem:[%s2029 + $0x128] sm:$0xff]
        %v2056 = vld [vmem:[%s2029 + $0x138] sm:$0xff]
        %v2057 = vld [vmem:[%s2029 + $0x140] sm:$0xff]
        %v2058 = vld [vmem:[%s2029 + $0x150] sm:$0xff]
        %v2059 = vld [vmem:[%s2029 + $0x158] sm:$0xff]
        %v2060 = vld [vmem:[%s2029 + $0x168] sm:$0xff]
        %v2061 = vld [vmem:[%s2029 + $0x170] sm:$0xff]
        %v2063 = vlaneseq
        %v2064 = vshrl.u32 %v2063, 7
        %v2065 = vsub.s32 0, %v2064
        %v2066 = vrot.slane %v1499, %v2065
        %v2068 = vmul.f32 %v2030, %v2066
        %v2069 = vmul.f32 %v2031, %v2066
        %v2070 = vmul.f32 %v2032, %v2066
        %v2071 = vmul.f32 %v2033, %v2066
        %v2072 = vmul.f32 %v2034, %v2066
        %v2073 = vmul.f32 %v2035, %v2066
        %v2074 = vmul.f32 %v2036, %v2066
        %v2075 = vmul.f32 %v2037, %v2066
        %v2076 = vmul.f32 %v2038, %v2066
        %v2077 = vmul.f32 %v2039, %v2066
        %v2078 = vmul.f32 %v2040, %v2066
        %v2079 = vmul.f32 %v2041, %v2066
        %v2080 = vmul.f32 %v2042, %v2066
        %v2081 = vmul.f32 %v2043, %v2066
        %v2082 = vmul.f32 %v2044, %v2066
        %v2083 = vmul.f32 %v2045, %v2066
        %v2084 = vmul.f32 %v2046, %v2066
        %v2085 = vmul.f32 %v2047, %v2066
        %v2086 = vmul.f32 %v2048, %v2066
        %v2087 = vmul.f32 %v2049, %v2066
        %v2088 = vmul.f32 %v2050, %v2066
        %v2089 = vmul.f32 %v2051, %v2066
        %v2090 = vmul.f32 %v2052, %v2066
        %v2091 = vmul.f32 %v2053, %v2066
        %v2092 = vmul.f32 %v2054, %v2066
        %v2093 = vmul.f32 %v2055, %v2066
        %v2094 = vmul.f32 %v2056, %v2066
        %v2095 = vmul.f32 %v2057, %v2066
        %v2096 = vmul.f32 %v2058, %v2066
        %v2097 = vmul.f32 %v2059, %v2066
        %v2098 = vmul.f32 %v2060, %v2066
        %v2099 = vmul.f32 %v2061, %v2066
        %v2100 = vadd.f32 %v1997, %v2068
        %v2101 = vadd.f32 %v1998, %v2069
        %v2102 = vadd.f32 %v1999, %v2070
        %v2103 = vadd.f32 %v2000, %v2071
        %v2104 = vadd.f32 %v2001, %v2072
        %v2105 = vadd.f32 %v2002, %v2073
        %v2106 = vadd.f32 %v2003, %v2074
        %v2107 = vadd.f32 %v2004, %v2075
        %v2108 = vadd.f32 %v2005, %v2076
        %v2109 = vadd.f32 %v2006, %v2077
        %v2110 = vadd.f32 %v2007, %v2078
        %v2111 = vadd.f32 %v2008, %v2079
        %v2112 = vadd.f32 %v2009, %v2080
        %v2113 = vadd.f32 %v2010, %v2081
        %v2114 = vadd.f32 %v2011, %v2082
        %v2115 = vadd.f32 %v2012, %v2083
        %v2116 = vadd.f32 %v2013, %v2084
        %v2117 = vadd.f32 %v2014, %v2085
        %v2118 = vadd.f32 %v2015, %v2086
        %v2119 = vadd.f32 %v2016, %v2087
        %v2120 = vadd.f32 %v2017, %v2088
        %v2121 = vadd.f32 %v2018, %v2089
        %v2122 = vadd.f32 %v2019, %v2090
        %v2123 = vadd.f32 %v2020, %v2091
        %v2124 = vadd.f32 %v2021, %v2092
        %v2125 = vadd.f32 %v2022, %v2093
        %v2126 = vadd.f32 %v2023, %v2094
        %v2127 = vadd.f32 %v2024, %v2095
        %v2128 = vadd.f32 %v2025, %v2096
        %v2129 = vadd.f32 %v2026, %v2097
        %v2130 = vadd.f32 %v2027, %v2098
        %v2131 = vadd.f32 %v2028, %v2099
        %v2132 = vld [vmem:[%s2029 + $0x1] sm:$0xff]
        %v2133 = vld [vmem:[%s2029 + $0x9] sm:$0xff]
        %v2134 = vld [vmem:[%s2029 + $0x19] sm:$0xff]
        %v2135 = vld [vmem:[%s2029 + $0x21] sm:$0xff]
        %v2136 = vld [vmem:[%s2029 + $0x31] sm:$0xff]
        %v2137 = vld [vmem:[%s2029 + $0x39] sm:$0xff]
        %v2138 = vld [vmem:[%s2029 + $0x49] sm:$0xff]
        %v2139 = vld [vmem:[%s2029 + $0x51] sm:$0xff]
        %v2140 = vld [vmem:[%s2029 + $0x61] sm:$0xff]
        %v2141 = vld [vmem:[%s2029 + $0x69] sm:$0xff]
        %v2142 = vld [vmem:[%s2029 + $0x79] sm:$0xff]
        %v2143 = vld [vmem:[%s2029 + $0x81] sm:$0xff]
        %v2144 = vld [vmem:[%s2029 + $0x91] sm:$0xff]
        %v2145 = vld [vmem:[%s2029 + $0x99] sm:$0xff]
        %v2146 = vld [vmem:[%s2029 + $0xa9] sm:$0xff]
        %v2147 = vld [vmem:[%s2029 + $0xb1] sm:$0xff]
        %v2148 = vld [vmem:[%s2029 + $0xc1] sm:$0xff]
        %v2149 = vld [vmem:[%s2029 + $0xc9] sm:$0xff]
        %v2150 = vld [vmem:[%s2029 + $0xd9] sm:$0xff]
        %v2151 = vld [vmem:[%s2029 + $0xe1] sm:$0xff]
        %v2152 = vld [vmem:[%s2029 + $0xf1] sm:$0xff]
        %v2153 = vld [vmem:[%s2029 + $0xf9] sm:$0xff]
        %v2154 = vld [vmem:[%s2029 + $0x109] sm:$0xff]
        %v2155 = vld [vmem:[%s2029 + $0x111] sm:$0xff]
        %v2156 = vld [vmem:[%s2029 + $0x121] sm:$0xff]
        %v2157 = vld [vmem:[%s2029 + $0x129] sm:$0xff]
        %v2158 = vld [vmem:[%s2029 + $0x139] sm:$0xff]
        %v2159 = vld [vmem:[%s2029 + $0x141] sm:$0xff]
        %v2160 = vld [vmem:[%s2029 + $0x151] sm:$0xff]
        %v2161 = vld [vmem:[%s2029 + $0x159] sm:$0xff]
        %v2162 = vld [vmem:[%s2029 + $0x169] sm:$0xff]
        %v2163 = vld [vmem:[%s2029 + $0x171] sm:$0xff]
        %v2165 = vlaneseq
        %v2166 = vshrl.u32 %v2165, 7
        %v2167 = vsub.s32 0, %v2166
        %v2168 = vrot.slane %v1500, %v2167
        %v2170 = vmul.f32 %v2132, %v2168
        %v2171 = vmul.f32 %v2133, %v2168
        %v2172 = vmul.f32 %v2134, %v2168
        %v2173 = vmul.f32 %v2135, %v2168
        %v2174 = vmul.f32 %v2136, %v2168
        %v2175 = vmul.f32 %v2137, %v2168
        %v2176 = vmul.f32 %v2138, %v2168
        %v2177 = vmul.f32 %v2139, %v2168
        %v2178 = vmul.f32 %v2140, %v2168
        %v2179 = vmul.f32 %v2141, %v2168
        %v2180 = vmul.f32 %v2142, %v2168
        %v2181 = vmul.f32 %v2143, %v2168
        %v2182 = vmul.f32 %v2144, %v2168
        %v2183 = vmul.f32 %v2145, %v2168
        %v2184 = vmul.f32 %v2146, %v2168
        %v2185 = vmul.f32 %v2147, %v2168
        %v2186 = vmul.f32 %v2148, %v2168
        %v2187 = vmul.f32 %v2149, %v2168
        %v2188 = vmul.f32 %v2150, %v2168
        %v2189 = vmul.f32 %v2151, %v2168
        %v2190 = vmul.f32 %v2152, %v2168
        %v2191 = vmul.f32 %v2153, %v2168
        %v2192 = vmul.f32 %v2154, %v2168
        %v2193 = vmul.f32 %v2155, %v2168
        %v2194 = vmul.f32 %v2156, %v2168
        %v2195 = vmul.f32 %v2157, %v2168
        %v2196 = vmul.f32 %v2158, %v2168
        %v2197 = vmul.f32 %v2159, %v2168
        %v2198 = vmul.f32 %v2160, %v2168
        %v2199 = vmul.f32 %v2161, %v2168
        %v2200 = vmul.f32 %v2162, %v2168
        %v2201 = vmul.f32 %v2163, %v2168
        %v2202 = vadd.f32 %v2100, %v2170
        %v2203 = vadd.f32 %v2101, %v2171
        %v2204 = vadd.f32 %v2102, %v2172
        %v2205 = vadd.f32 %v2103, %v2173
        %v2206 = vadd.f32 %v2104, %v2174
        %v2207 = vadd.f32 %v2105, %v2175
        %v2208 = vadd.f32 %v2106, %v2176
        %v2209 = vadd.f32 %v2107, %v2177
        %v2210 = vadd.f32 %v2108, %v2178
        %v2211 = vadd.f32 %v2109, %v2179
        %v2212 = vadd.f32 %v2110, %v2180
        %v2213 = vadd.f32 %v2111, %v2181
        %v2214 = vadd.f32 %v2112, %v2182
        %v2215 = vadd.f32 %v2113, %v2183
        %v2216 = vadd.f32 %v2114, %v2184
        %v2217 = vadd.f32 %v2115, %v2185
        %v2218 = vadd.f32 %v2116, %v2186
        %v2219 = vadd.f32 %v2117, %v2187
        %v2220 = vadd.f32 %v2118, %v2188
        %v2221 = vadd.f32 %v2119, %v2189
        %v2222 = vadd.f32 %v2120, %v2190
        %v2223 = vadd.f32 %v2121, %v2191
        %v2224 = vadd.f32 %v2122, %v2192
        %v2225 = vadd.f32 %v2123, %v2193
        %v2226 = vadd.f32 %v2124, %v2194
        %v2227 = vadd.f32 %v2125, %v2195
        %v2228 = vadd.f32 %v2126, %v2196
        %v2229 = vadd.f32 %v2127, %v2197
        %v2230 = vadd.f32 %v2128, %v2198
        %v2231 = vadd.f32 %v2129, %v2199
        %v2232 = vadd.f32 %v2130, %v2200
        %v2233 = vadd.f32 %v2131, %v2201
        %v2234 = vld [vmem:[%s2029 + $0x2] sm:$0xff]
        %v2235 = vld [vmem:[%s2029 + $0xa] sm:$0xff]
        %v2236 = vld [vmem:[%s2029 + $0x1a] sm:$0xff]
        %v2237 = vld [vmem:[%s2029 + $0x22] sm:$0xff]
        %v2238 = vld [vmem:[%s2029 + $0x32] sm:$0xff]
        %v2239 = vld [vmem:[%s2029 + $0x3a] sm:$0xff]
        %v2240 = vld [vmem:[%s2029 + $0x4a] sm:$0xff]
        %v2241 = vld [vmem:[%s2029 + $0x52] sm:$0xff]
        %v2242 = vld [vmem:[%s2029 + $0x62] sm:$0xff]
        %v2243 = vld [vmem:[%s2029 + $0x6a] sm:$0xff]
        %v2244 = vld [vmem:[%s2029 + $0x7a] sm:$0xff]
        %v2245 = vld [vmem:[%s2029 + $0x82] sm:$0xff]
        %v2246 = vld [vmem:[%s2029 + $0x92] sm:$0xff]
        %v2247 = vld [vmem:[%s2029 + $0x9a] sm:$0xff]
        %v2248 = vld [vmem:[%s2029 + $0xaa] sm:$0xff]
        %v2249 = vld [vmem:[%s2029 + $0xb2] sm:$0xff]
        %v2250 = vld [vmem:[%s2029 + $0xc2] sm:$0xff]
        %v2251 = vld [vmem:[%s2029 + $0xca] sm:$0xff]
        %v2252 = vld [vmem:[%s2029 + $0xda] sm:$0xff]
        %v2253 = vld [vmem:[%s2029 + $0xe2] sm:$0xff]
        %v2254 = vld [vmem:[%s2029 + $0xf2] sm:$0xff]
        %v2255 = vld [vmem:[%s2029 + $0xfa] sm:$0xff]
        %v2256 = vld [vmem:[%s2029 + $0x10a] sm:$0xff]
        %v2257 = vld [vmem:[%s2029 + $0x112] sm:$0xff]
        %v2258 = vld [vmem:[%s2029 + $0x122] sm:$0xff]
        %v2259 = vld [vmem:[%s2029 + $0x12a] sm:$0xff]
        %v2260 = vld [vmem:[%s2029 + $0x13a] sm:$0xff]
        %v2261 = vld [vmem:[%s2029 + $0x142] sm:$0xff]
        %v2262 = vld [vmem:[%s2029 + $0x152] sm:$0xff]
        %v2263 = vld [vmem:[%s2029 + $0x15a] sm:$0xff]
        %v2264 = vld [vmem:[%s2029 + $0x16a] sm:$0xff]
        %v2265 = vld [vmem:[%s2029 + $0x172] sm:$0xff]
        %v2267 = vlaneseq
        %v2268 = vshrl.u32 %v2267, 7
        %v2269 = vsub.s32 0, %v2268
        %v2270 = vrot.slane %v1501, %v2269
        %v2272 = vmul.f32 %v2234, %v2270
        %v2273 = vmul.f32 %v2235, %v2270
        %v2274 = vmul.f32 %v2236, %v2270
        %v2275 = vmul.f32 %v2237, %v2270
        %v2276 = vmul.f32 %v2238, %v2270
        %v2277 = vmul.f32 %v2239, %v2270
        %v2278 = vmul.f32 %v2240, %v2270
        %v2279 = vmul.f32 %v2241, %v2270
        %v2280 = vmul.f32 %v2242, %v2270
        %v2281 = vmul.f32 %v2243, %v2270
        %v2282 = vmul.f32 %v2244, %v2270
        %v2283 = vmul.f32 %v2245, %v2270
        %v2284 = vmul.f32 %v2246, %v2270
        %v2285 = vmul.f32 %v2247, %v2270
        %v2286 = vmul.f32 %v2248, %v2270
        %v2287 = vmul.f32 %v2249, %v2270
        %v2288 = vmul.f32 %v2250, %v2270
        %v2289 = vmul.f32 %v2251, %v2270
        %v2290 = vmul.f32 %v2252, %v2270
        %v2291 = vmul.f32 %v2253, %v2270
        %v2292 = vmul.f32 %v2254, %v2270
        %v2293 = vmul.f32 %v2255, %v2270
        %v2294 = vmul.f32 %v2256, %v2270
        %v2295 = vmul.f32 %v2257, %v2270
        %v2296 = vmul.f32 %v2258, %v2270
        %v2297 = vmul.f32 %v2259, %v2270
        %v2298 = vmul.f32 %v2260, %v2270
        %v2299 = vmul.f32 %v2261, %v2270
        %v2300 = vmul.f32 %v2262, %v2270
        %v2301 = vmul.f32 %v2263, %v2270
        %v2302 = vmul.f32 %v2264, %v2270
        %v2303 = vmul.f32 %v2265, %v2270
        %v2304 = vadd.f32 %v2202, %v2272
        %v2305 = vadd.f32 %v2203, %v2273
        %v2306 = vadd.f32 %v2204, %v2274
        %v2307 = vadd.f32 %v2205, %v2275
        %v2308 = vadd.f32 %v2206, %v2276
        %v2309 = vadd.f32 %v2207, %v2277
        %v2310 = vadd.f32 %v2208, %v2278
        %v2311 = vadd.f32 %v2209, %v2279
        %v2312 = vadd.f32 %v2210, %v2280
        %v2313 = vadd.f32 %v2211, %v2281
        %v2314 = vadd.f32 %v2212, %v2282
        %v2315 = vadd.f32 %v2213, %v2283
        %v2316 = vadd.f32 %v2214, %v2284
        %v2317 = vadd.f32 %v2215, %v2285
        %v2318 = vadd.f32 %v2216, %v2286
        %v2319 = vadd.f32 %v2217, %v2287
        %v2320 = vadd.f32 %v2218, %v2288
        %v2321 = vadd.f32 %v2219, %v2289
        %v2322 = vadd.f32 %v2220, %v2290
        %v2323 = vadd.f32 %v2221, %v2291
        %v2324 = vadd.f32 %v2222, %v2292
        %v2325 = vadd.f32 %v2223, %v2293
        %v2326 = vadd.f32 %v2224, %v2294
        %v2327 = vadd.f32 %v2225, %v2295
        %v2328 = vadd.f32 %v2226, %v2296
        %v2329 = vadd.f32 %v2227, %v2297
        %v2330 = vadd.f32 %v2228, %v2298
        %v2331 = vadd.f32 %v2229, %v2299
        %v2332 = vadd.f32 %v2230, %v2300
        %v2333 = vadd.f32 %v2231, %v2301
        %v2334 = vadd.f32 %v2232, %v2302
        %v2335 = vadd.f32 %v2233, %v2303
        %v2336 = vld [vmem:[%s2029 + $0x3] sm:$0xff]
        %v2337 = vld [vmem:[%s2029 + $0xb] sm:$0xff]
        %v2338 = vld [vmem:[%s2029 + $0x1b] sm:$0xff]
        %v2339 = vld [vmem:[%s2029 + $0x23] sm:$0xff]
        %v2340 = vld [vmem:[%s2029 + $0x33] sm:$0xff]
        %v2341 = vld [vmem:[%s2029 + $0x3b] sm:$0xff]
        %v2342 = vld [vmem:[%s2029 + $0x4b] sm:$0xff]
        %v2343 = vld [vmem:[%s2029 + $0x53] sm:$0xff]
        %v2344 = vld [vmem:[%s2029 + $0x63] sm:$0xff]
        %v2345 = vld [vmem:[%s2029 + $0x6b] sm:$0xff]
        %v2346 = vld [vmem:[%s2029 + $0x7b] sm:$0xff]
        %v2347 = vld [vmem:[%s2029 + $0x83] sm:$0xff]
        %v2348 = vld [vmem:[%s2029 + $0x93] sm:$0xff]
        %v2349 = vld [vmem:[%s2029 + $0x9b] sm:$0xff]
        %v2350 = vld [vmem:[%s2029 + $0xab] sm:$0xff]
        %v2351 = vld [vmem:[%s2029 + $0xb3] sm:$0xff]
        %v2352 = vld [vmem:[%s2029 + $0xc3] sm:$0xff]
        %v2353 = vld [vmem:[%s2029 + $0xcb] sm:$0xff]
        %v2354 = vld [vmem:[%s2029 + $0xdb] sm:$0xff]
        %v2355 = vld [vmem:[%s2029 + $0xe3] sm:$0xff]
        %v2356 = vld [vmem:[%s2029 + $0xf3] sm:$0xff]
        %v2357 = vld [vmem:[%s2029 + $0xfb] sm:$0xff]
        %v2358 = vld [vmem:[%s2029 + $0x10b] sm:$0xff]
        %v2359 = vld [vmem:[%s2029 + $0x113] sm:$0xff]
        %v2360 = vld [vmem:[%s2029 + $0x123] sm:$0xff]
        %v2361 = vld [vmem:[%s2029 + $0x12b] sm:$0xff]
        %v2362 = vld [vmem:[%s2029 + $0x13b] sm:$0xff]
        %v2363 = vld [vmem:[%s2029 + $0x143] sm:$0xff]
        %v2364 = vld [vmem:[%s2029 + $0x153] sm:$0xff]
        %v2365 = vld [vmem:[%s2029 + $0x15b] sm:$0xff]
        %v2366 = vld [vmem:[%s2029 + $0x16b] sm:$0xff]
        %v2367 = vld [vmem:[%s2029 + $0x173] sm:$0xff]
        %v2369 = vlaneseq
        %v2370 = vshrl.u32 %v2369, 7
        %v2371 = vsub.s32 0, %v2370
        %v2372 = vrot.slane %v1502, %v2371
        %v2374 = vmul.f32 %v2336, %v2372
        %v2375 = vmul.f32 %v2337, %v2372
        %v2376 = vmul.f32 %v2338, %v2372
        %v2377 = vmul.f32 %v2339, %v2372
        %v2378 = vmul.f32 %v2340, %v2372
        %v2379 = vmul.f32 %v2341, %v2372
        %v2380 = vmul.f32 %v2342, %v2372
        %v2381 = vmul.f32 %v2343, %v2372
        %v2382 = vmul.f32 %v2344, %v2372
        %v2383 = vmul.f32 %v2345, %v2372
        %v2384 = vmul.f32 %v2346, %v2372
        %v2385 = vmul.f32 %v2347, %v2372
        %v2386 = vmul.f32 %v2348, %v2372
        %v2387 = vmul.f32 %v2349, %v2372
        %v2388 = vmul.f32 %v2350, %v2372
        %v2389 = vmul.f32 %v2351, %v2372
        %v2390 = vmul.f32 %v2352, %v2372
        %v2391 = vmul.f32 %v2353, %v2372
        %v2392 = vmul.f32 %v2354, %v2372
        %v2393 = vmul.f32 %v2355, %v2372
        %v2394 = vmul.f32 %v2356, %v2372
        %v2395 = vmul.f32 %v2357, %v2372
        %v2396 = vmul.f32 %v2358, %v2372
        %v2397 = vmul.f32 %v2359, %v2372
        %v2398 = vmul.f32 %v2360, %v2372
        %v2399 = vmul.f32 %v2361, %v2372
        %v2400 = vmul.f32 %v2362, %v2372
        %v2401 = vmul.f32 %v2363, %v2372
        %v2402 = vmul.f32 %v2364, %v2372
        %v2403 = vmul.f32 %v2365, %v2372
        %v2404 = vmul.f32 %v2366, %v2372
        %v2405 = vmul.f32 %v2367, %v2372
        %v2406 = vadd.f32 %v2304, %v2374
        %v2407 = vadd.f32 %v2305, %v2375
        %v2408 = vadd.f32 %v2306, %v2376
        %v2409 = vadd.f32 %v2307, %v2377
        %v2410 = vadd.f32 %v2308, %v2378
        %v2411 = vadd.f32 %v2309, %v2379
        %v2412 = vadd.f32 %v2310, %v2380
        %v2413 = vadd.f32 %v2311, %v2381
        %v2414 = vadd.f32 %v2312, %v2382
        %v2415 = vadd.f32 %v2313, %v2383
        %v2416 = vadd.f32 %v2314, %v2384
        %v2417 = vadd.f32 %v2315, %v2385
        %v2418 = vadd.f32 %v2316, %v2386
        %v2419 = vadd.f32 %v2317, %v2387
        %v2420 = vadd.f32 %v2318, %v2388
        %v2421 = vadd.f32 %v2319, %v2389
        %v2422 = vadd.f32 %v2320, %v2390
        %v2423 = vadd.f32 %v2321, %v2391
        %v2424 = vadd.f32 %v2322, %v2392
        %v2425 = vadd.f32 %v2323, %v2393
        %v2426 = vadd.f32 %v2324, %v2394
        %v2427 = vadd.f32 %v2325, %v2395
        %v2428 = vadd.f32 %v2326, %v2396
        %v2429 = vadd.f32 %v2327, %v2397
        %v2430 = vadd.f32 %v2328, %v2398
        %v2431 = vadd.f32 %v2329, %v2399
        %v2432 = vadd.f32 %v2330, %v2400
        %v2433 = vadd.f32 %v2331, %v2401
        %v2434 = vadd.f32 %v2332, %v2402
        %v2435 = vadd.f32 %v2333, %v2403
        %v2436 = vadd.f32 %v2334, %v2404
        %v2437 = vadd.f32 %v2335, %v2405
        %v2438 = vld [vmem:[%s2029 + $0x4] sm:$0xff]
        %v2439 = vld [vmem:[%s2029 + $0xc] sm:$0xff]
        %v2440 = vld [vmem:[%s2029 + $0x1c] sm:$0xff]
        %v2441 = vld [vmem:[%s2029 + $0x24] sm:$0xff]
        %v2442 = vld [vmem:[%s2029 + $0x34] sm:$0xff]
        %v2443 = vld [vmem:[%s2029 + $0x3c] sm:$0xff]
        %v2444 = vld [vmem:[%s2029 + $0x4c] sm:$0xff]
        %v2445 = vld [vmem:[%s2029 + $0x54] sm:$0xff]
        %v2446 = vld [vmem:[%s2029 + $0x64] sm:$0xff]
        %v2447 = vld [vmem:[%s2029 + $0x6c] sm:$0xff]
        %v2448 = vld [vmem:[%s2029 + $0x7c] sm:$0xff]
        %v2449 = vld [vmem:[%s2029 + $0x84] sm:$0xff]
        %v2450 = vld [vmem:[%s2029 + $0x94] sm:$0xff]
        %v2451 = vld [vmem:[%s2029 + $0x9c] sm:$0xff]
        %v2452 = vld [vmem:[%s2029 + $0xac] sm:$0xff]
        %v2453 = vld [vmem:[%s2029 + $0xb4] sm:$0xff]
        %v2454 = vld [vmem:[%s2029 + $0xc4] sm:$0xff]
        %v2455 = vld [vmem:[%s2029 + $0xcc] sm:$0xff]
        %v2456 = vld [vmem:[%s2029 + $0xdc] sm:$0xff]
        %v2457 = vld [vmem:[%s2029 + $0xe4] sm:$0xff]
        %v2458 = vld [vmem:[%s2029 + $0xf4] sm:$0xff]
        %v2459 = vld [vmem:[%s2029 + $0xfc] sm:$0xff]
        %v2460 = vld [vmem:[%s2029 + $0x10c] sm:$0xff]
        %v2461 = vld [vmem:[%s2029 + $0x114] sm:$0xff]
        %v2462 = vld [vmem:[%s2029 + $0x124] sm:$0xff]
        %v2463 = vld [vmem:[%s2029 + $0x12c] sm:$0xff]
        %v2464 = vld [vmem:[%s2029 + $0x13c] sm:$0xff]
        %v2465 = vld [vmem:[%s2029 + $0x144] sm:$0xff]
        %v2466 = vld [vmem:[%s2029 + $0x154] sm:$0xff]
        %v2467 = vld [vmem:[%s2029 + $0x15c] sm:$0xff]
        %v2468 = vld [vmem:[%s2029 + $0x16c] sm:$0xff]
        %v2469 = vld [vmem:[%s2029 + $0x174] sm:$0xff]
        %v2471 = vlaneseq
        %v2472 = vshrl.u32 %v2471, 7
        %v2473 = vsub.s32 0, %v2472
        %v2474 = vrot.slane %v1503, %v2473
        %v2476 = vmul.f32 %v2438, %v2474
        %v2477 = vmul.f32 %v2439, %v2474
        %v2478 = vmul.f32 %v2440, %v2474
        %v2479 = vmul.f32 %v2441, %v2474
        %v2480 = vmul.f32 %v2442, %v2474
        %v2481 = vmul.f32 %v2443, %v2474
        %v2482 = vmul.f32 %v2444, %v2474
        %v2483 = vmul.f32 %v2445, %v2474
        %v2484 = vmul.f32 %v2446, %v2474
        %v2485 = vmul.f32 %v2447, %v2474
        %v2486 = vmul.f32 %v2448, %v2474
        %v2487 = vmul.f32 %v2449, %v2474
        %v2488 = vmul.f32 %v2450, %v2474
        %v2489 = vmul.f32 %v2451, %v2474
        %v2490 = vmul.f32 %v2452, %v2474
        %v2491 = vmul.f32 %v2453, %v2474
        %v2492 = vmul.f32 %v2454, %v2474
        %v2493 = vmul.f32 %v2455, %v2474
        %v2494 = vmul.f32 %v2456, %v2474
        %v2495 = vmul.f32 %v2457, %v2474
        %v2496 = vmul.f32 %v2458, %v2474
        %v2497 = vmul.f32 %v2459, %v2474
        %v2498 = vmul.f32 %v2460, %v2474
        %v2499 = vmul.f32 %v2461, %v2474
        %v2500 = vmul.f32 %v2462, %v2474
        %v2501 = vmul.f32 %v2463, %v2474
        %v2502 = vmul.f32 %v2464, %v2474
        %v2503 = vmul.f32 %v2465, %v2474
        %v2504 = vmul.f32 %v2466, %v2474
        %v2505 = vmul.f32 %v2467, %v2474
        %v2506 = vmul.f32 %v2468, %v2474
        %v2507 = vmul.f32 %v2469, %v2474
        %v2508 = vadd.f32 %v2406, %v2476
        %v2509 = vadd.f32 %v2407, %v2477
        %v2510 = vadd.f32 %v2408, %v2478
        %v2511 = vadd.f32 %v2409, %v2479
        %v2512 = vadd.f32 %v2410, %v2480
        %v2513 = vadd.f32 %v2411, %v2481
        %v2514 = vadd.f32 %v2412, %v2482
        %v2515 = vadd.f32 %v2413, %v2483
        %v2516 = vadd.f32 %v2414, %v2484
        %v2517 = vadd.f32 %v2415, %v2485
        %v2518 = vadd.f32 %v2416, %v2486
        %v2519 = vadd.f32 %v2417, %v2487
        %v2520 = vadd.f32 %v2418, %v2488
        %v2521 = vadd.f32 %v2419, %v2489
        %v2522 = vadd.f32 %v2420, %v2490
        %v2523 = vadd.f32 %v2421, %v2491
        %v2524 = vadd.f32 %v2422, %v2492
        %v2525 = vadd.f32 %v2423, %v2493
        %v2526 = vadd.f32 %v2424, %v2494
        %v2527 = vadd.f32 %v2425, %v2495
        %v2528 = vadd.f32 %v2426, %v2496
        %v2529 = vadd.f32 %v2427, %v2497
        %v2530 = vadd.f32 %v2428, %v2498
        %v2531 = vadd.f32 %v2429, %v2499
        %v2532 = vadd.f32 %v2430, %v2500
        %v2533 = vadd.f32 %v2431, %v2501
        %v2534 = vadd.f32 %v2432, %v2502
        %v2535 = vadd.f32 %v2433, %v2503
        %v2536 = vadd.f32 %v2434, %v2504
        %v2537 = vadd.f32 %v2435, %v2505
        %v2538 = vadd.f32 %v2436, %v2506
        %v2539 = vadd.f32 %v2437, %v2507
        %v2540 = vld [vmem:[%s1131] sm:$0xff]
        %v2541 = vld [vmem:[%s1131 + $0x8] sm:$0xff]
        %v2542 = vld [vmem:[%s1131 + $0x18] sm:$0xff]
        %v2543 = vld [vmem:[%s1131 + $0x20] sm:$0xff]
        %v2544 = vld [vmem:[%s1131 + $0x30] sm:$0xff]
        %v2545 = vld [vmem:[%s1131 + $0x38] sm:$0xff]
        %v2546 = vld [vmem:[%s1131 + $0x48] sm:$0xff]
        %v2547 = vld [vmem:[%s1131 + $0x50] sm:$0xff]
        %v2548 = vld [vmem:[%s1131 + $0x60] sm:$0xff]
        %v2549 = vld [vmem:[%s1131 + $0x68] sm:$0xff]
        %v2550 = vld [vmem:[%s1131 + $0x78] sm:$0xff]
        %v2551 = vld [vmem:[%s1131 + $0x80] sm:$0xff]
        %v2552 = vld [vmem:[%s1131 + $0x90] sm:$0xff]
        %v2553 = vld [vmem:[%s1131 + $0x98] sm:$0xff]
        %v2554 = vld [vmem:[%s1131 + $0xa8] sm:$0xff]
        %v2555 = vld [vmem:[%s1131 + $0xb0] sm:$0xff]
        %v2556 = vld [vmem:[%s1131 + $0xc0] sm:$0xff]
        %v2557 = vld [vmem:[%s1131 + $0xc8] sm:$0xff]
        %v2558 = vld [vmem:[%s1131 + $0xd8] sm:$0xff]
        %v2559 = vld [vmem:[%s1131 + $0xe0] sm:$0xff]
        %v2560 = vld [vmem:[%s1131 + $0xf0] sm:$0xff]
        %v2561 = vld [vmem:[%s1131 + $0xf8] sm:$0xff]
        %v2562 = vld [vmem:[%s1131 + $0x108] sm:$0xff]
        %v2563 = vld [vmem:[%s1131 + $0x110] sm:$0xff]
        %v2564 = vld [vmem:[%s1131 + $0x120] sm:$0xff]
        %v2565 = vld [vmem:[%s1131 + $0x128] sm:$0xff]
        %v2566 = vld [vmem:[%s1131 + $0x138] sm:$0xff]
        %v2567 = vld [vmem:[%s1131 + $0x140] sm:$0xff]
        %v2568 = vld [vmem:[%s1131 + $0x150] sm:$0xff]
        %v2569 = vld [vmem:[%s1131 + $0x158] sm:$0xff]
        %v2570 = vld [vmem:[%s1131 + $0x168] sm:$0xff]
        %v2571 = vld [vmem:[%s1131 + $0x170] sm:$0xff]
        %v2573 = vlaneseq
        %v2574 = vshrl.u32 %v2573, 7
        %v2575 = vsub.s32 0, %v2574
        %v2576 = vrot.slane %v1504, %v2575
        %v2578 = vmul.f32 %v2540, %v2576
        %v2579 = vmul.f32 %v2541, %v2576
        %v2580 = vmul.f32 %v2542, %v2576
        %v2581 = vmul.f32 %v2543, %v2576
        %v2582 = vmul.f32 %v2544, %v2576
        %v2583 = vmul.f32 %v2545, %v2576
        %v2584 = vmul.f32 %v2546, %v2576
        %v2585 = vmul.f32 %v2547, %v2576
        %v2586 = vmul.f32 %v2548, %v2576
        %v2587 = vmul.f32 %v2549, %v2576
        %v2588 = vmul.f32 %v2550, %v2576
        %v2589 = vmul.f32 %v2551, %v2576
        %v2590 = vmul.f32 %v2552, %v2576
        %v2591 = vmul.f32 %v2553, %v2576
        %v2592 = vmul.f32 %v2554, %v2576
        %v2593 = vmul.f32 %v2555, %v2576
        %v2594 = vmul.f32 %v2556, %v2576
        %v2595 = vmul.f32 %v2557, %v2576
        %v2596 = vmul.f32 %v2558, %v2576
        %v2597 = vmul.f32 %v2559, %v2576
        %v2598 = vmul.f32 %v2560, %v2576
        %v2599 = vmul.f32 %v2561, %v2576
        %v2600 = vmul.f32 %v2562, %v2576
        %v2601 = vmul.f32 %v2563, %v2576
        %v2602 = vmul.f32 %v2564, %v2576
        %v2603 = vmul.f32 %v2565, %v2576
        %v2604 = vmul.f32 %v2566, %v2576
        %v2605 = vmul.f32 %v2567, %v2576
        %v2606 = vmul.f32 %v2568, %v2576
        %v2607 = vmul.f32 %v2569, %v2576
        %v2608 = vmul.f32 %v2570, %v2576
        %v2609 = vmul.f32 %v2571, %v2576
        %v2610 = vadd.f32 %v2508, %v2578
        %v2611 = vadd.f32 %v2509, %v2579
        %v2612 = vadd.f32 %v2510, %v2580
        %v2613 = vadd.f32 %v2511, %v2581
        %v2614 = vadd.f32 %v2512, %v2582
        %v2615 = vadd.f32 %v2513, %v2583
        %v2616 = vadd.f32 %v2514, %v2584
        %v2617 = vadd.f32 %v2515, %v2585
        %v2618 = vadd.f32 %v2516, %v2586
        %v2619 = vadd.f32 %v2517, %v2587
        %v2620 = vadd.f32 %v2518, %v2588
        %v2621 = vadd.f32 %v2519, %v2589
        %v2622 = vadd.f32 %v2520, %v2590
        %v2623 = vadd.f32 %v2521, %v2591
        %v2624 = vadd.f32 %v2522, %v2592
        %v2625 = vadd.f32 %v2523, %v2593
        %v2626 = vadd.f32 %v2524, %v2594
        %v2627 = vadd.f32 %v2525, %v2595
        %v2628 = vadd.f32 %v2526, %v2596
        %v2629 = vadd.f32 %v2527, %v2597
        %v2630 = vadd.f32 %v2528, %v2598
        %v2631 = vadd.f32 %v2529, %v2599
        %v2632 = vadd.f32 %v2530, %v2600
        %v2633 = vadd.f32 %v2531, %v2601
        %v2634 = vadd.f32 %v2532, %v2602
        %v2635 = vadd.f32 %v2533, %v2603
        %v2636 = vadd.f32 %v2534, %v2604
        %v2637 = vadd.f32 %v2535, %v2605
        %v2638 = vadd.f32 %v2536, %v2606
        %v2639 = vadd.f32 %v2537, %v2607
        %v2640 = vadd.f32 %v2538, %v2608
        %v2641 = vadd.f32 %v2539, %v2609
        %v2642 = vld [vmem:[%s1131 + $0x1] sm:$0xff]
        %v2643 = vld [vmem:[%s1131 + $0x9] sm:$0xff]
        %v2644 = vld [vmem:[%s1131 + $0x19] sm:$0xff]
        %v2645 = vld [vmem:[%s1131 + $0x21] sm:$0xff]
        %v2646 = vld [vmem:[%s1131 + $0x31] sm:$0xff]
        %v2647 = vld [vmem:[%s1131 + $0x39] sm:$0xff]
        %v2648 = vld [vmem:[%s1131 + $0x49] sm:$0xff]
        %v2649 = vld [vmem:[%s1131 + $0x51] sm:$0xff]
        %v2650 = vld [vmem:[%s1131 + $0x61] sm:$0xff]
        %v2651 = vld [vmem:[%s1131 + $0x69] sm:$0xff]
        %v2652 = vld [vmem:[%s1131 + $0x79] sm:$0xff]
        %v2653 = vld [vmem:[%s1131 + $0x81] sm:$0xff]
        %v2654 = vld [vmem:[%s1131 + $0x91] sm:$0xff]
        %v2655 = vld [vmem:[%s1131 + $0x99] sm:$0xff]
        %v2656 = vld [vmem:[%s1131 + $0xa9] sm:$0xff]
        %v2657 = vld [vmem:[%s1131 + $0xb1] sm:$0xff]
        %v2658 = vld [vmem:[%s1131 + $0xc1] sm:$0xff]
        %v2659 = vld [vmem:[%s1131 + $0xc9] sm:$0xff]
        %v2660 = vld [vmem:[%s1131 + $0xd9] sm:$0xff]
        %v2661 = vld [vmem:[%s1131 + $0xe1] sm:$0xff]
        %v2662 = vld [vmem:[%s1131 + $0xf1] sm:$0xff]
        %v2663 = vld [vmem:[%s1131 + $0xf9] sm:$0xff]
        %v2664 = vld [vmem:[%s1131 + $0x109] sm:$0xff]
        %v2665 = vld [vmem:[%s1131 + $0x111] sm:$0xff]
        %v2666 = vld [vmem:[%s1131 + $0x121] sm:$0xff]
        %v2667 = vld [vmem:[%s1131 + $0x129] sm:$0xff]
        %v2668 = vld [vmem:[%s1131 + $0x139] sm:$0xff]
        %v2669 = vld [vmem:[%s1131 + $0x141] sm:$0xff]
        %v2670 = vld [vmem:[%s1131 + $0x151] sm:$0xff]
        %v2671 = vld [vmem:[%s1131 + $0x159] sm:$0xff]
        %v2672 = vld [vmem:[%s1131 + $0x169] sm:$0xff]
        %v2673 = vld [vmem:[%s1131 + $0x171] sm:$0xff]
        %v2675 = vlaneseq
        %v2676 = vshrl.u32 %v2675, 7
        %v2677 = vsub.s32 0, %v2676
        %v2678 = vrot.slane %v1505, %v2677
        %v2680 = vmul.f32 %v2642, %v2678
        %v2681 = vmul.f32 %v2643, %v2678
        %v2682 = vmul.f32 %v2644, %v2678
        %v2683 = vmul.f32 %v2645, %v2678
        %v2684 = vmul.f32 %v2646, %v2678
        %v2685 = vmul.f32 %v2647, %v2678
        %v2686 = vmul.f32 %v2648, %v2678
        %v2687 = vmul.f32 %v2649, %v2678
        %v2688 = vmul.f32 %v2650, %v2678
        %v2689 = vmul.f32 %v2651, %v2678
        %v2690 = vmul.f32 %v2652, %v2678
        %v2691 = vmul.f32 %v2653, %v2678
        %v2692 = vmul.f32 %v2654, %v2678
        %v2693 = vmul.f32 %v2655, %v2678
        %v2694 = vmul.f32 %v2656, %v2678
        %v2695 = vmul.f32 %v2657, %v2678
        %v2696 = vmul.f32 %v2658, %v2678
        %v2697 = vmul.f32 %v2659, %v2678
        %v2698 = vmul.f32 %v2660, %v2678
        %v2699 = vmul.f32 %v2661, %v2678
        %v2700 = vmul.f32 %v2662, %v2678
        %v2701 = vmul.f32 %v2663, %v2678
        %v2702 = vmul.f32 %v2664, %v2678
        %v2703 = vmul.f32 %v2665, %v2678
        %v2704 = vmul.f32 %v2666, %v2678
        %v2705 = vmul.f32 %v2667, %v2678
        %v2706 = vmul.f32 %v2668, %v2678
        %v2707 = vmul.f32 %v2669, %v2678
        %v2708 = vmul.f32 %v2670, %v2678
        %v2709 = vmul.f32 %v2671, %v2678
        %v2710 = vmul.f32 %v2672, %v2678
        %v2711 = vmul.f32 %v2673, %v2678
        %v2712 = vadd.f32 %v2610, %v2680
        %v2713 = vadd.f32 %v2611, %v2681
        %v2714 = vadd.f32 %v2612, %v2682
        %v2715 = vadd.f32 %v2613, %v2683
        %v2716 = vadd.f32 %v2614, %v2684
        %v2717 = vadd.f32 %v2615, %v2685
        %v2718 = vadd.f32 %v2616, %v2686
        %v2719 = vadd.f32 %v2617, %v2687
        %v2720 = vadd.f32 %v2618, %v2688
        %v2721 = vadd.f32 %v2619, %v2689
        %v2722 = vadd.f32 %v2620, %v2690
        %v2723 = vadd.f32 %v2621, %v2691
        %v2724 = vadd.f32 %v2622, %v2692
        %v2725 = vadd.f32 %v2623, %v2693
        %v2726 = vadd.f32 %v2624, %v2694
        %v2727 = vadd.f32 %v2625, %v2695
        %v2728 = vadd.f32 %v2626, %v2696
        %v2729 = vadd.f32 %v2627, %v2697
        %v2730 = vadd.f32 %v2628, %v2698
        %v2731 = vadd.f32 %v2629, %v2699
        %v2732 = vadd.f32 %v2630, %v2700
        %v2733 = vadd.f32 %v2631, %v2701
        %v2734 = vadd.f32 %v2632, %v2702
        %v2735 = vadd.f32 %v2633, %v2703
        %v2736 = vadd.f32 %v2634, %v2704
        %v2737 = vadd.f32 %v2635, %v2705
        %v2738 = vadd.f32 %v2636, %v2706
        %v2739 = vadd.f32 %v2637, %v2707
        %v2740 = vadd.f32 %v2638, %v2708
        %v2741 = vadd.f32 %v2639, %v2709
        %v2742 = vadd.f32 %v2640, %v2710
        %v2743 = vadd.f32 %v2641, %v2711
        %v2744 = vld [vmem:[%s1131 + $0x2] sm:$0xff]
        %v2745 = vld [vmem:[%s1131 + $0xa] sm:$0xff]
        %v2746 = vld [vmem:[%s1131 + $0x1a] sm:$0xff]
        %v2747 = vld [vmem:[%s1131 + $0x22] sm:$0xff]
        %v2748 = vld [vmem:[%s1131 + $0x32] sm:$0xff]
        %v2749 = vld [vmem:[%s1131 + $0x3a] sm:$0xff]
        %v2750 = vld [vmem:[%s1131 + $0x4a] sm:$0xff]
        %v2751 = vld [vmem:[%s1131 + $0x52] sm:$0xff]
        %v2752 = vld [vmem:[%s1131 + $0x62] sm:$0xff]
        %v2753 = vld [vmem:[%s1131 + $0x6a] sm:$0xff]
        %v2754 = vld [vmem:[%s1131 + $0x7a] sm:$0xff]
        %v2755 = vld [vmem:[%s1131 + $0x82] sm:$0xff]
        %v2756 = vld [vmem:[%s1131 + $0x92] sm:$0xff]
        %v2757 = vld [vmem:[%s1131 + $0x9a] sm:$0xff]
        %v2758 = vld [vmem:[%s1131 + $0xaa] sm:$0xff]
        %v2759 = vld [vmem:[%s1131 + $0xb2] sm:$0xff]
        %v2760 = vld [vmem:[%s1131 + $0xc2] sm:$0xff]
        %v2761 = vld [vmem:[%s1131 + $0xca] sm:$0xff]
        %v2762 = vld [vmem:[%s1131 + $0xda] sm:$0xff]
        %v2763 = vld [vmem:[%s1131 + $0xe2] sm:$0xff]
        %v2764 = vld [vmem:[%s1131 + $0xf2] sm:$0xff]
        %v2765 = vld [vmem:[%s1131 + $0xfa] sm:$0xff]
        %v2766 = vld [vmem:[%s1131 + $0x10a] sm:$0xff]
        %v2767 = vld [vmem:[%s1131 + $0x112] sm:$0xff]
        %v2768 = vld [vmem:[%s1131 + $0x122] sm:$0xff]
        %v2769 = vld [vmem:[%s1131 + $0x12a] sm:$0xff]
        %v2770 = vld [vmem:[%s1131 + $0x13a] sm:$0xff]
        %v2771 = vld [vmem:[%s1131 + $0x142] sm:$0xff]
        %v2772 = vld [vmem:[%s1131 + $0x152] sm:$0xff]
        %v2773 = vld [vmem:[%s1131 + $0x15a] sm:$0xff]
        %v2774 = vld [vmem:[%s1131 + $0x16a] sm:$0xff]
        %v2775 = vld [vmem:[%s1131 + $0x172] sm:$0xff]
        %v2777 = vlaneseq
        %v2778 = vshrl.u32 %v2777, 7
        %v2779 = vsub.s32 0, %v2778
        %v2780 = vrot.slane %v1506, %v2779
        %v2782 = vmul.f32 %v2744, %v2780
        %v2783 = vmul.f32 %v2745, %v2780
        %v2784 = vmul.f32 %v2746, %v2780
        %v2785 = vmul.f32 %v2747, %v2780
        %v2786 = vmul.f32 %v2748, %v2780
        %v2787 = vmul.f32 %v2749, %v2780
        %v2788 = vmul.f32 %v2750, %v2780
        %v2789 = vmul.f32 %v2751, %v2780
        %v2790 = vmul.f32 %v2752, %v2780
        %v2791 = vmul.f32 %v2753, %v2780
        %v2792 = vmul.f32 %v2754, %v2780
        %v2793 = vmul.f32 %v2755, %v2780
        %v2794 = vmul.f32 %v2756, %v2780
        %v2795 = vmul.f32 %v2757, %v2780
        %v2796 = vmul.f32 %v2758, %v2780
        %v2797 = vmul.f32 %v2759, %v2780
        %v2798 = vmul.f32 %v2760, %v2780
        %v2799 = vmul.f32 %v2761, %v2780
        %v2800 = vmul.f32 %v2762, %v2780
        %v2801 = vmul.f32 %v2763, %v2780
        %v2802 = vmul.f32 %v2764, %v2780
        %v2803 = vmul.f32 %v2765, %v2780
        %v2804 = vmul.f32 %v2766, %v2780
        %v2805 = vmul.f32 %v2767, %v2780
        %v2806 = vmul.f32 %v2768, %v2780
        %v2807 = vmul.f32 %v2769, %v2780
        %v2808 = vmul.f32 %v2770, %v2780
        %v2809 = vmul.f32 %v2771, %v2780
        %v2810 = vmul.f32 %v2772, %v2780
        %v2811 = vmul.f32 %v2773, %v2780
        %v2812 = vmul.f32 %v2774, %v2780
        %v2813 = vmul.f32 %v2775, %v2780
        %v2814 = vadd.f32 %v2712, %v2782
        %v2815 = vadd.f32 %v2713, %v2783
        %v2816 = vadd.f32 %v2714, %v2784
        %v2817 = vadd.f32 %v2715, %v2785
        %v2818 = vadd.f32 %v2716, %v2786
        %v2819 = vadd.f32 %v2717, %v2787
        %v2820 = vadd.f32 %v2718, %v2788
        %v2821 = vadd.f32 %v2719, %v2789
        %v2822 = vadd.f32 %v2720, %v2790
        %v2823 = vadd.f32 %v2721, %v2791
        %v2824 = vadd.f32 %v2722, %v2792
        %v2825 = vadd.f32 %v2723, %v2793
        %v2826 = vadd.f32 %v2724, %v2794
        %v2827 = vadd.f32 %v2725, %v2795
        %v2828 = vadd.f32 %v2726, %v2796
        %v2829 = vadd.f32 %v2727, %v2797
        %v2830 = vadd.f32 %v2728, %v2798
        %v2831 = vadd.f32 %v2729, %v2799
        %v2832 = vadd.f32 %v2730, %v2800
        %v2833 = vadd.f32 %v2731, %v2801
        %v2834 = vadd.f32 %v2732, %v2802
        %v2835 = vadd.f32 %v2733, %v2803
        %v2836 = vadd.f32 %v2734, %v2804
        %v2837 = vadd.f32 %v2735, %v2805
        %v2838 = vadd.f32 %v2736, %v2806
        %v2839 = vadd.f32 %v2737, %v2807
        %v2840 = vadd.f32 %v2738, %v2808
        %v2841 = vadd.f32 %v2739, %v2809
        %v2842 = vadd.f32 %v2740, %v2810
        %v2843 = vadd.f32 %v2741, %v2811
        %v2844 = vadd.f32 %v2742, %v2812
        %v2845 = vadd.f32 %v2743, %v2813
        %v2846 = vld [vmem:[%s1131 + $0x3] sm:$0xff]
        %v2847 = vld [vmem:[%s1131 + $0xb] sm:$0xff]
        %v2848 = vld [vmem:[%s1131 + $0x1b] sm:$0xff]
        %v2849 = vld [vmem:[%s1131 + $0x23] sm:$0xff]
        %v2850 = vld [vmem:[%s1131 + $0x33] sm:$0xff]
        %v2851 = vld [vmem:[%s1131 + $0x3b] sm:$0xff]
        %v2852 = vld [vmem:[%s1131 + $0x4b] sm:$0xff]
        %v2853 = vld [vmem:[%s1131 + $0x53] sm:$0xff]
        %v2854 = vld [vmem:[%s1131 + $0x63] sm:$0xff]
        %v2855 = vld [vmem:[%s1131 + $0x6b] sm:$0xff]
        %v2856 = vld [vmem:[%s1131 + $0x7b] sm:$0xff]
        %v2857 = vld [vmem:[%s1131 + $0x83] sm:$0xff]
        %v2858 = vld [vmem:[%s1131 + $0x93] sm:$0xff]
        %v2859 = vld [vmem:[%s1131 + $0x9b] sm:$0xff]
        %v2860 = vld [vmem:[%s1131 + $0xab] sm:$0xff]
        %v2861 = vld [vmem:[%s1131 + $0xb3] sm:$0xff]
        %v2862 = vld [vmem:[%s1131 + $0xc3] sm:$0xff]
        %v2863 = vld [vmem:[%s1131 + $0xcb] sm:$0xff]
        %v2864 = vld [vmem:[%s1131 + $0xdb] sm:$0xff]
        %v2865 = vld [vmem:[%s1131 + $0xe3] sm:$0xff]
        %v2866 = vld [vmem:[%s1131 + $0xf3] sm:$0xff]
        %v2867 = vld [vmem:[%s1131 + $0xfb] sm:$0xff]
        %v2868 = vld [vmem:[%s1131 + $0x10b] sm:$0xff]
        %v2869 = vld [vmem:[%s1131 + $0x113] sm:$0xff]
        %v2870 = vld [vmem:[%s1131 + $0x123] sm:$0xff]
        %v2871 = vld [vmem:[%s1131 + $0x12b] sm:$0xff]
        %v2872 = vld [vmem:[%s1131 + $0x13b] sm:$0xff]
        %v2873 = vld [vmem:[%s1131 + $0x143] sm:$0xff]
        %v2874 = vld [vmem:[%s1131 + $0x153] sm:$0xff]
        %v2875 = vld [vmem:[%s1131 + $0x15b] sm:$0xff]
        %v2876 = vld [vmem:[%s1131 + $0x16b] sm:$0xff]
        %v2877 = vld [vmem:[%s1131 + $0x173] sm:$0xff]
        %v2879 = vlaneseq
        %v2880 = vshrl.u32 %v2879, 7
        %v2881 = vsub.s32 0, %v2880
        %v2882 = vrot.slane %v1507, %v2881
        %v2884 = vmul.f32 %v2846, %v2882
        %v2885 = vmul.f32 %v2847, %v2882
        %v2886 = vmul.f32 %v2848, %v2882
        %v2887 = vmul.f32 %v2849, %v2882
        %v2888 = vmul.f32 %v2850, %v2882
        %v2889 = vmul.f32 %v2851, %v2882
        %v2890 = vmul.f32 %v2852, %v2882
        %v2891 = vmul.f32 %v2853, %v2882
        %v2892 = vmul.f32 %v2854, %v2882
        %v2893 = vmul.f32 %v2855, %v2882
        %v2894 = vmul.f32 %v2856, %v2882
        %v2895 = vmul.f32 %v2857, %v2882
        %v2896 = vmul.f32 %v2858, %v2882
        %v2897 = vmul.f32 %v2859, %v2882
        %v2898 = vmul.f32 %v2860, %v2882
        %v2899 = vmul.f32 %v2861, %v2882
        %v2900 = vmul.f32 %v2862, %v2882
        %v2901 = vmul.f32 %v2863, %v2882
        %v2902 = vmul.f32 %v2864, %v2882
        %v2903 = vmul.f32 %v2865, %v2882
        %v2904 = vmul.f32 %v2866, %v2882
        %v2905 = vmul.f32 %v2867, %v2882
        %v2906 = vmul.f32 %v2868, %v2882
        %v2907 = vmul.f32 %v2869, %v2882
        %v2908 = vmul.f32 %v2870, %v2882
        %v2909 = vmul.f32 %v2871, %v2882
        %v2910 = vmul.f32 %v2872, %v2882
        %v2911 = vmul.f32 %v2873, %v2882
        %v2912 = vmul.f32 %v2874, %v2882
        %v2913 = vmul.f32 %v2875, %v2882
        %v2914 = vmul.f32 %v2876, %v2882
        %v2915 = vmul.f32 %v2877, %v2882
        %v2916 = vadd.f32 %v2814, %v2884
        %v2917 = vadd.f32 %v2815, %v2885
        %v2918 = vadd.f32 %v2816, %v2886
        %v2919 = vadd.f32 %v2817, %v2887
        %v2920 = vadd.f32 %v2818, %v2888
        %v2921 = vadd.f32 %v2819, %v2889
        %v2922 = vadd.f32 %v2820, %v2890
        %v2923 = vadd.f32 %v2821, %v2891
        %v2924 = vadd.f32 %v2822, %v2892
        %v2925 = vadd.f32 %v2823, %v2893
        %v2926 = vadd.f32 %v2824, %v2894
        %v2927 = vadd.f32 %v2825, %v2895
        %v2928 = vadd.f32 %v2826, %v2896
        %v2929 = vadd.f32 %v2827, %v2897
        %v2930 = vadd.f32 %v2828, %v2898
        %v2931 = vadd.f32 %v2829, %v2899
        %v2932 = vadd.f32 %v2830, %v2900
        %v2933 = vadd.f32 %v2831, %v2901
        %v2934 = vadd.f32 %v2832, %v2902
        %v2935 = vadd.f32 %v2833, %v2903
        %v2936 = vadd.f32 %v2834, %v2904
        %v2937 = vadd.f32 %v2835, %v2905
        %v2938 = vadd.f32 %v2836, %v2906
        %v2939 = vadd.f32 %v2837, %v2907
        %v2940 = vadd.f32 %v2838, %v2908
        %v2941 = vadd.f32 %v2839, %v2909
        %v2942 = vadd.f32 %v2840, %v2910
        %v2943 = vadd.f32 %v2841, %v2911
        %v2944 = vadd.f32 %v2842, %v2912
        %v2945 = vadd.f32 %v2843, %v2913
        %v2946 = vadd.f32 %v2844, %v2914
        %v2947 = vadd.f32 %v2845, %v2915
        %v2948 = vld [vmem:[%s1131 + $0x4] sm:$0xff]
        %v2949 = vld [vmem:[%s1131 + $0xc] sm:$0xff]
        %v2950 = vld [vmem:[%s1131 + $0x1c] sm:$0xff]
        %v2951 = vld [vmem:[%s1131 + $0x24] sm:$0xff]
        %v2952 = vld [vmem:[%s1131 + $0x34] sm:$0xff]
        %v2953 = vld [vmem:[%s1131 + $0x3c] sm:$0xff]
        %v2954 = vld [vmem:[%s1131 + $0x4c] sm:$0xff]
        %v2955 = vld [vmem:[%s1131 + $0x54] sm:$0xff]
        %v2956 = vld [vmem:[%s1131 + $0x64] sm:$0xff]
        %v2957 = vld [vmem:[%s1131 + $0x6c] sm:$0xff]
        %v2958 = vld [vmem:[%s1131 + $0x7c] sm:$0xff]
        %v2959 = vld [vmem:[%s1131 + $0x84] sm:$0xff]
        %v2960 = vld [vmem:[%s1131 + $0x94] sm:$0xff]
        %v2961 = vld [vmem:[%s1131 + $0x9c] sm:$0xff]
        %v2962 = vld [vmem:[%s1131 + $0xac] sm:$0xff]
        %v2963 = vld [vmem:[%s1131 + $0xb4] sm:$0xff]
        %v2964 = vld [vmem:[%s1131 + $0xc4] sm:$0xff]
        %v2965 = vld [vmem:[%s1131 + $0xcc] sm:$0xff]
        %v2966 = vld [vmem:[%s1131 + $0xdc] sm:$0xff]
        %v2967 = vld [vmem:[%s1131 + $0xe4] sm:$0xff]
        %v2968 = vld [vmem:[%s1131 + $0xf4] sm:$0xff]
        %v2969 = vld [vmem:[%s1131 + $0xfc] sm:$0xff]
        %v2970 = vld [vmem:[%s1131 + $0x10c] sm:$0xff]
        %v2971 = vld [vmem:[%s1131 + $0x114] sm:$0xff]
        %v2972 = vld [vmem:[%s1131 + $0x124] sm:$0xff]
        %v2973 = vld [vmem:[%s1131 + $0x12c] sm:$0xff]
        %v2974 = vld [vmem:[%s1131 + $0x13c] sm:$0xff]
        %v2975 = vld [vmem:[%s1131 + $0x144] sm:$0xff]
        %v2976 = vld [vmem:[%s1131 + $0x154] sm:$0xff]
        %v2977 = vld [vmem:[%s1131 + $0x15c] sm:$0xff]
        %v2978 = vld [vmem:[%s1131 + $0x16c] sm:$0xff]
        %v2979 = vld [vmem:[%s1131 + $0x174] sm:$0xff]
        %v2981 = vlaneseq
        %v2982 = vshrl.u32 %v2981, 7
        %v2983 = vsub.s32 0, %v2982
        %v2984 = vrot.slane %v1508, %v2983
        %v2986 = vmul.f32 %v2948, %v2984
        %v2987 = vmul.f32 %v2949, %v2984
        %v2988 = vmul.f32 %v2950, %v2984
        %v2989 = vmul.f32 %v2951, %v2984
        %v2990 = vmul.f32 %v2952, %v2984
        %v2991 = vmul.f32 %v2953, %v2984
        %v2992 = vmul.f32 %v2954, %v2984
        %v2993 = vmul.f32 %v2955, %v2984
        %v2994 = vmul.f32 %v2956, %v2984
        %v2995 = vmul.f32 %v2957, %v2984
        %v2996 = vmul.f32 %v2958, %v2984
        %v2997 = vmul.f32 %v2959, %v2984
        %v2998 = vmul.f32 %v2960, %v2984
        %v2999 = vmul.f32 %v2961, %v2984
        %v3000 = vmul.f32 %v2962, %v2984
        %v3001 = vmul.f32 %v2963, %v2984
        %v3002 = vmul.f32 %v2964, %v2984
        %v3003 = vmul.f32 %v2965, %v2984
        %v3004 = vmul.f32 %v2966, %v2984
        %v3005 = vmul.f32 %v2967, %v2984
        %v3006 = vmul.f32 %v2968, %v2984
        %v3007 = vmul.f32 %v2969, %v2984
        %v3008 = vmul.f32 %v2970, %v2984
        %v3009 = vmul.f32 %v2971, %v2984
        %v3010 = vmul.f32 %v2972, %v2984
        %v3011 = vmul.f32 %v2973, %v2984
        %v3012 = vmul.f32 %v2974, %v2984
        %v3013 = vmul.f32 %v2975, %v2984
        %v3014 = vmul.f32 %v2976, %v2984
        %v3015 = vmul.f32 %v2977, %v2984
        %v3016 = vmul.f32 %v2978, %v2984
        %v3017 = vmul.f32 %v2979, %v2984
        %v3018 = vadd.f32 %v2916, %v2986
        %v3019 = vadd.f32 %v2917, %v2987
        %v3020 = vadd.f32 %v2918, %v2988
        %v3021 = vadd.f32 %v2919, %v2989
        %v3022 = vadd.f32 %v2920, %v2990
        %v3023 = vadd.f32 %v2921, %v2991
        %v3024 = vadd.f32 %v2922, %v2992
        %v3025 = vadd.f32 %v2923, %v2993
        %v3026 = vadd.f32 %v2924, %v2994
        %v3027 = vadd.f32 %v2925, %v2995
        %v3028 = vadd.f32 %v2926, %v2996
        %v3029 = vadd.f32 %v2927, %v2997
        %v3030 = vadd.f32 %v2928, %v2998
        %v3031 = vadd.f32 %v2929, %v2999
        %v3032 = vadd.f32 %v2930, %v3000
        %v3033 = vadd.f32 %v2931, %v3001
        %v3034 = vadd.f32 %v2932, %v3002
        %v3035 = vadd.f32 %v2933, %v3003
        %v3036 = vadd.f32 %v2934, %v3004
        %v3037 = vadd.f32 %v2935, %v3005
        %v3038 = vadd.f32 %v2936, %v3006
        %v3039 = vadd.f32 %v2937, %v3007
        %v3040 = vadd.f32 %v2938, %v3008
        %v3041 = vadd.f32 %v2939, %v3009
        %v3042 = vadd.f32 %v2940, %v3010
        %v3043 = vadd.f32 %v2941, %v3011
        %v3044 = vadd.f32 %v2942, %v3012
        %v3045 = vadd.f32 %v2943, %v3013
        %v3046 = vadd.f32 %v2944, %v3014
        %v3047 = vadd.f32 %v2945, %v3015
        %v3048 = vadd.f32 %v2946, %v3016
        %v3049 = vadd.f32 %v2947, %v3017
        %s3050 = scalar_lea.vmem [#allocation2], 72
        %v3051 = vld [vmem:[%s3050] sm:$0xff]
        %v3052 = vld [vmem:[%s3050 + $0x8] sm:$0xff]
        %v3053 = vld [vmem:[%s3050 + $0x18] sm:$0xff]
        %v3054 = vld [vmem:[%s3050 + $0x20] sm:$0xff]
        %v3055 = vld [vmem:[%s3050 + $0x30] sm:$0xff]
        %v3056 = vld [vmem:[%s3050 + $0x38] sm:$0xff]
        %v3057 = vld [vmem:[%s3050 + $0x48] sm:$0xff]
        %v3058 = vld [vmem:[%s3050 + $0x50] sm:$0xff]
        %v3059 = vld [vmem:[%s3050 + $0x60] sm:$0xff]
        %v3060 = vld [vmem:[%s3050 + $0x68] sm:$0xff]
        %v3061 = vld [vmem:[%s3050 + $0x78] sm:$0xff]
        %v3062 = vld [vmem:[%s3050 + $0x80] sm:$0xff]
        %v3063 = vld [vmem:[%s3050 + $0x90] sm:$0xff]
        %v3064 = vld [vmem:[%s3050 + $0x98] sm:$0xff]
        %v3065 = vld [vmem:[%s3050 + $0xa8] sm:$0xff]
        %v3066 = vld [vmem:[%s3050 + $0xb0] sm:$0xff]
        %v3067 = vld [vmem:[%s3050 + $0xc0] sm:$0xff]
        %v3068 = vld [vmem:[%s3050 + $0xc8] sm:$0xff]
        %v3069 = vld [vmem:[%s3050 + $0xd8] sm:$0xff]
        %v3070 = vld [vmem:[%s3050 + $0xe0] sm:$0xff]
        %v3071 = vld [vmem:[%s3050 + $0xf0] sm:$0xff]
        %v3072 = vld [vmem:[%s3050 + $0xf8] sm:$0xff]
        %v3073 = vld [vmem:[%s3050 + $0x108] sm:$0xff]
        %v3074 = vld [vmem:[%s3050 + $0x110] sm:$0xff]
        %v3075 = vld [vmem:[%s3050 + $0x120] sm:$0xff]
        %v3076 = vld [vmem:[%s3050 + $0x128] sm:$0xff]
        %v3077 = vld [vmem:[%s3050 + $0x138] sm:$0xff]
        %v3078 = vld [vmem:[%s3050 + $0x140] sm:$0xff]
        %v3079 = vld [vmem:[%s3050 + $0x150] sm:$0xff]
        %v3080 = vld [vmem:[%s3050 + $0x158] sm:$0xff]
        %v3081 = vld [vmem:[%s3050 + $0x168] sm:$0xff]
        %v3082 = vld [vmem:[%s3050 + $0x170] sm:$0xff]
        %v3084 = vlaneseq
        %v3085 = vshrl.u32 %v3084, 7
        %v3086 = vsub.s32 0, %v3085
        %v3087 = vrot.slane %v1509, %v3086
        %v3089 = vmul.f32 %v3051, %v3087
        %v3090 = vmul.f32 %v3052, %v3087
        %v3091 = vmul.f32 %v3053, %v3087
        %v3092 = vmul.f32 %v3054, %v3087
        %v3093 = vmul.f32 %v3055, %v3087
        %v3094 = vmul.f32 %v3056, %v3087
        %v3095 = vmul.f32 %v3057, %v3087
        %v3096 = vmul.f32 %v3058, %v3087
        %v3097 = vmul.f32 %v3059, %v3087
        %v3098 = vmul.f32 %v3060, %v3087
        %v3099 = vmul.f32 %v3061, %v3087
        %v3100 = vmul.f32 %v3062, %v3087
        %v3101 = vmul.f32 %v3063, %v3087
        %v3102 = vmul.f32 %v3064, %v3087
        %v3103 = vmul.f32 %v3065, %v3087
        %v3104 = vmul.f32 %v3066, %v3087
        %v3105 = vmul.f32 %v3067, %v3087
        %v3106 = vmul.f32 %v3068, %v3087
        %v3107 = vmul.f32 %v3069, %v3087
        %v3108 = vmul.f32 %v3070, %v3087
        %v3109 = vmul.f32 %v3071, %v3087
        %v3110 = vmul.f32 %v3072, %v3087
        %v3111 = vmul.f32 %v3073, %v3087
        %v3112 = vmul.f32 %v3074, %v3087
        %v3113 = vmul.f32 %v3075, %v3087
        %v3114 = vmul.f32 %v3076, %v3087
        %v3115 = vmul.f32 %v3077, %v3087
        %v3116 = vmul.f32 %v3078, %v3087
        %v3117 = vmul.f32 %v3079, %v3087
        %v3118 = vmul.f32 %v3080, %v3087
        %v3119 = vmul.f32 %v3081, %v3087
        %v3120 = vmul.f32 %v3082, %v3087
        %v3121 = vadd.f32 %v3018, %v3089
        %v3122 = vadd.f32 %v3019, %v3090
        %v3123 = vadd.f32 %v3020, %v3091
        %v3124 = vadd.f32 %v3021, %v3092
        %v3125 = vadd.f32 %v3022, %v3093
        %v3126 = vadd.f32 %v3023, %v3094
        %v3127 = vadd.f32 %v3024, %v3095
        %v3128 = vadd.f32 %v3025, %v3096
        %v3129 = vadd.f32 %v3026, %v3097
        %v3130 = vadd.f32 %v3027, %v3098
        %v3131 = vadd.f32 %v3028, %v3099
        %v3132 = vadd.f32 %v3029, %v3100
        %v3133 = vadd.f32 %v3030, %v3101
        %v3134 = vadd.f32 %v3031, %v3102
        %v3135 = vadd.f32 %v3032, %v3103
        %v3136 = vadd.f32 %v3033, %v3104
        %v3137 = vadd.f32 %v3034, %v3105
        %v3138 = vadd.f32 %v3035, %v3106
        %v3139 = vadd.f32 %v3036, %v3107
        %v3140 = vadd.f32 %v3037, %v3108
        %v3141 = vadd.f32 %v3038, %v3109
        %v3142 = vadd.f32 %v3039, %v3110
        %v3143 = vadd.f32 %v3040, %v3111
        %v3144 = vadd.f32 %v3041, %v3112
        %v3145 = vadd.f32 %v3042, %v3113
        %v3146 = vadd.f32 %v3043, %v3114
        %v3147 = vadd.f32 %v3044, %v3115
        %v3148 = vadd.f32 %v3045, %v3116
        %v3149 = vadd.f32 %v3046, %v3117
        %v3150 = vadd.f32 %v3047, %v3118
        %v3151 = vadd.f32 %v3048, %v3119
        %v3152 = vadd.f32 %v3049, %v3120
        %v3153 = vld [vmem:[%s3050 + $0x1] sm:$0xff]
        %v3154 = vld [vmem:[%s3050 + $0x9] sm:$0xff]
        %v3155 = vld [vmem:[%s3050 + $0x19] sm:$0xff]
        %v3156 = vld [vmem:[%s3050 + $0x21] sm:$0xff]
        %v3157 = vld [vmem:[%s3050 + $0x31] sm:$0xff]
        %v3158 = vld [vmem:[%s3050 + $0x39] sm:$0xff]
        %v3159 = vld [vmem:[%s3050 + $0x49] sm:$0xff]
        %v3160 = vld [vmem:[%s3050 + $0x51] sm:$0xff]
        %v3161 = vld [vmem:[%s3050 + $0x61] sm:$0xff]
        %v3162 = vld [vmem:[%s3050 + $0x69] sm:$0xff]
        %v3163 = vld [vmem:[%s3050 + $0x79] sm:$0xff]
        %v3164 = vld [vmem:[%s3050 + $0x81] sm:$0xff]
        %v3165 = vld [vmem:[%s3050 + $0x91] sm:$0xff]
        %v3166 = vld [vmem:[%s3050 + $0x99] sm:$0xff]
        %v3167 = vld [vmem:[%s3050 + $0xa9] sm:$0xff]
        %v3168 = vld [vmem:[%s3050 + $0xb1] sm:$0xff]
        %v3169 = vld [vmem:[%s3050 + $0xc1] sm:$0xff]
        %v3170 = vld [vmem:[%s3050 + $0xc9] sm:$0xff]
        %v3171 = vld [vmem:[%s3050 + $0xd9] sm:$0xff]
        %v3172 = vld [vmem:[%s3050 + $0xe1] sm:$0xff]
        %v3173 = vld [vmem:[%s3050 + $0xf1] sm:$0xff]
        %v3174 = vld [vmem:[%s3050 + $0xf9] sm:$0xff]
        %v3175 = vld [vmem:[%s3050 + $0x109] sm:$0xff]
        %v3176 = vld [vmem:[%s3050 + $0x111] sm:$0xff]
        %v3177 = vld [vmem:[%s3050 + $0x121] sm:$0xff]
        %v3178 = vld [vmem:[%s3050 + $0x129] sm:$0xff]
        %v3179 = vld [vmem:[%s3050 + $0x139] sm:$0xff]
        %v3180 = vld [vmem:[%s3050 + $0x141] sm:$0xff]
        %v3181 = vld [vmem:[%s3050 + $0x151] sm:$0xff]
        %v3182 = vld [vmem:[%s3050 + $0x159] sm:$0xff]
        %v3183 = vld [vmem:[%s3050 + $0x169] sm:$0xff]
        %v3184 = vld [vmem:[%s3050 + $0x171] sm:$0xff]
        %v3186 = vlaneseq
        %v3187 = vshrl.u32 %v3186, 7
        %v3188 = vsub.s32 0, %v3187
        %v3189 = vrot.slane %v1510, %v3188
        %v3191 = vmul.f32 %v3153, %v3189
        %v3192 = vmul.f32 %v3154, %v3189
        %v3193 = vmul.f32 %v3155, %v3189
        %v3194 = vmul.f32 %v3156, %v3189
        %v3195 = vmul.f32 %v3157, %v3189
        %v3196 = vmul.f32 %v3158, %v3189
        %v3197 = vmul.f32 %v3159, %v3189
        %v3198 = vmul.f32 %v3160, %v3189
        %v3199 = vmul.f32 %v3161, %v3189
        %v3200 = vmul.f32 %v3162, %v3189
        %v3201 = vmul.f32 %v3163, %v3189
        %v3202 = vmul.f32 %v3164, %v3189
        %v3203 = vmul.f32 %v3165, %v3189
        %v3204 = vmul.f32 %v3166, %v3189
        %v3205 = vmul.f32 %v3167, %v3189
        %v3206 = vmul.f32 %v3168, %v3189
        %v3207 = vmul.f32 %v3169, %v3189
        %v3208 = vmul.f32 %v3170, %v3189
        %v3209 = vmul.f32 %v3171, %v3189
        %v3210 = vmul.f32 %v3172, %v3189
        %v3211 = vmul.f32 %v3173, %v3189
        %v3212 = vmul.f32 %v3174, %v3189
        %v3213 = vmul.f32 %v3175, %v3189
        %v3214 = vmul.f32 %v3176, %v3189
        %v3215 = vmul.f32 %v3177, %v3189
        %v3216 = vmul.f32 %v3178, %v3189
        %v3217 = vmul.f32 %v3179, %v3189
        %v3218 = vmul.f32 %v3180, %v3189
        %v3219 = vmul.f32 %v3181, %v3189
        %v3220 = vmul.f32 %v3182, %v3189
        %v3221 = vmul.f32 %v3183, %v3189
        %v3222 = vmul.f32 %v3184, %v3189
        %v3223 = vadd.f32 %v3121, %v3191
        %v3224 = vadd.f32 %v3122, %v3192
        %v3225 = vadd.f32 %v3123, %v3193
        %v3226 = vadd.f32 %v3124, %v3194
        %v3227 = vadd.f32 %v3125, %v3195
        %v3228 = vadd.f32 %v3126, %v3196
        %v3229 = vadd.f32 %v3127, %v3197
        %v3230 = vadd.f32 %v3128, %v3198
        %v3231 = vadd.f32 %v3129, %v3199
        %v3232 = vadd.f32 %v3130, %v3200
        %v3233 = vadd.f32 %v3131, %v3201
        %v3234 = vadd.f32 %v3132, %v3202
        %v3235 = vadd.f32 %v3133, %v3203
        %v3236 = vadd.f32 %v3134, %v3204
        %v3237 = vadd.f32 %v3135, %v3205
        %v3238 = vadd.f32 %v3136, %v3206
        %v3239 = vadd.f32 %v3137, %v3207
        %v3240 = vadd.f32 %v3138, %v3208
        %v3241 = vadd.f32 %v3139, %v3209
        %v3242 = vadd.f32 %v3140, %v3210
        %v3243 = vadd.f32 %v3141, %v3211
        %v3244 = vadd.f32 %v3142, %v3212
        %v3245 = vadd.f32 %v3143, %v3213
        %v3246 = vadd.f32 %v3144, %v3214
        %v3247 = vadd.f32 %v3145, %v3215
        %v3248 = vadd.f32 %v3146, %v3216
        %v3249 = vadd.f32 %v3147, %v3217
        %v3250 = vadd.f32 %v3148, %v3218
        %v3251 = vadd.f32 %v3149, %v3219
        %v3252 = vadd.f32 %v3150, %v3220
        %v3253 = vadd.f32 %v3151, %v3221
        %v3254 = vadd.f32 %v3152, %v3222
        %v3255 = vld [vmem:[%s3050 + $0x2] sm:$0xff]
        %v3256 = vld [vmem:[%s3050 + $0xa] sm:$0xff]
        %v3257 = vld [vmem:[%s3050 + $0x1a] sm:$0xff]
        %v3258 = vld [vmem:[%s3050 + $0x22] sm:$0xff]
        %v3259 = vld [vmem:[%s3050 + $0x32] sm:$0xff]
        %v3260 = vld [vmem:[%s3050 + $0x3a] sm:$0xff]
        %v3261 = vld [vmem:[%s3050 + $0x4a] sm:$0xff]
        %v3262 = vld [vmem:[%s3050 + $0x52] sm:$0xff]
        %v3263 = vld [vmem:[%s3050 + $0x62] sm:$0xff]
        %v3264 = vld [vmem:[%s3050 + $0x6a] sm:$0xff]
        %v3265 = vld [vmem:[%s3050 + $0x7a] sm:$0xff]
        %v3266 = vld [vmem:[%s3050 + $0x82] sm:$0xff]
        %v3267 = vld [vmem:[%s3050 + $0x92] sm:$0xff]
        %v3268 = vld [vmem:[%s3050 + $0x9a] sm:$0xff]
        %v3269 = vld [vmem:[%s3050 + $0xaa] sm:$0xff]
        %v3270 = vld [vmem:[%s3050 + $0xb2] sm:$0xff]
        %v3271 = vld [vmem:[%s3050 + $0xc2] sm:$0xff]
        %v3272 = vld [vmem:[%s3050 + $0xca] sm:$0xff]
        %v3273 = vld [vmem:[%s3050 + $0xda] sm:$0xff]
        %v3274 = vld [vmem:[%s3050 + $0xe2] sm:$0xff]
        %v3275 = vld [vmem:[%s3050 + $0xf2] sm:$0xff]
        %v3276 = vld [vmem:[%s3050 + $0xfa] sm:$0xff]
        %v3277 = vld [vmem:[%s3050 + $0x10a] sm:$0xff]
        %v3278 = vld [vmem:[%s3050 + $0x112] sm:$0xff]
        %v3279 = vld [vmem:[%s3050 + $0x122] sm:$0xff]
        %v3280 = vld [vmem:[%s3050 + $0x12a] sm:$0xff]
        %v3281 = vld [vmem:[%s3050 + $0x13a] sm:$0xff]
        %v3282 = vld [vmem:[%s3050 + $0x142] sm:$0xff]
        %v3283 = vld [vmem:[%s3050 + $0x152] sm:$0xff]
        %v3284 = vld [vmem:[%s3050 + $0x15a] sm:$0xff]
        %v3285 = vld [vmem:[%s3050 + $0x16a] sm:$0xff]
        %v3286 = vld [vmem:[%s3050 + $0x172] sm:$0xff]
        %v3288 = vlaneseq
        %v3289 = vshrl.u32 %v3288, 7
        %v3290 = vsub.s32 0, %v3289
        %v3291 = vrot.slane %v1511, %v3290
        %v3293 = vmul.f32 %v3255, %v3291
        %v3294 = vmul.f32 %v3256, %v3291
        %v3295 = vmul.f32 %v3257, %v3291
        %v3296 = vmul.f32 %v3258, %v3291
        %v3297 = vmul.f32 %v3259, %v3291
        %v3298 = vmul.f32 %v3260, %v3291
        %v3299 = vmul.f32 %v3261, %v3291
        %v3300 = vmul.f32 %v3262, %v3291
        %v3301 = vmul.f32 %v3263, %v3291
        %v3302 = vmul.f32 %v3264, %v3291
        %v3303 = vmul.f32 %v3265, %v3291
        %v3304 = vmul.f32 %v3266, %v3291
        %v3305 = vmul.f32 %v3267, %v3291
        %v3306 = vmul.f32 %v3268, %v3291
        %v3307 = vmul.f32 %v3269, %v3291
        %v3308 = vmul.f32 %v3270, %v3291
        %v3309 = vmul.f32 %v3271, %v3291
        %v3310 = vmul.f32 %v3272, %v3291
        %v3311 = vmul.f32 %v3273, %v3291
        %v3312 = vmul.f32 %v3274, %v3291
        %v3313 = vmul.f32 %v3275, %v3291
        %v3314 = vmul.f32 %v3276, %v3291
        %v3315 = vmul.f32 %v3277, %v3291
        %v3316 = vmul.f32 %v3278, %v3291
        %v3317 = vmul.f32 %v3279, %v3291
        %v3318 = vmul.f32 %v3280, %v3291
        %v3319 = vmul.f32 %v3281, %v3291
        %v3320 = vmul.f32 %v3282, %v3291
        %v3321 = vmul.f32 %v3283, %v3291
        %v3322 = vmul.f32 %v3284, %v3291
        %v3323 = vmul.f32 %v3285, %v3291
        %v3324 = vmul.f32 %v3286, %v3291
        %v3325 = vadd.f32 %v3223, %v3293
        %v3326 = vadd.f32 %v3224, %v3294
        %v3327 = vadd.f32 %v3225, %v3295
        %v3328 = vadd.f32 %v3226, %v3296
        %v3329 = vadd.f32 %v3227, %v3297
        %v3330 = vadd.f32 %v3228, %v3298
        %v3331 = vadd.f32 %v3229, %v3299
        %v3332 = vadd.f32 %v3230, %v3300
        %v3333 = vadd.f32 %v3231, %v3301
        %v3334 = vadd.f32 %v3232, %v3302
        %v3335 = vadd.f32 %v3233, %v3303
        %v3336 = vadd.f32 %v3234, %v3304
        %v3337 = vadd.f32 %v3235, %v3305
        %v3338 = vadd.f32 %v3236, %v3306
        %v3339 = vadd.f32 %v3237, %v3307
        %v3340 = vadd.f32 %v3238, %v3308
        %v3341 = vadd.f32 %v3239, %v3309
        %v3342 = vadd.f32 %v3240, %v3310
        %v3343 = vadd.f32 %v3241, %v3311
        %v3344 = vadd.f32 %v3242, %v3312
        %v3345 = vadd.f32 %v3243, %v3313
        %v3346 = vadd.f32 %v3244, %v3314
        %v3347 = vadd.f32 %v3245, %v3315
        %v3348 = vadd.f32 %v3246, %v3316
        %v3349 = vadd.f32 %v3247, %v3317
        %v3350 = vadd.f32 %v3248, %v3318
        %v3351 = vadd.f32 %v3249, %v3319
        %v3352 = vadd.f32 %v3250, %v3320
        %v3353 = vadd.f32 %v3251, %v3321
        %v3354 = vadd.f32 %v3252, %v3322
        %v3355 = vadd.f32 %v3253, %v3323
        %v3356 = vadd.f32 %v3254, %v3324
        %v3357 = vld [vmem:[%s3050 + $0x3] sm:$0xff]
        %v3358 = vld [vmem:[%s3050 + $0xb] sm:$0xff]
        %v3359 = vld [vmem:[%s3050 + $0x1b] sm:$0xff]
        %v3360 = vld [vmem:[%s3050 + $0x23] sm:$0xff]
        %v3361 = vld [vmem:[%s3050 + $0x33] sm:$0xff]
        %v3362 = vld [vmem:[%s3050 + $0x3b] sm:$0xff]
        %v3363 = vld [vmem:[%s3050 + $0x4b] sm:$0xff]
        %v3364 = vld [vmem:[%s3050 + $0x53] sm:$0xff]
        %v3365 = vld [vmem:[%s3050 + $0x63] sm:$0xff]
        %v3366 = vld [vmem:[%s3050 + $0x6b] sm:$0xff]
        %v3367 = vld [vmem:[%s3050 + $0x7b] sm:$0xff]
        %v3368 = vld [vmem:[%s3050 + $0x83] sm:$0xff]
        %v3369 = vld [vmem:[%s3050 + $0x93] sm:$0xff]
        %v3370 = vld [vmem:[%s3050 + $0x9b] sm:$0xff]
        %v3371 = vld [vmem:[%s3050 + $0xab] sm:$0xff]
        %v3372 = vld [vmem:[%s3050 + $0xb3] sm:$0xff]
        %v3373 = vld [vmem:[%s3050 + $0xc3] sm:$0xff]
        %v3374 = vld [vmem:[%s3050 + $0xcb] sm:$0xff]
        %v3375 = vld [vmem:[%s3050 + $0xdb] sm:$0xff]
        %v3376 = vld [vmem:[%s3050 + $0xe3] sm:$0xff]
        %v3377 = vld [vmem:[%s3050 + $0xf3] sm:$0xff]
        %v3378 = vld [vmem:[%s3050 + $0xfb] sm:$0xff]
        %v3379 = vld [vmem:[%s3050 + $0x10b] sm:$0xff]
        %v3380 = vld [vmem:[%s3050 + $0x113] sm:$0xff]
        %v3381 = vld [vmem:[%s3050 + $0x123] sm:$0xff]
        %v3382 = vld [vmem:[%s3050 + $0x12b] sm:$0xff]
        %v3383 = vld [vmem:[%s3050 + $0x13b] sm:$0xff]
        %v3384 = vld [vmem:[%s3050 + $0x143] sm:$0xff]
        %v3385 = vld [vmem:[%s3050 + $0x153] sm:$0xff]
        %v3386 = vld [vmem:[%s3050 + $0x15b] sm:$0xff]
        %v3387 = vld [vmem:[%s3050 + $0x16b] sm:$0xff]
        %v3388 = vld [vmem:[%s3050 + $0x173] sm:$0xff]
        %v3390 = vlaneseq
        %v3391 = vshrl.u32 %v3390, 7
        %v3392 = vsub.s32 0, %v3391
        %v3393 = vrot.slane %v1512, %v3392
        %v3395 = vmul.f32 %v3357, %v3393
        %v3396 = vmul.f32 %v3358, %v3393
        %v3397 = vmul.f32 %v3359, %v3393
        %v3398 = vmul.f32 %v3360, %v3393
        %v3399 = vmul.f32 %v3361, %v3393
        %v3400 = vmul.f32 %v3362, %v3393
        %v3401 = vmul.f32 %v3363, %v3393
        %v3402 = vmul.f32 %v3364, %v3393
        %v3403 = vmul.f32 %v3365, %v3393
        %v3404 = vmul.f32 %v3366, %v3393
        %v3405 = vmul.f32 %v3367, %v3393
        %v3406 = vmul.f32 %v3368, %v3393
        %v3407 = vmul.f32 %v3369, %v3393
        %v3408 = vmul.f32 %v3370, %v3393
        %v3409 = vmul.f32 %v3371, %v3393
        %v3410 = vmul.f32 %v3372, %v3393
        %v3411 = vmul.f32 %v3373, %v3393
        %v3412 = vmul.f32 %v3374, %v3393
        %v3413 = vmul.f32 %v3375, %v3393
        %v3414 = vmul.f32 %v3376, %v3393
        %v3415 = vmul.f32 %v3377, %v3393
        %v3416 = vmul.f32 %v3378, %v3393
        %v3417 = vmul.f32 %v3379, %v3393
        %v3418 = vmul.f32 %v3380, %v3393
        %v3419 = vmul.f32 %v3381, %v3393
        %v3420 = vmul.f32 %v3382, %v3393
        %v3421 = vmul.f32 %v3383, %v3393
        %v3422 = vmul.f32 %v3384, %v3393
        %v3423 = vmul.f32 %v3385, %v3393
        %v3424 = vmul.f32 %v3386, %v3393
        %v3425 = vmul.f32 %v3387, %v3393
        %v3426 = vmul.f32 %v3388, %v3393
        %v3427 = vadd.f32 %v3325, %v3395
        %v3428 = vadd.f32 %v3326, %v3396
        %v3429 = vadd.f32 %v3327, %v3397
        %v3430 = vadd.f32 %v3328, %v3398
        %v3431 = vadd.f32 %v3329, %v3399
        %v3432 = vadd.f32 %v3330, %v3400
        %v3433 = vadd.f32 %v3331, %v3401
        %v3434 = vadd.f32 %v3332, %v3402
        %v3435 = vadd.f32 %v3333, %v3403
        %v3436 = vadd.f32 %v3334, %v3404
        %v3437 = vadd.f32 %v3335, %v3405
        %v3438 = vadd.f32 %v3336, %v3406
        %v3439 = vadd.f32 %v3337, %v3407
        %v3440 = vadd.f32 %v3338, %v3408
        %v3441 = vadd.f32 %v3339, %v3409
        %v3442 = vadd.f32 %v3340, %v3410
        %v3443 = vadd.f32 %v3341, %v3411
        %v3444 = vadd.f32 %v3342, %v3412
        %v3445 = vadd.f32 %v3343, %v3413
        %v3446 = vadd.f32 %v3344, %v3414
        %v3447 = vadd.f32 %v3345, %v3415
        %v3448 = vadd.f32 %v3346, %v3416
        %v3449 = vadd.f32 %v3347, %v3417
        %v3450 = vadd.f32 %v3348, %v3418
        %v3451 = vadd.f32 %v3349, %v3419
        %v3452 = vadd.f32 %v3350, %v3420
        %v3453 = vadd.f32 %v3351, %v3421
        %v3454 = vadd.f32 %v3352, %v3422
        %v3455 = vadd.f32 %v3353, %v3423
        %v3456 = vadd.f32 %v3354, %v3424
        %v3457 = vadd.f32 %v3355, %v3425
        %v3458 = vadd.f32 %v3356, %v3426
        %v3459 = vld [vmem:[%s3050 + $0x4] sm:$0xff]
        %v3460 = vld [vmem:[%s3050 + $0xc] sm:$0xff]
        %v3461 = vld [vmem:[%s3050 + $0x1c] sm:$0xff]
        %v3462 = vld [vmem:[%s3050 + $0x24] sm:$0xff]
        %v3463 = vld [vmem:[%s3050 + $0x34] sm:$0xff]
        %v3464 = vld [vmem:[%s3050 + $0x3c] sm:$0xff]
        %v3465 = vld [vmem:[%s3050 + $0x4c] sm:$0xff]
        %v3466 = vld [vmem:[%s3050 + $0x54] sm:$0xff]
        %v3467 = vld [vmem:[%s3050 + $0x64] sm:$0xff]
        %v3468 = vld [vmem:[%s3050 + $0x6c] sm:$0xff]
        %v3469 = vld [vmem:[%s3050 + $0x7c] sm:$0xff]
        %v3470 = vld [vmem:[%s3050 + $0x84] sm:$0xff]
        %v3471 = vld [vmem:[%s3050 + $0x94] sm:$0xff]
        %v3472 = vld [vmem:[%s3050 + $0x9c] sm:$0xff]
        %v3473 = vld [vmem:[%s3050 + $0xac] sm:$0xff]
        %v3474 = vld [vmem:[%s3050 + $0xb4] sm:$0xff]
        %v3475 = vld [vmem:[%s3050 + $0xc4] sm:$0xff]
        %v3476 = vld [vmem:[%s3050 + $0xcc] sm:$0xff]
        %v3477 = vld [vmem:[%s3050 + $0xdc] sm:$0xff]
        %v3478 = vld [vmem:[%s3050 + $0xe4] sm:$0xff]
        %v3479 = vld [vmem:[%s3050 + $0xf4] sm:$0xff]
        %v3480 = vld [vmem:[%s3050 + $0xfc] sm:$0xff]
        %v3481 = vld [vmem:[%s3050 + $0x10c] sm:$0xff]
        %v3482 = vld [vmem:[%s3050 + $0x114] sm:$0xff]
        %v3483 = vld [vmem:[%s3050 + $0x124] sm:$0xff]
        %v3484 = vld [vmem:[%s3050 + $0x12c] sm:$0xff]
        %v3485 = vld [vmem:[%s3050 + $0x13c] sm:$0xff]
        %v3486 = vld [vmem:[%s3050 + $0x144] sm:$0xff]
        %v3487 = vld [vmem:[%s3050 + $0x154] sm:$0xff]
        %v3488 = vld [vmem:[%s3050 + $0x15c] sm:$0xff]
        %v3489 = vld [vmem:[%s3050 + $0x16c] sm:$0xff]
        %v3490 = vld [vmem:[%s3050 + $0x174] sm:$0xff]
        %v3492 = vlaneseq
        %v3493 = vshrl.u32 %v3492, 7
        %v3494 = vsub.s32 0, %v3493
        %v3495 = vrot.slane %v1513, %v3494
        %v3497 = vmul.f32 %v3459, %v3495
        %v3498 = vmul.f32 %v3460, %v3495
        %v3499 = vmul.f32 %v3461, %v3495
        %v3500 = vmul.f32 %v3462, %v3495
        %v3501 = vmul.f32 %v3463, %v3495
        %v3502 = vmul.f32 %v3464, %v3495
        %v3503 = vmul.f32 %v3465, %v3495
        %v3504 = vmul.f32 %v3466, %v3495
        %v3505 = vmul.f32 %v3467, %v3495
        %v3506 = vmul.f32 %v3468, %v3495
        %v3507 = vmul.f32 %v3469, %v3495
        %v3508 = vmul.f32 %v3470, %v3495
        %v3509 = vmul.f32 %v3471, %v3495
        %v3510 = vmul.f32 %v3472, %v3495
        %v3511 = vmul.f32 %v3473, %v3495
        %v3512 = vmul.f32 %v3474, %v3495
        %v3513 = vmul.f32 %v3475, %v3495
        %v3514 = vmul.f32 %v3476, %v3495
        %v3515 = vmul.f32 %v3477, %v3495
        %v3516 = vmul.f32 %v3478, %v3495
        %v3517 = vmul.f32 %v3479, %v3495
        %v3518 = vmul.f32 %v3480, %v3495
        %v3519 = vmul.f32 %v3481, %v3495
        %v3520 = vmul.f32 %v3482, %v3495
        %v3521 = vmul.f32 %v3483, %v3495
        %v3522 = vmul.f32 %v3484, %v3495
        %v3523 = vmul.f32 %v3485, %v3495
        %v3524 = vmul.f32 %v3486, %v3495
        %v3525 = vmul.f32 %v3487, %v3495
        %v3526 = vmul.f32 %v3488, %v3495
        %v3527 = vmul.f32 %v3489, %v3495
        %v3528 = vmul.f32 %v3490, %v3495
        %v3529 = vadd.f32 %v3427, %v3497
        %v3530 = vadd.f32 %v3428, %v3498
        %v3531 = vadd.f32 %v3429, %v3499
        %v3532 = vadd.f32 %v3430, %v3500
        %v3533 = vadd.f32 %v3431, %v3501
        %v3534 = vadd.f32 %v3432, %v3502
        %v3535 = vadd.f32 %v3433, %v3503
        %v3536 = vadd.f32 %v3434, %v3504
        %v3537 = vadd.f32 %v3435, %v3505
        %v3538 = vadd.f32 %v3436, %v3506
        %v3539 = vadd.f32 %v3437, %v3507
        %v3540 = vadd.f32 %v3438, %v3508
        %v3541 = vadd.f32 %v3439, %v3509
        %v3542 = vadd.f32 %v3440, %v3510
        %v3543 = vadd.f32 %v3441, %v3511
        %v3544 = vadd.f32 %v3442, %v3512
        %v3545 = vadd.f32 %v3443, %v3513
        %v3546 = vadd.f32 %v3444, %v3514
        %v3547 = vadd.f32 %v3445, %v3515
        %v3548 = vadd.f32 %v3446, %v3516
        %v3549 = vadd.f32 %v3447, %v3517
        %v3550 = vadd.f32 %v3448, %v3518
        %v3551 = vadd.f32 %v3449, %v3519
        %v3552 = vadd.f32 %v3450, %v3520
        %v3553 = vadd.f32 %v3451, %v3521
        %v3554 = vadd.f32 %v3452, %v3522
        %v3555 = vadd.f32 %v3453, %v3523
        %v3556 = vadd.f32 %v3454, %v3524
        %v3557 = vadd.f32 %v3455, %v3525
        %v3558 = vadd.f32 %v3456, %v3526
        %v3559 = vadd.f32 %v3457, %v3527
        %v3560 = vadd.f32 %v3458, %v3528
        %s3561 = scalar_lea.vmem [#allocation2], 96
        %v3562 = vld [vmem:[%s3561] sm:$0xff]
        %v3563 = vld [vmem:[%s3561 + $0x8] sm:$0xff]
        %v3564 = vld [vmem:[%s3561 + $0x18] sm:$0xff]
        %v3565 = vld [vmem:[%s3561 + $0x20] sm:$0xff]
        %v3566 = vld [vmem:[%s3561 + $0x30] sm:$0xff]
        %v3567 = vld [vmem:[%s3561 + $0x38] sm:$0xff]
        %v3568 = vld [vmem:[%s3561 + $0x48] sm:$0xff]
        %v3569 = vld [vmem:[%s3561 + $0x50] sm:$0xff]
        %v3570 = vld [vmem:[%s3561 + $0x60] sm:$0xff]
        %v3571 = vld [vmem:[%s3561 + $0x68] sm:$0xff]
        %v3572 = vld [vmem:[%s3561 + $0x78] sm:$0xff]
        %v3573 = vld [vmem:[%s3561 + $0x80] sm:$0xff]
        %v3574 = vld [vmem:[%s3561 + $0x90] sm:$0xff]
        %v3575 = vld [vmem:[%s3561 + $0x98] sm:$0xff]
        %v3576 = vld [vmem:[%s3561 + $0xa8] sm:$0xff]
        %v3577 = vld [vmem:[%s3561 + $0xb0] sm:$0xff]
        %v3578 = vld [vmem:[%s3561 + $0xc0] sm:$0xff]
        %v3579 = vld [vmem:[%s3561 + $0xc8] sm:$0xff]
        %v3580 = vld [vmem:[%s3561 + $0xd8] sm:$0xff]
        %v3581 = vld [vmem:[%s3561 + $0xe0] sm:$0xff]
        %v3582 = vld [vmem:[%s3561 + $0xf0] sm:$0xff]
        %v3583 = vld [vmem:[%s3561 + $0xf8] sm:$0xff]
        %v3584 = vld [vmem:[%s3561 + $0x108] sm:$0xff]
        %v3585 = vld [vmem:[%s3561 + $0x110] sm:$0xff]
        %v3586 = vld [vmem:[%s3561 + $0x120] sm:$0xff]
        %v3587 = vld [vmem:[%s3561 + $0x128] sm:$0xff]
        %v3588 = vld [vmem:[%s3561 + $0x138] sm:$0xff]
        %v3589 = vld [vmem:[%s3561 + $0x140] sm:$0xff]
        %v3590 = vld [vmem:[%s3561 + $0x150] sm:$0xff]
        %v3591 = vld [vmem:[%s3561 + $0x158] sm:$0xff]
        %v3592 = vld [vmem:[%s3561 + $0x168] sm:$0xff]
        %v3593 = vld [vmem:[%s3561 + $0x170] sm:$0xff]
        %v3595 = vlaneseq
        %v3596 = vshrl.u32 %v3595, 7
        %v3597 = vsub.s32 0, %v3596
        %v3598 = vrot.slane %v1514, %v3597
        %v3600 = vmul.f32 %v3562, %v3598
        %v3601 = vmul.f32 %v3563, %v3598
        %v3602 = vmul.f32 %v3564, %v3598
        %v3603 = vmul.f32 %v3565, %v3598
        %v3604 = vmul.f32 %v3566, %v3598
        %v3605 = vmul.f32 %v3567, %v3598
        %v3606 = vmul.f32 %v3568, %v3598
        %v3607 = vmul.f32 %v3569, %v3598
        %v3608 = vmul.f32 %v3570, %v3598
        %v3609 = vmul.f32 %v3571, %v3598
        %v3610 = vmul.f32 %v3572, %v3598
        %v3611 = vmul.f32 %v3573, %v3598
        %v3612 = vmul.f32 %v3574, %v3598
        %v3613 = vmul.f32 %v3575, %v3598
        %v3614 = vmul.f32 %v3576, %v3598
        %v3615 = vmul.f32 %v3577, %v3598
        %v3616 = vmul.f32 %v3578, %v3598
        %v3617 = vmul.f32 %v3579, %v3598
        %v3618 = vmul.f32 %v3580, %v3598
        %v3619 = vmul.f32 %v3581, %v3598
        %v3620 = vmul.f32 %v3582, %v3598
        %v3621 = vmul.f32 %v3583, %v3598
        %v3622 = vmul.f32 %v3584, %v3598
        %v3623 = vmul.f32 %v3585, %v3598
        %v3624 = vmul.f32 %v3586, %v3598
        %v3625 = vmul.f32 %v3587, %v3598
        %v3626 = vmul.f32 %v3588, %v3598
        %v3627 = vmul.f32 %v3589, %v3598
        %v3628 = vmul.f32 %v3590, %v3598
        %v3629 = vmul.f32 %v3591, %v3598
        %v3630 = vmul.f32 %v3592, %v3598
        %v3631 = vmul.f32 %v3593, %v3598
        %v3632 = vadd.f32 %v3529, %v3600
        %v3633 = vadd.f32 %v3530, %v3601
        %v3634 = vadd.f32 %v3531, %v3602
        %v3635 = vadd.f32 %v3532, %v3603
        %v3636 = vadd.f32 %v3533, %v3604
        %v3637 = vadd.f32 %v3534, %v3605
        %v3638 = vadd.f32 %v3535, %v3606
        %v3639 = vadd.f32 %v3536, %v3607
        %v3640 = vadd.f32 %v3537, %v3608
        %v3641 = vadd.f32 %v3538, %v3609
        %v3642 = vadd.f32 %v3539, %v3610
        %v3643 = vadd.f32 %v3540, %v3611
        %v3644 = vadd.f32 %v3541, %v3612
        %v3645 = vadd.f32 %v3542, %v3613
        %v3646 = vadd.f32 %v3543, %v3614
        %v3647 = vadd.f32 %v3544, %v3615
        %v3648 = vadd.f32 %v3545, %v3616
        %v3649 = vadd.f32 %v3546, %v3617
        %v3650 = vadd.f32 %v3547, %v3618
        %v3651 = vadd.f32 %v3548, %v3619
        %v3652 = vadd.f32 %v3549, %v3620
        %v3653 = vadd.f32 %v3550, %v3621
        %v3654 = vadd.f32 %v3551, %v3622
        %v3655 = vadd.f32 %v3552, %v3623
        %v3656 = vadd.f32 %v3553, %v3624
        %v3657 = vadd.f32 %v3554, %v3625
        %v3658 = vadd.f32 %v3555, %v3626
        %v3659 = vadd.f32 %v3556, %v3627
        %v3660 = vadd.f32 %v3557, %v3628
        %v3661 = vadd.f32 %v3558, %v3629
        %v3662 = vadd.f32 %v3559, %v3630
        %v3663 = vadd.f32 %v3560, %v3631
        %v3664 = vld [vmem:[%s3561 + $0x1] sm:$0xff]
        %v3665 = vld [vmem:[%s3561 + $0x9] sm:$0xff]
        %v3666 = vld [vmem:[%s3561 + $0x19] sm:$0xff]
        %v3667 = vld [vmem:[%s3561 + $0x21] sm:$0xff]
        %v3668 = vld [vmem:[%s3561 + $0x31] sm:$0xff]
        %v3669 = vld [vmem:[%s3561 + $0x39] sm:$0xff]
        %v3670 = vld [vmem:[%s3561 + $0x49] sm:$0xff]
        %v3671 = vld [vmem:[%s3561 + $0x51] sm:$0xff]
        %v3672 = vld [vmem:[%s3561 + $0x61] sm:$0xff]
        %v3673 = vld [vmem:[%s3561 + $0x69] sm:$0xff]
        %v3674 = vld [vmem:[%s3561 + $0x79] sm:$0xff]
        %v3675 = vld [vmem:[%s3561 + $0x81] sm:$0xff]
        %v3676 = vld [vmem:[%s3561 + $0x91] sm:$0xff]
        %v3677 = vld [vmem:[%s3561 + $0x99] sm:$0xff]
        %v3678 = vld [vmem:[%s3561 + $0xa9] sm:$0xff]
        %v3679 = vld [vmem:[%s3561 + $0xb1] sm:$0xff]
        %v3680 = vld [vmem:[%s3561 + $0xc1] sm:$0xff]
        %v3681 = vld [vmem:[%s3561 + $0xc9] sm:$0xff]
        %v3682 = vld [vmem:[%s3561 + $0xd9] sm:$0xff]
        %v3683 = vld [vmem:[%s3561 + $0xe1] sm:$0xff]
        %v3684 = vld [vmem:[%s3561 + $0xf1] sm:$0xff]
        %v3685 = vld [vmem:[%s3561 + $0xf9] sm:$0xff]
        %v3686 = vld [vmem:[%s3561 + $0x109] sm:$0xff]
        %v3687 = vld [vmem:[%s3561 + $0x111] sm:$0xff]
        %v3688 = vld [vmem:[%s3561 + $0x121] sm:$0xff]
        %v3689 = vld [vmem:[%s3561 + $0x129] sm:$0xff]
        %v3690 = vld [vmem:[%s3561 + $0x139] sm:$0xff]
        %v3691 = vld [vmem:[%s3561 + $0x141] sm:$0xff]
        %v3692 = vld [vmem:[%s3561 + $0x151] sm:$0xff]
        %v3693 = vld [vmem:[%s3561 + $0x159] sm:$0xff]
        %v3694 = vld [vmem:[%s3561 + $0x169] sm:$0xff]
        %v3695 = vld [vmem:[%s3561 + $0x171] sm:$0xff]
        %v3697 = vlaneseq
        %v3698 = vshrl.u32 %v3697, 7
        %v3699 = vsub.s32 0, %v3698
        %v3700 = vrot.slane %v1515, %v3699
        %v3702 = vmul.f32 %v3664, %v3700
        %v3703 = vmul.f32 %v3665, %v3700
        %v3704 = vmul.f32 %v3666, %v3700
        %v3705 = vmul.f32 %v3667, %v3700
        %v3706 = vmul.f32 %v3668, %v3700
        %v3707 = vmul.f32 %v3669, %v3700
        %v3708 = vmul.f32 %v3670, %v3700
        %v3709 = vmul.f32 %v3671, %v3700
        %v3710 = vmul.f32 %v3672, %v3700
        %v3711 = vmul.f32 %v3673, %v3700
        %v3712 = vmul.f32 %v3674, %v3700
        %v3713 = vmul.f32 %v3675, %v3700
        %v3714 = vmul.f32 %v3676, %v3700
        %v3715 = vmul.f32 %v3677, %v3700
        %v3716 = vmul.f32 %v3678, %v3700
        %v3717 = vmul.f32 %v3679, %v3700
        %v3718 = vmul.f32 %v3680, %v3700
        %v3719 = vmul.f32 %v3681, %v3700
        %v3720 = vmul.f32 %v3682, %v3700
        %v3721 = vmul.f32 %v3683, %v3700
        %v3722 = vmul.f32 %v3684, %v3700
        %v3723 = vmul.f32 %v3685, %v3700
        %v3724 = vmul.f32 %v3686, %v3700
        %v3725 = vmul.f32 %v3687, %v3700
        %v3726 = vmul.f32 %v3688, %v3700
        %v3727 = vmul.f32 %v3689, %v3700
        %v3728 = vmul.f32 %v3690, %v3700
        %v3729 = vmul.f32 %v3691, %v3700
        %v3730 = vmul.f32 %v3692, %v3700
        %v3731 = vmul.f32 %v3693, %v3700
        %v3732 = vmul.f32 %v3694, %v3700
        %v3733 = vmul.f32 %v3695, %v3700
        %v3734 = vadd.f32 %v3632, %v3702
        %v3735 = vadd.f32 %v3633, %v3703
        %v3736 = vadd.f32 %v3634, %v3704
        %v3737 = vadd.f32 %v3635, %v3705
        %v3738 = vadd.f32 %v3636, %v3706
        %v3739 = vadd.f32 %v3637, %v3707
        %v3740 = vadd.f32 %v3638, %v3708
        %v3741 = vadd.f32 %v3639, %v3709
        %v3742 = vadd.f32 %v3640, %v3710
        %v3743 = vadd.f32 %v3641, %v3711
        %v3744 = vadd.f32 %v3642, %v3712
        %v3745 = vadd.f32 %v3643, %v3713
        %v3746 = vadd.f32 %v3644, %v3714
        %v3747 = vadd.f32 %v3645, %v3715
        %v3748 = vadd.f32 %v3646, %v3716
        %v3749 = vadd.f32 %v3647, %v3717
        %v3750 = vadd.f32 %v3648, %v3718
        %v3751 = vadd.f32 %v3649, %v3719
        %v3752 = vadd.f32 %v3650, %v3720
        %v3753 = vadd.f32 %v3651, %v3721
        %v3754 = vadd.f32 %v3652, %v3722
        %v3755 = vadd.f32 %v3653, %v3723
        %v3756 = vadd.f32 %v3654, %v3724
        %v3757 = vadd.f32 %v3655, %v3725
        %v3758 = vadd.f32 %v3656, %v3726
        %v3759 = vadd.f32 %v3657, %v3727
        %v3760 = vadd.f32 %v3658, %v3728
        %v3761 = vadd.f32 %v3659, %v3729
        %v3762 = vadd.f32 %v3660, %v3730
        %v3763 = vadd.f32 %v3661, %v3731
        %v3764 = vadd.f32 %v3662, %v3732
        %v3765 = vadd.f32 %v3663, %v3733
        %v3766 = vld [vmem:[%s3561 + $0x2] sm:$0xff]
        %v3767 = vld [vmem:[%s3561 + $0xa] sm:$0xff]
        %v3768 = vld [vmem:[%s3561 + $0x1a] sm:$0xff]
        %v3769 = vld [vmem:[%s3561 + $0x22] sm:$0xff]
        %v3770 = vld [vmem:[%s3561 + $0x32] sm:$0xff]
        %v3771 = vld [vmem:[%s3561 + $0x3a] sm:$0xff]
        %v3772 = vld [vmem:[%s3561 + $0x4a] sm:$0xff]
        %v3773 = vld [vmem:[%s3561 + $0x52] sm:$0xff]
        %v3774 = vld [vmem:[%s3561 + $0x62] sm:$0xff]
        %v3775 = vld [vmem:[%s3561 + $0x6a] sm:$0xff]
        %v3776 = vld [vmem:[%s3561 + $0x7a] sm:$0xff]
        %v3777 = vld [vmem:[%s3561 + $0x82] sm:$0xff]
        %v3778 = vld [vmem:[%s3561 + $0x92] sm:$0xff]
        %v3779 = vld [vmem:[%s3561 + $0x9a] sm:$0xff]
        %v3780 = vld [vmem:[%s3561 + $0xaa] sm:$0xff]
        %v3781 = vld [vmem:[%s3561 + $0xb2] sm:$0xff]
        %v3782 = vld [vmem:[%s3561 + $0xc2] sm:$0xff]
        %v3783 = vld [vmem:[%s3561 + $0xca] sm:$0xff]
        %v3784 = vld [vmem:[%s3561 + $0xda] sm:$0xff]
        %v3785 = vld [vmem:[%s3561 + $0xe2] sm:$0xff]
        %v3786 = vld [vmem:[%s3561 + $0xf2] sm:$0xff]
        %v3787 = vld [vmem:[%s3561 + $0xfa] sm:$0xff]
        %v3788 = vld [vmem:[%s3561 + $0x10a] sm:$0xff]
        %v3789 = vld [vmem:[%s3561 + $0x112] sm:$0xff]
        %v3790 = vld [vmem:[%s3561 + $0x122] sm:$0xff]
        %v3791 = vld [vmem:[%s3561 + $0x12a] sm:$0xff]
        %v3792 = vld [vmem:[%s3561 + $0x13a] sm:$0xff]
        %v3793 = vld [vmem:[%s3561 + $0x142] sm:$0xff]
        %v3794 = vld [vmem:[%s3561 + $0x152] sm:$0xff]
        %v3795 = vld [vmem:[%s3561 + $0x15a] sm:$0xff]
        %v3796 = vld [vmem:[%s3561 + $0x16a] sm:$0xff]
        %v3797 = vld [vmem:[%s3561 + $0x172] sm:$0xff]
        %v3799 = vlaneseq
        %v3800 = vshrl.u32 %v3799, 7
        %v3801 = vsub.s32 0, %v3800
        %v3802 = vrot.slane %v1516, %v3801
        %v3804 = vmul.f32 %v3766, %v3802
        %v3805 = vmul.f32 %v3767, %v3802
        %v3806 = vmul.f32 %v3768, %v3802
        %v3807 = vmul.f32 %v3769, %v3802
        %v3808 = vmul.f32 %v3770, %v3802
        %v3809 = vmul.f32 %v3771, %v3802
        %v3810 = vmul.f32 %v3772, %v3802
        %v3811 = vmul.f32 %v3773, %v3802
        %v3812 = vmul.f32 %v3774, %v3802
        %v3813 = vmul.f32 %v3775, %v3802
        %v3814 = vmul.f32 %v3776, %v3802
        %v3815 = vmul.f32 %v3777, %v3802
        %v3816 = vmul.f32 %v3778, %v3802
        %v3817 = vmul.f32 %v3779, %v3802
        %v3818 = vmul.f32 %v3780, %v3802
        %v3819 = vmul.f32 %v3781, %v3802
        %v3820 = vmul.f32 %v3782, %v3802
        %v3821 = vmul.f32 %v3783, %v3802
        %v3822 = vmul.f32 %v3784, %v3802
        %v3823 = vmul.f32 %v3785, %v3802
        %v3824 = vmul.f32 %v3786, %v3802
        %v3825 = vmul.f32 %v3787, %v3802
        %v3826 = vmul.f32 %v3788, %v3802
        %v3827 = vmul.f32 %v3789, %v3802
        %v3828 = vmul.f32 %v3790, %v3802
        %v3829 = vmul.f32 %v3791, %v3802
        %v3830 = vmul.f32 %v3792, %v3802
        %v3831 = vmul.f32 %v3793, %v3802
        %v3832 = vmul.f32 %v3794, %v3802
        %v3833 = vmul.f32 %v3795, %v3802
        %v3834 = vmul.f32 %v3796, %v3802
        %v3835 = vmul.f32 %v3797, %v3802
        %v3836 = vadd.f32 %v3734, %v3804
        %v3837 = vadd.f32 %v3735, %v3805
        %v3838 = vadd.f32 %v3736, %v3806
        %v3839 = vadd.f32 %v3737, %v3807
        %v3840 = vadd.f32 %v3738, %v3808
        %v3841 = vadd.f32 %v3739, %v3809
        %v3842 = vadd.f32 %v3740, %v3810
        %v3843 = vadd.f32 %v3741, %v3811
        %v3844 = vadd.f32 %v3742, %v3812
        %v3845 = vadd.f32 %v3743, %v3813
        %v3846 = vadd.f32 %v3744, %v3814
        %v3847 = vadd.f32 %v3745, %v3815
        %v3848 = vadd.f32 %v3746, %v3816
        %v3849 = vadd.f32 %v3747, %v3817
        %v3850 = vadd.f32 %v3748, %v3818
        %v3851 = vadd.f32 %v3749, %v3819
        %v3852 = vadd.f32 %v3750, %v3820
        %v3853 = vadd.f32 %v3751, %v3821
        %v3854 = vadd.f32 %v3752, %v3822
        %v3855 = vadd.f32 %v3753, %v3823
        %v3856 = vadd.f32 %v3754, %v3824
        %v3857 = vadd.f32 %v3755, %v3825
        %v3858 = vadd.f32 %v3756, %v3826
        %v3859 = vadd.f32 %v3757, %v3827
        %v3860 = vadd.f32 %v3758, %v3828
        %v3861 = vadd.f32 %v3759, %v3829
        %v3862 = vadd.f32 %v3760, %v3830
        %v3863 = vadd.f32 %v3761, %v3831
        %v3864 = vadd.f32 %v3762, %v3832
        %v3865 = vadd.f32 %v3763, %v3833
        %v3866 = vadd.f32 %v3764, %v3834
        %v3867 = vadd.f32 %v3765, %v3835
        %v3868 = vld [vmem:[%s3561 + $0x3] sm:$0xff]
        %v3869 = vld [vmem:[%s3561 + $0xb] sm:$0xff]
        %v3870 = vld [vmem:[%s3561 + $0x1b] sm:$0xff]
        %v3871 = vld [vmem:[%s3561 + $0x23] sm:$0xff]
        %v3872 = vld [vmem:[%s3561 + $0x33] sm:$0xff]
        %v3873 = vld [vmem:[%s3561 + $0x3b] sm:$0xff]
        %v3874 = vld [vmem:[%s3561 + $0x4b] sm:$0xff]
        %v3875 = vld [vmem:[%s3561 + $0x53] sm:$0xff]
        %v3876 = vld [vmem:[%s3561 + $0x63] sm:$0xff]
        %v3877 = vld [vmem:[%s3561 + $0x6b] sm:$0xff]
        %v3878 = vld [vmem:[%s3561 + $0x7b] sm:$0xff]
        %v3879 = vld [vmem:[%s3561 + $0x83] sm:$0xff]
        %v3880 = vld [vmem:[%s3561 + $0x93] sm:$0xff]
        %v3881 = vld [vmem:[%s3561 + $0x9b] sm:$0xff]
        %v3882 = vld [vmem:[%s3561 + $0xab] sm:$0xff]
        %v3883 = vld [vmem:[%s3561 + $0xb3] sm:$0xff]
        %v3884 = vld [vmem:[%s3561 + $0xc3] sm:$0xff]
        %v3885 = vld [vmem:[%s3561 + $0xcb] sm:$0xff]
        %v3886 = vld [vmem:[%s3561 + $0xdb] sm:$0xff]
        %v3887 = vld [vmem:[%s3561 + $0xe3] sm:$0xff]
        %v3888 = vld [vmem:[%s3561 + $0xf3] sm:$0xff]
        %v3889 = vld [vmem:[%s3561 + $0xfb] sm:$0xff]
        %v3890 = vld [vmem:[%s3561 + $0x10b] sm:$0xff]
        %v3891 = vld [vmem:[%s3561 + $0x113] sm:$0xff]
        %v3892 = vld [vmem:[%s3561 + $0x123] sm:$0xff]
        %v3893 = vld [vmem:[%s3561 + $0x12b] sm:$0xff]
        %v3894 = vld [vmem:[%s3561 + $0x13b] sm:$0xff]
        %v3895 = vld [vmem:[%s3561 + $0x143] sm:$0xff]
        %v3896 = vld [vmem:[%s3561 + $0x153] sm:$0xff]
        %v3897 = vld [vmem:[%s3561 + $0x15b] sm:$0xff]
        %v3898 = vld [vmem:[%s3561 + $0x16b] sm:$0xff]
        %v3899 = vld [vmem:[%s3561 + $0x173] sm:$0xff]
        %v3901 = vlaneseq
        %v3902 = vshrl.u32 %v3901, 7
        %v3903 = vsub.s32 0, %v3902
        %v3904 = vrot.slane %v1517, %v3903
        %v3906 = vmul.f32 %v3868, %v3904
        %v3907 = vmul.f32 %v3869, %v3904
        %v3908 = vmul.f32 %v3870, %v3904
        %v3909 = vmul.f32 %v3871, %v3904
        %v3910 = vmul.f32 %v3872, %v3904
        %v3911 = vmul.f32 %v3873, %v3904
        %v3912 = vmul.f32 %v3874, %v3904
        %v3913 = vmul.f32 %v3875, %v3904
        %v3914 = vmul.f32 %v3876, %v3904
        %v3915 = vmul.f32 %v3877, %v3904
        %v3916 = vmul.f32 %v3878, %v3904
        %v3917 = vmul.f32 %v3879, %v3904
        %v3918 = vmul.f32 %v3880, %v3904
        %v3919 = vmul.f32 %v3881, %v3904
        %v3920 = vmul.f32 %v3882, %v3904
        %v3921 = vmul.f32 %v3883, %v3904
        %v3922 = vmul.f32 %v3884, %v3904
        %v3923 = vmul.f32 %v3885, %v3904
        %v3924 = vmul.f32 %v3886, %v3904
        %v3925 = vmul.f32 %v3887, %v3904
        %v3926 = vmul.f32 %v3888, %v3904
        %v3927 = vmul.f32 %v3889, %v3904
        %v3928 = vmul.f32 %v3890, %v3904
        %v3929 = vmul.f32 %v3891, %v3904
        %v3930 = vmul.f32 %v3892, %v3904
        %v3931 = vmul.f32 %v3893, %v3904
        %v3932 = vmul.f32 %v3894, %v3904
        %v3933 = vmul.f32 %v3895, %v3904
        %v3934 = vmul.f32 %v3896, %v3904
        %v3935 = vmul.f32 %v3897, %v3904
        %v3936 = vmul.f32 %v3898, %v3904
        %v3937 = vmul.f32 %v3899, %v3904
        %v3938 = vadd.f32 %v3836, %v3906
        %v3939 = vadd.f32 %v3837, %v3907
        %v3940 = vadd.f32 %v3838, %v3908
        %v3941 = vadd.f32 %v3839, %v3909
        %v3942 = vadd.f32 %v3840, %v3910
        %v3943 = vadd.f32 %v3841, %v3911
        %v3944 = vadd.f32 %v3842, %v3912
        %v3945 = vadd.f32 %v3843, %v3913
        %v3946 = vadd.f32 %v3844, %v3914
        %v3947 = vadd.f32 %v3845, %v3915
        %v3948 = vadd.f32 %v3846, %v3916
        %v3949 = vadd.f32 %v3847, %v3917
        %v3950 = vadd.f32 %v3848, %v3918
        %v3951 = vadd.f32 %v3849, %v3919
        %v3952 = vadd.f32 %v3850, %v3920
        %v3953 = vadd.f32 %v3851, %v3921
        %v3954 = vadd.f32 %v3852, %v3922
        %v3955 = vadd.f32 %v3853, %v3923
        %v3956 = vadd.f32 %v3854, %v3924
        %v3957 = vadd.f32 %v3855, %v3925
        %v3958 = vadd.f32 %v3856, %v3926
        %v3959 = vadd.f32 %v3857, %v3927
        %v3960 = vadd.f32 %v3858, %v3928
        %v3961 = vadd.f32 %v3859, %v3929
        %v3962 = vadd.f32 %v3860, %v3930
        %v3963 = vadd.f32 %v3861, %v3931
        %v3964 = vadd.f32 %v3862, %v3932
        %v3965 = vadd.f32 %v3863, %v3933
        %v3966 = vadd.f32 %v3864, %v3934
        %v3967 = vadd.f32 %v3865, %v3935
        %v3968 = vadd.f32 %v3866, %v3936
        %v3969 = vadd.f32 %v3867, %v3937
        %v3970 = vld [vmem:[%s3561 + $0x4] sm:$0xff]
        %v3971 = vld [vmem:[%s3561 + $0xc] sm:$0xff]
        %v3972 = vld [vmem:[%s3561 + $0x1c] sm:$0xff]
        %v3973 = vld [vmem:[%s3561 + $0x24] sm:$0xff]
        %v3974 = vld [vmem:[%s3561 + $0x34] sm:$0xff]
        %v3975 = vld [vmem:[%s3561 + $0x3c] sm:$0xff]
        %v3976 = vld [vmem:[%s3561 + $0x4c] sm:$0xff]
        %v3977 = vld [vmem:[%s3561 + $0x54] sm:$0xff]
        %v3978 = vld [vmem:[%s3561 + $0x64] sm:$0xff]
        %v3979 = vld [vmem:[%s3561 + $0x6c] sm:$0xff]
        %v3980 = vld [vmem:[%s3561 + $0x7c] sm:$0xff]
        %v3981 = vld [vmem:[%s3561 + $0x84] sm:$0xff]
        %v3982 = vld [vmem:[%s3561 + $0x94] sm:$0xff]
        %v3983 = vld [vmem:[%s3561 + $0x9c] sm:$0xff]
        %v3984 = vld [vmem:[%s3561 + $0xac] sm:$0xff]
        %v3985 = vld [vmem:[%s3561 + $0xb4] sm:$0xff]
        %v3986 = vld [vmem:[%s3561 + $0xc4] sm:$0xff]
        %v3987 = vld [vmem:[%s3561 + $0xcc] sm:$0xff]
        %v3988 = vld [vmem:[%s3561 + $0xdc] sm:$0xff]
        %v3989 = vld [vmem:[%s3561 + $0xe4] sm:$0xff]
        %v3990 = vld [vmem:[%s3561 + $0xf4] sm:$0xff]
        %v3991 = vld [vmem:[%s3561 + $0xfc] sm:$0xff]
        %v3992 = vld [vmem:[%s3561 + $0x10c] sm:$0xff]
        %v3993 = vld [vmem:[%s3561 + $0x114] sm:$0xff]
        %v3994 = vld [vmem:[%s3561 + $0x124] sm:$0xff]
        %v3995 = vld [vmem:[%s3561 + $0x12c] sm:$0xff]
        %v3996 = vld [vmem:[%s3561 + $0x13c] sm:$0xff]
        %v3997 = vld [vmem:[%s3561 + $0x144] sm:$0xff]
        %v3998 = vld [vmem:[%s3561 + $0x154] sm:$0xff]
        %v3999 = vld [vmem:[%s3561 + $0x15c] sm:$0xff]
        %v4000 = vld [vmem:[%s3561 + $0x16c] sm:$0xff]
        %v4001 = vld [vmem:[%s3561 + $0x174] sm:$0xff]
        %v4003 = vlaneseq
        %v4004 = vshrl.u32 %v4003, 7
        %v4005 = vsub.s32 0, %v4004
        %v4006 = vrot.slane %v1518, %v4005
        %v4008 = vmul.f32 %v3970, %v4006
        %v4009 = vmul.f32 %v3971, %v4006
        %v4010 = vmul.f32 %v3972, %v4006
        %v4011 = vmul.f32 %v3973, %v4006
        %v4012 = vmul.f32 %v3974, %v4006
        %v4013 = vmul.f32 %v3975, %v4006
        %v4014 = vmul.f32 %v3976, %v4006
        %v4015 = vmul.f32 %v3977, %v4006
        %v4016 = vmul.f32 %v3978, %v4006
        %v4017 = vmul.f32 %v3979, %v4006
        %v4018 = vmul.f32 %v3980, %v4006
        %v4019 = vmul.f32 %v3981, %v4006
        %v4020 = vmul.f32 %v3982, %v4006
        %v4021 = vmul.f32 %v3983, %v4006
        %v4022 = vmul.f32 %v3984, %v4006
        %v4023 = vmul.f32 %v3985, %v4006
        %v4024 = vmul.f32 %v3986, %v4006
        %v4025 = vmul.f32 %v3987, %v4006
        %v4026 = vmul.f32 %v3988, %v4006
        %v4027 = vmul.f32 %v3989, %v4006
        %v4028 = vmul.f32 %v3990, %v4006
        %v4029 = vmul.f32 %v3991, %v4006
        %v4030 = vmul.f32 %v3992, %v4006
        %v4031 = vmul.f32 %v3993, %v4006
        %v4032 = vmul.f32 %v3994, %v4006
        %v4033 = vmul.f32 %v3995, %v4006
        %v4034 = vmul.f32 %v3996, %v4006
        %v4035 = vmul.f32 %v3997, %v4006
        %v4036 = vmul.f32 %v3998, %v4006
        %v4037 = vmul.f32 %v3999, %v4006
        %v4038 = vmul.f32 %v4000, %v4006
        %v4039 = vmul.f32 %v4001, %v4006
        %v4040 = vadd.f32 %v3938, %v4008
        %v4041 = vadd.f32 %v3939, %v4009
        %v4042 = vadd.f32 %v3940, %v4010
        %v4043 = vadd.f32 %v3941, %v4011
        %v4044 = vadd.f32 %v3942, %v4012
        %v4045 = vadd.f32 %v3943, %v4013
        %v4046 = vadd.f32 %v3944, %v4014
        %v4047 = vadd.f32 %v3945, %v4015
        %v4048 = vadd.f32 %v3946, %v4016
        %v4049 = vadd.f32 %v3947, %v4017
        %v4050 = vadd.f32 %v3948, %v4018
        %v4051 = vadd.f32 %v3949, %v4019
        %v4052 = vadd.f32 %v3950, %v4020
        %v4053 = vadd.f32 %v3951, %v4021
        %v4054 = vadd.f32 %v3952, %v4022
        %v4055 = vadd.f32 %v3953, %v4023
        %v4056 = vadd.f32 %v3954, %v4024
        %v4057 = vadd.f32 %v3955, %v4025
        %v4058 = vadd.f32 %v3956, %v4026
        %v4059 = vadd.f32 %v3957, %v4027
        %v4060 = vadd.f32 %v3958, %v4028
        %v4061 = vadd.f32 %v3959, %v4029
        %v4062 = vadd.f32 %v3960, %v4030
        %v4063 = vadd.f32 %v3961, %v4031
        %v4064 = vadd.f32 %v3962, %v4032
        %v4065 = vadd.f32 %v3963, %v4033
        %v4066 = vadd.f32 %v3964, %v4034
        %v4067 = vadd.f32 %v3965, %v4035
        %v4068 = vadd.f32 %v3966, %v4036
        %v4069 = vadd.f32 %v3967, %v4037
        %v4070 = vadd.f32 %v3968, %v4038
        %v4071 = vadd.f32 %v3969, %v4039
        %v4072 = vld [vmem:[%s7] sm:$0x1]
        %v4074 = vlaneseq
        %v4075 = vshrl.u32 %v4074, 7
        %v4076 = vsub.s32 0, %v4075
        %v4077 = vrot.slane %v4072, %v4076
        %v4079 = vmul.f32 %v4040, %v4077
        %v4080 = vmul.f32 %v4041, %v4077
        %v4081 = vmul.f32 %v4042, %v4077
        %v4082 = vmul.f32 %v4043, %v4077
        %v4083 = vmul.f32 %v4044, %v4077
        %v4084 = vmul.f32 %v4045, %v4077
        %v4085 = vmul.f32 %v4046, %v4077
        %v4086 = vmul.f32 %v4047, %v4077
        %v4087 = vmul.f32 %v4048, %v4077
        %v4088 = vmul.f32 %v4049, %v4077
        %v4089 = vmul.f32 %v4050, %v4077
        %v4090 = vmul.f32 %v4051, %v4077
        %v4091 = vmul.f32 %v4052, %v4077
        %v4092 = vmul.f32 %v4053, %v4077
        %v4093 = vmul.f32 %v4054, %v4077
        %v4094 = vmul.f32 %v4055, %v4077
        %v4095 = vmul.f32 %v4056, %v4077
        %v4096 = vmul.f32 %v4057, %v4077
        %v4097 = vmul.f32 %v4058, %v4077
        %v4098 = vmul.f32 %v4059, %v4077
        %v4099 = vmul.f32 %v4060, %v4077
        %v4100 = vmul.f32 %v4061, %v4077
        %v4101 = vmul.f32 %v4062, %v4077
        %v4102 = vmul.f32 %v4063, %v4077
        %v4103 = vmul.f32 %v4064, %v4077
        %v4104 = vmul.f32 %v4065, %v4077
        %v4105 = vmul.f32 %v4066, %v4077
        %v4106 = vmul.f32 %v4067, %v4077
        %v4107 = vmul.f32 %v4068, %v4077
        %v4108 = vmul.f32 %v4069, %v4077
        %v4109 = vmul.f32 %v4070, %v4077
        %v4110 = vmul.f32 %v4071, %v4077
        %v4111 = vld [vmem:[%s8] sm:$0x1]
        %v4113 = vlaneseq
        %v4114 = vshrl.u32 %v4113, 7
        %v4115 = vsub.s32 0, %v4114
        %v4116 = vrot.slane %v4111, %v4115
        %v4118 = vadd.f32 %v4079, %v4116
        %v4119 = vadd.f32 %v4080, %v4116
        %v4120 = vadd.f32 %v4081, %v4116
        %v4121 = vadd.f32 %v4082, %v4116
        %v4122 = vadd.f32 %v4083, %v4116
        %v4123 = vadd.f32 %v4084, %v4116
        %v4124 = vadd.f32 %v4085, %v4116
        %v4125 = vadd.f32 %v4086, %v4116
        %v4126 = vadd.f32 %v4087, %v4116
        %v4127 = vadd.f32 %v4088, %v4116
        %v4128 = vadd.f32 %v4089, %v4116
        %v4129 = vadd.f32 %v4090, %v4116
        %v4130 = vadd.f32 %v4091, %v4116
        %v4131 = vadd.f32 %v4092, %v4116
        %v4132 = vadd.f32 %v4093, %v4116
        %v4133 = vadd.f32 %v4094, %v4116
        %v4134 = vadd.f32 %v4095, %v4116
        %v4135 = vadd.f32 %v4096, %v4116
        %v4136 = vadd.f32 %v4097, %v4116
        %v4137 = vadd.f32 %v4098, %v4116
        %v4138 = vadd.f32 %v4099, %v4116
        %v4139 = vadd.f32 %v4100, %v4116
        %v4140 = vadd.f32 %v4101, %v4116
        %v4141 = vadd.f32 %v4102, %v4116
        %v4142 = vadd.f32 %v4103, %v4116
        %v4143 = vadd.f32 %v4104, %v4116
        %v4144 = vadd.f32 %v4105, %v4116
        %v4145 = vadd.f32 %v4106, %v4116
        %v4146 = vadd.f32 %v4107, %v4116
        %v4147 = vadd.f32 %v4108, %v4116
        %v4148 = vadd.f32 %v4109, %v4116
        %v4149 = vadd.f32 %v4110, %v4116
        %v4150 = vadd.f32 %v4118, 3.0
        %v4151 = vadd.f32 %v4119, 3.0
        %v4152 = vadd.f32 %v4120, 3.0
        %v4153 = vadd.f32 %v4121, 3.0
        %v4154 = vadd.f32 %v4122, 3.0
        %v4155 = vadd.f32 %v4123, 3.0
        %v4156 = vadd.f32 %v4124, 3.0
        %v4157 = vadd.f32 %v4125, 3.0
        %v4158 = vadd.f32 %v4126, 3.0
        %v4159 = vadd.f32 %v4127, 3.0
        %v4160 = vadd.f32 %v4128, 3.0
        %v4161 = vadd.f32 %v4129, 3.0
        %v4162 = vadd.f32 %v4130, 3.0
        %v4163 = vadd.f32 %v4131, 3.0
        %v4164 = vadd.f32 %v4132, 3.0
        %v4165 = vadd.f32 %v4133, 3.0
        %v4166 = vadd.f32 %v4134, 3.0
        %v4167 = vadd.f32 %v4135, 3.0
        %v4168 = vadd.f32 %v4136, 3.0
        %v4169 = vadd.f32 %v4137, 3.0
        %v4170 = vadd.f32 %v4138, 3.0
        %v4171 = vadd.f32 %v4139, 3.0
        %v4172 = vadd.f32 %v4140, 3.0
        %v4173 = vadd.f32 %v4141, 3.0
        %v4174 = vadd.f32 %v4142, 3.0
        %v4175 = vadd.f32 %v4143, 3.0
        %v4176 = vadd.f32 %v4144, 3.0
        %v4177 = vadd.f32 %v4145, 3.0
        %v4178 = vadd.f32 %v4146, 3.0
        %v4179 = vadd.f32 %v4147, 3.0
        %v4180 = vadd.f32 %v4148, 3.0
        %v4181 = vadd.f32 %v4149, 3.0
        %v4182 = vmax.f32 %v4150, 0.0
        %v4183 = vmax.f32 %v4151, 0.0
        %v4184 = vmax.f32 %v4152, 0.0
        %v4185 = vmax.f32 %v4153, 0.0
        %v4186 = vmax.f32 %v4154, 0.0
        %v4187 = vmax.f32 %v4155, 0.0
        %v4188 = vmax.f32 %v4156, 0.0
        %v4189 = vmax.f32 %v4157, 0.0
        %v4190 = vmax.f32 %v4158, 0.0
        %v4191 = vmax.f32 %v4159, 0.0
        %v4192 = vmax.f32 %v4160, 0.0
        %v4193 = vmax.f32 %v4161, 0.0
        %v4194 = vmax.f32 %v4162, 0.0
        %v4195 = vmax.f32 %v4163, 0.0
        %v4196 = vmax.f32 %v4164, 0.0
        %v4197 = vmax.f32 %v4165, 0.0
        %v4198 = vmax.f32 %v4166, 0.0
        %v4199 = vmax.f32 %v4167, 0.0
        %v4200 = vmax.f32 %v4168, 0.0
        %v4201 = vmax.f32 %v4169, 0.0
        %v4202 = vmax.f32 %v4170, 0.0
        %v4203 = vmax.f32 %v4171, 0.0
        %v4204 = vmax.f32 %v4172, 0.0
        %v4205 = vmax.f32 %v4173, 0.0
        %v4206 = vmax.f32 %v4174, 0.0
        %v4207 = vmax.f32 %v4175, 0.0
        %v4208 = vmax.f32 %v4176, 0.0
        %v4209 = vmax.f32 %v4177, 0.0
        %v4210 = vmax.f32 %v4178, 0.0
        %v4211 = vmax.f32 %v4179, 0.0
        %v4212 = vmax.f32 %v4180, 0.0
        %v4213 = vmax.f32 %v4181, 0.0
        %v4214 = vmin.f32 %v4182, 6.0
        %v4215 = vmin.f32 %v4183, 6.0
        %v4216 = vmin.f32 %v4184, 6.0
        %v4217 = vmin.f32 %v4185, 6.0
        %v4218 = vmin.f32 %v4186, 6.0
        %v4219 = vmin.f32 %v4187, 6.0
        %v4220 = vmin.f32 %v4188, 6.0
        %v4221 = vmin.f32 %v4189, 6.0
        %v4222 = vmin.f32 %v4190, 6.0
        %v4223 = vmin.f32 %v4191, 6.0
        %v4224 = vmin.f32 %v4192, 6.0
        %v4225 = vmin.f32 %v4193, 6.0
        %v4226 = vmin.f32 %v4194, 6.0
        %v4227 = vmin.f32 %v4195, 6.0
        %v4228 = vmin.f32 %v4196, 6.0
        %v4229 = vmin.f32 %v4197, 6.0
        %v4230 = vmin.f32 %v4198, 6.0
        %v4231 = vmin.f32 %v4199, 6.0
        %v4232 = vmin.f32 %v4200, 6.0
        %v4233 = vmin.f32 %v4201, 6.0
        %v4234 = vmin.f32 %v4202, 6.0
        %v4235 = vmin.f32 %v4203, 6.0
        %v4236 = vmin.f32 %v4204, 6.0
        %v4237 = vmin.f32 %v4205, 6.0
        %v4238 = vmin.f32 %v4206, 6.0
        %v4239 = vmin.f32 %v4207, 6.0
        %v4240 = vmin.f32 %v4208, 6.0
        %v4241 = vmin.f32 %v4209, 6.0
        %v4242 = vmin.f32 %v4210, 6.0
        %v4243 = vmin.f32 %v4211, 6.0
        %v4244 = vmin.f32 %v4212, 6.0
        %v4245 = vmin.f32 %v4213, 6.0
        %v4246 = vmul.f32 %v4118, %v4214
        %v4247 = vmul.f32 %v4119, %v4215
        %v4248 = vmul.f32 %v4120, %v4216
        %v4249 = vmul.f32 %v4121, %v4217
        %v4250 = vmul.f32 %v4122, %v4218
        %v4251 = vmul.f32 %v4123, %v4219
        %v4252 = vmul.f32 %v4124, %v4220
        %v4253 = vmul.f32 %v4125, %v4221
        %v4254 = vmul.f32 %v4126, %v4222
        %v4255 = vmul.f32 %v4127, %v4223
        %v4256 = vmul.f32 %v4128, %v4224
        %v4257 = vmul.f32 %v4129, %v4225
        %v4258 = vmul.f32 %v4130, %v4226
        %v4259 = vmul.f32 %v4131, %v4227
        %v4260 = vmul.f32 %v4132, %v4228
        %v4261 = vmul.f32 %v4133, %v4229
        %v4262 = vmul.f32 %v4134, %v4230
        %v4263 = vmul.f32 %v4135, %v4231
        %v4264 = vmul.f32 %v4136, %v4232
        %v4265 = vmul.f32 %v4137, %v4233
        %v4266 = vmul.f32 %v4138, %v4234
        %v4267 = vmul.f32 %v4139, %v4235
        %v4268 = vmul.f32 %v4140, %v4236
        %v4269 = vmul.f32 %v4141, %v4237
        %v4270 = vmul.f32 %v4142, %v4238
        %v4271 = vmul.f32 %v4143, %v4239
        %v4272 = vmul.f32 %v4144, %v4240
        %v4273 = vmul.f32 %v4145, %v4241
        %v4274 = vmul.f32 %v4146, %v4242
        %v4275 = vmul.f32 %v4147, %v4243
        %v4276 = vmul.f32 %v4148, %v4244
        %v4277 = vmul.f32 %v4149, %v4245
        %v4278 = vmul.f32 %v4246, 0.16666667
        %v4279 = vmul.f32 %v4247, 0.16666667
        %v4280 = vmul.f32 %v4248, 0.16666667
        %v4281 = vmul.f32 %v4249, 0.16666667
        %v4282 = vmul.f32 %v4250, 0.16666667
        %v4283 = vmul.f32 %v4251, 0.16666667
        %v4284 = vmul.f32 %v4252, 0.16666667
        %v4285 = vmul.f32 %v4253, 0.16666667
        %v4286 = vmul.f32 %v4254, 0.16666667
        %v4287 = vmul.f32 %v4255, 0.16666667
        %v4288 = vmul.f32 %v4256, 0.16666667
        %v4289 = vmul.f32 %v4257, 0.16666667
        %v4290 = vmul.f32 %v4258, 0.16666667
        %v4291 = vmul.f32 %v4259, 0.16666667
        %v4292 = vmul.f32 %v4260, 0.16666667
        %v4293 = vmul.f32 %v4261, 0.16666667
        %v4294 = vmul.f32 %v4262, 0.16666667
        %v4295 = vmul.f32 %v4263, 0.16666667
        %v4296 = vmul.f32 %v4264, 0.16666667
        %v4297 = vmul.f32 %v4265, 0.16666667
        %v4298 = vmul.f32 %v4266, 0.16666667
        %v4299 = vmul.f32 %v4267, 0.16666667
        %v4300 = vmul.f32 %v4268, 0.16666667
        %v4301 = vmul.f32 %v4269, 0.16666667
        %v4302 = vmul.f32 %v4270, 0.16666667
        %v4303 = vmul.f32 %v4271, 0.16666667
        %v4304 = vmul.f32 %v4272, 0.16666667
        %v4305 = vmul.f32 %v4273, 0.16666667
        %v4306 = vmul.f32 %v4274, 0.16666667
        %v4307 = vmul.f32 %v4275, 0.16666667
        %v4308 = vmul.f32 %v4276, 0.16666667
        %v4309 = vmul.f32 %v4277, 0.16666667
        %4342 = vrot.lane.b32.xlu0 %v4278, 8
        %v4343 = vpop.permute.xlu0 %4342
        %4344 = vrot.lane.b32.xlu0 %v4279, 8
        %v4345 = vpop.permute.xlu0 %4344
        %4346 = vrot.lane.b32.xlu0 %v4280, 8
        %v4347 = vpop.permute.xlu0 %4346
        %4348 = vrot.lane.b32.xlu0 %v4281, 8
        %v4349 = vpop.permute.xlu0 %4348
        %4350 = vrot.lane.b32.xlu0 %v4282, 8
        %v4351 = vpop.permute.xlu0 %4350
        %4352 = vrot.lane.b32.xlu0 %v4283, 8
        %v4353 = vpop.permute.xlu0 %4352
        %4354 = vrot.lane.b32.xlu0 %v4284, 8
        %v4355 = vpop.permute.xlu0 %4354
        %4356 = vrot.lane.b32.xlu0 %v4285, 8
        %v4357 = vpop.permute.xlu0 %4356
        %4358 = vrot.lane.b32.xlu0 %v4286, 8
        %v4359 = vpop.permute.xlu0 %4358
        %4360 = vrot.lane.b32.xlu0 %v4287, 8
        %v4361 = vpop.permute.xlu0 %4360
        %4362 = vrot.lane.b32.xlu0 %v4288, 8
        %v4363 = vpop.permute.xlu0 %4362
        %4364 = vrot.lane.b32.xlu0 %v4289, 8
        %v4365 = vpop.permute.xlu0 %4364
        %4366 = vrot.lane.b32.xlu0 %v4290, 8
        %v4367 = vpop.permute.xlu0 %4366
        %4368 = vrot.lane.b32.xlu0 %v4291, 8
        %v4369 = vpop.permute.xlu0 %4368
        %4370 = vrot.lane.b32.xlu0 %v4292, 8
        %v4371 = vpop.permute.xlu0 %4370
        %4372 = vrot.lane.b32.xlu0 %v4293, 8
        %v4373 = vpop.permute.xlu0 %4372
        %4374 = vrot.lane.b32.xlu0 %v4294, 8
        %v4375 = vpop.permute.xlu0 %4374
        %4376 = vrot.lane.b32.xlu0 %v4295, 8
        %v4377 = vpop.permute.xlu0 %4376
        %4378 = vrot.lane.b32.xlu0 %v4296, 8
        %v4379 = vpop.permute.xlu0 %4378
        %4380 = vrot.lane.b32.xlu0 %v4297, 8
        %v4381 = vpop.permute.xlu0 %4380
        %4382 = vrot.lane.b32.xlu0 %v4298, 8
        %v4383 = vpop.permute.xlu0 %4382
        %4384 = vrot.lane.b32.xlu0 %v4299, 8
        %v4385 = vpop.permute.xlu0 %4384
        %4386 = vrot.lane.b32.xlu0 %v4300, 8
        %v4387 = vpop.permute.xlu0 %4386
        %4388 = vrot.lane.b32.xlu0 %v4301, 8
        %v4389 = vpop.permute.xlu0 %4388
        %4390 = vrot.lane.b32.xlu0 %v4302, 8
        %v4391 = vpop.permute.xlu0 %4390
        %4392 = vrot.lane.b32.xlu0 %v4303, 8
        %v4393 = vpop.permute.xlu0 %4392
        %4394 = vrot.lane.b32.xlu0 %v4304, 8
        %v4395 = vpop.permute.xlu0 %4394
        %4396 = vrot.lane.b32.xlu0 %v4305, 8
        %v4397 = vpop.permute.xlu0 %4396
        %4398 = vrot.lane.b32.xlu0 %v4306, 8
        %v4399 = vpop.permute.xlu0 %4398
        %4400 = vrot.lane.b32.xlu0 %v4307, 8
        %v4401 = vpop.permute.xlu0 %4400
        %4402 = vrot.lane.b32.xlu0 %v4308, 8
        %v4403 = vpop.permute.xlu0 %4402
        %4404 = vrot.lane.b32.xlu0 %v4309, 8
        %v4405 = vpop.permute.xlu0 %4404
        %v4438 = vsel %vm1132, %v1099, %v4343
        %v4439 = vsel %vm1132, %v1100, %v4345
        %v4440 = vsel %vm1132, %v1101, %v4347
        %v4441 = vsel %vm1132, %v1102, %v4349
        %v4442 = vsel %vm1132, %v1103, %v4351
        %v4443 = vsel %vm1132, %v1104, %v4353
        %v4444 = vsel %vm1132, %v1105, %v4355
        %v4445 = vsel %vm1132, %v1106, %v4357
        %v4446 = vsel %vm1132, %v1107, %v4359
        %v4447 = vsel %vm1132, %v1108, %v4361
        %v4448 = vsel %vm1132, %v1109, %v4363
        %v4449 = vsel %vm1132, %v1110, %v4365
        %v4450 = vsel %vm1132, %v1111, %v4367
        %v4451 = vsel %vm1132, %v1112, %v4369
        %v4452 = vsel %vm1132, %v1113, %v4371
        %v4453 = vsel %vm1132, %v1114, %v4373
        %v4454 = vsel %vm1132, %v1115, %v4375
        %v4455 = vsel %vm1132, %v1116, %v4377
        %v4456 = vsel %vm1132, %v1117, %v4379
        %v4457 = vsel %vm1132, %v1118, %v4381
        %v4458 = vsel %vm1132, %v1119, %v4383
        %v4459 = vsel %vm1132, %v1120, %v4385
        %v4460 = vsel %vm1132, %v1121, %v4387
        %v4461 = vsel %vm1132, %v1122, %v4389
        %v4462 = vsel %vm1132, %v1123, %v4391
        %v4463 = vsel %vm1132, %v1124, %v4393
        %v4464 = vsel %vm1132, %v1125, %v4395
        %v4465 = vsel %vm1132, %v1126, %v4397
        %v4466 = vsel %vm1132, %v1127, %v4399
        %v4467 = vsel %vm1132, %v1128, %v4401
        %v4468 = vsel %vm1132, %v1129, %v4403
        %v4469 = vsel %vm1132, %v1130, %v4405
        %vm4470 = vcmask 130048
        %4471 = vst.msk [vmem:[%s480] sm:$0xff] %vm4470, %v4438
        %4472 = vst.msk [vmem:[%s480 + $0x8] sm:$0xff] %vm4470, %v4439
        %4473 = vst.msk [vmem:[%s480 + $0x10] sm:$0xff] %vm4470, %v4440
        %4474 = vst.msk [vmem:[%s480 + $0x18] sm:$0xff] %vm4470, %v4441
        %4475 = vst.msk [vmem:[%s480 + $0x20] sm:$0xff] %vm4470, %v4442
        %4476 = vst.msk [vmem:[%s480 + $0x28] sm:$0xff] %vm4470, %v4443
        %4477 = vst.msk [vmem:[%s480 + $0x30] sm:$0xff] %vm4470, %v4444
        %4478 = vst.msk [vmem:[%s480 + $0x38] sm:$0xff] %vm4470, %v4445
        %4479 = vst.msk [vmem:[%s480 + $0x40] sm:$0xff] %vm4470, %v4446
        %4480 = vst.msk [vmem:[%s480 + $0x48] sm:$0xff] %vm4470, %v4447
        %4481 = vst.msk [vmem:[%s480 + $0x50] sm:$0xff] %vm4470, %v4448
        %4482 = vst.msk [vmem:[%s480 + $0x58] sm:$0xff] %vm4470, %v4449
        %4483 = vst.msk [vmem:[%s480 + $0x60] sm:$0xff] %vm4470, %v4450
        %4484 = vst.msk [vmem:[%s480 + $0x68] sm:$0xff] %vm4470, %v4451
        %4485 = vst.msk [vmem:[%s480 + $0x70] sm:$0xff] %vm4470, %v4452
        %4486 = vst.msk [vmem:[%s480 + $0x78] sm:$0xff] %vm4470, %v4453
        %4487 = vst.msk [vmem:[%s480 + $0x80] sm:$0xff] %vm4470, %v4454
        %4488 = vst.msk [vmem:[%s480 + $0x88] sm:$0xff] %vm4470, %v4455
        %4489 = vst.msk [vmem:[%s480 + $0x90] sm:$0xff] %vm4470, %v4456
        %4490 = vst.msk [vmem:[%s480 + $0x98] sm:$0xff] %vm4470, %v4457
        %4491 = vst.msk [vmem:[%s480 + $0xa0] sm:$0xff] %vm4470, %v4458
        %4492 = vst.msk [vmem:[%s480 + $0xa8] sm:$0xff] %vm4470, %v4459
        %4493 = vst.msk [vmem:[%s480 + $0xb0] sm:$0xff] %vm4470, %v4460
        %4494 = vst.msk [vmem:[%s480 + $0xb8] sm:$0xff] %vm4470, %v4461
        %4495 = vst.msk [vmem:[%s480 + $0xc0] sm:$0xff] %vm4470, %v4462
        %4496 = vst.msk [vmem:[%s480 + $0xc8] sm:$0xff] %vm4470, %v4463
        %4497 = vst.msk [vmem:[%s480 + $0xd0] sm:$0xff] %vm4470, %v4464
        %4498 = vst.msk [vmem:[%s480 + $0xd8] sm:$0xff] %vm4470, %v4465
        %4499 = vst.msk [vmem:[%s480 + $0xe0] sm:$0xff] %vm4470, %v4466
        %4500 = vst.msk [vmem:[%s480 + $0xe8] sm:$0xff] %vm4470, %v4467
        %4501 = vst.msk [vmem:[%s480 + $0xf0] sm:$0xff] %vm4470, %v4468
        %4502 = vst.msk [vmem:[%s480 + $0xf8] sm:$0xff] %vm4470, %v4469
        %s4503 = sand.u32 %s277, 1
        %s4504 = scalar_lea.sflag [#allocation5], %s4503
        %s4505 = sand.u32 %s277, 1
        %s4506 = smul.addr %s4505, 256
        %s4507 = scalar_lea.vmem [#allocation9], %s4506
        // Predicated region
        $region69: #{tpu_custom_call.1} parent=55 // pred_check
          %p4508 = pneg %p287
        $region70: #{tpu_custom_call.1} parent=55 // pred_check_branch
          %4510 = sbr.rel (%p4508) target = $region72
        $region71: #{tpu_custom_call.1} parent=55 // pred_region
          %s4511 = smul.u32 16, %s33
          %s4513 = ssub.s32 4096, 4096
          %4514 = vsyncadd %s4504, %s4513
          %s4515 = smul.addr %s4511, 2
          %s4516 = smul.addr %s34, 32
          %s4517 = sadd.s32 %s4515, %s4516
          %s4518 = smul.addr %s4517, 128
          %s4519 = scalar_lea.hbm %s9, %s4518
          %s4520 = sshll.u32 %s4507, 4
          %s4521 = int_to_ptr.vmem [resolvable:$true] %s4520
          %4526 = dma.vmem_to_hbm [thread:$0]  %s4521, 4096, %s4519, %s4504, 128, 128, 8
        $region72: #{tpu_custom_call.1} parent=55 // pred_fallthru
          _
      $region56: #{tpu_custom_call.1} parent=5 // pred_fallthru
        _
      %p4527 = scmp.le.s32.totalorder 2, %s24
      // Predicated region
      $region73: #{tpu_custom_call.1} parent=5 // pred_check
        %p4528 = pneg %p4527
      $region74: #{tpu_custom_call.1} parent=5 // pred_check_branch
        %4530 = sbr.rel (%p4528) target = $region76
      $region75: #{tpu_custom_call.1} parent=5 // pred_region
        %s4531 = ssub.s32 %s24, 2
        // Predicated region
        $region77: #{tpu_custom_call.1} parent=75 // pred_check
          %p4532 = pneg %p293
        $region78: #{tpu_custom_call.1} parent=75 // pred_check_branch
          %4534 = sbr.rel (%p4532) target = $region80
        $region79: #{tpu_custom_call.1} parent=75 // pred_region
          %s4535 = sand.u32 %s278, 1
          %s4536 = scalar_lea.sflag [#allocation5], %s4535
          %s4537 = sand.u32 %s278, 1
          %s4538 = smul.addr %s4537, 256
          %s4539 = scalar_lea.vmem [#allocation9], %s4538
          %4540 = dma.done %s4536, 4096
        $region80: #{tpu_custom_call.1} parent=75 // pred_fallthru
          _
      $region76: #{tpu_custom_call.1} parent=5 // pred_fallthru
        _
    $region6: #{tpu_custom_call.1} parent=1 // loop_footer
      %s28 = sadd.s32 1, %s24
    $region7: #{tpu_custom_call.1} parent=1 // loop_footer_branch
      %23 = sbr.rel target = $region3
    $region8: #{tpu_custom_call.1} parent=1 // loop_exit
      _
    %4541 = vsyncpa [#allocation4], 1
    %s4542 = scalar_lea.sflag [#allocation4], 1
    %4543 = vsyncpa %s4542, 1
    %4544 = vsyncpa [#allocation7], 1
    %s4545 = scalar_lea.sflag [#allocation7], 1
    %4546 = vsyncpa %s4545, 1
    %4547 = vsyncpa [#allocation5], 1
    %s4548 = scalar_lea.sflag [#allocation5], 1
    %4549 = vsyncpa %s4548, 1

</llo_original>
